<compile_context>
chip_gen: v7x
topology: tpu7x:2x2x1
jax: 0.10.0
libtpu: 0.0.40
codegen_flags: <defaults>
</compile_context>

<pallas_src>
import jax
import jax.numpy as jnp
from jax.experimental import pallas as pl
from jax.experimental.pallas import tpu as pltpu


# ---------------------------------------------------------------------------
# Kernel 1: fused bidirectional 2-layer LSTM encoder.
# ---------------------------------------------------------------------------
def encoder_kernel(x_ref, wih1_ref, whh1_ref, b1_ref,
                   wih2_ref, whh2_ref, b2_ref,
                   out_ref, gx_ref, h1_ref, h2_ref):
    T = x_ref.shape[0]
    H = whh1_ref.shape[0]

    def run_layer(wih_ref, whh_ref, b_ref, in_seq, h_out_ref):
        # Hoisted input projection: one M=T matmul for all timesteps.
        # (bias b = b_ih + b_hh pre-summed at weight-conversion time)
        gx_ref[...] = (jnp.dot(in_seq, wih_ref[...],
                               preferred_element_type=jnp.float32)
                       + b_ref[...])
        whh = whh_ref[...]                       # hoisted weight read
        h = jnp.zeros((1, H), jnp.float32)
        c = jnp.zeros((1, H), jnp.float32)
        # Fully-unrolled recurrence: only h @ Whh on the serial path.
        for t in range(T):
            gates = gx_ref[t:t + 1, :] + jnp.dot(
                h, whh, preferred_element_type=jnp.float32)       # (1, 4H)
            i_g = jax.nn.sigmoid(gates[:, 0:H])
            f_g = jax.nn.sigmoid(gates[:, H:2 * H])
            g_g = jnp.tanh(gates[:, 2 * H:3 * H])
            o_g = jax.nn.sigmoid(gates[:, 3 * H:4 * H])
            c = f_g * c + i_g * g_g
            h = o_g * jnp.tanh(c)
            h_out_ref[t:t + 1, :] = h

    run_layer(wih1_ref, whh1_ref, b1_ref, x_ref[...], h1_ref)     # layer 1
    run_layer(wih2_ref, whh2_ref, b2_ref, h1_ref[...], h2_ref)    # layer 2
    # One lane-concat + one full store instead of per-step sub-lane writes.
    out_ref[...] = jnp.concatenate([h1_ref[...], h2_ref[...]], axis=-1)


def encoder_forward(xs, wih1, whh1, b1, wih2, whh2, b2):
    n_dir, T, _ = xs.shape
    H = whh1.shape[1]

    def dspec(shape):
        n_rest = len(shape) - 1
        return pl.BlockSpec((None,) + tuple(shape[1:]),
                            lambda d, _n=n_rest: (d,) + (0,) * _n)

    return pl.pallas_call(
        encoder_kernel,
        out_shape=jax.ShapeDtypeStruct((n_dir, T, 2 * H), jnp.float32),
        grid_spec=pltpu.PrefetchScalarGridSpec(
            num_scalar_prefetch=0,
            grid=(n_dir,),
            in_specs=[dspec(xs.shape),
                      dspec(wih1.shape), dspec(whh1.shape), dspec(b1.shape),
                      dspec(wih2.shape), dspec(whh2.shape), dspec(b2.shape)],
            out_specs=dspec((n_dir, T, 2 * H)),
            scratch_shapes=[pltpu.VMEM((T, 4 * H), jnp.float32),
                            pltpu.VMEM((T, H), jnp.float32),
                            pltpu.VMEM((T, H), jnp.float32)]),
        compiler_params=pltpu.CompilerParams(
            dimension_semantics=("parallel",)),
    )(xs, wih1, whh1, b1, wih2, whh2, b2)


# ---------------------------------------------------------------------------
# Kernel 2: batched evaluate_action (span diffs + Linear/ReLU/Linear).
# ---------------------------------------------------------------------------
def make_span_mlp_kernel(n_actions, k):
    def kernel(lefts_ref, rights_ref, fwd_ref, back_ref,
               w1_ref, b1_ref, w2_ref, b2_ref, out_ref):
        rows = []
        for n in range(n_actions):
            fwd_parts, back_parts = [], []
            for s in range(k):
                li = lefts_ref[n * k + s]
                ri = rights_ref[n * k + s]
                fwd_parts.append(fwd_ref[pl.ds(ri, 1), :]
                                 - fwd_ref[pl.ds(li - 1, 1), :])
                back_parts.append(back_ref[pl.ds(li, 1), :]
                                  - back_ref[pl.ds(ri + 1, 1), :])
            # matches torch.cat([fwd_span_vec, back_span_vec], dim=-1)
            rows.append(jnp.concatenate(fwd_parts + back_parts, axis=-1))
        feats = jnp.concatenate(rows, axis=0)                     # (N, k*4H)
        h = jnp.dot(feats, w1_ref[...],
                    preferred_element_type=jnp.float32) + b1_ref[...]
        h = jnp.maximum(h, 0.0)                                   # ReLU
        out_ref[...] = jnp.dot(h, w2_ref[...],
                               preferred_element_type=jnp.float32) + b2_ref[...]
    return kernel


def evaluate_actions(fwd, back, lefts, rights, w1p, b1p, w2p, b2p, n_out):
    """Batched version of Network.evaluate_action over N pending actions."""
    N, k = lefts.shape
    T = fwd.shape[0]
    # Parser spans always satisfy 1 <= l <= r <= T-2 on the padded sentence;
    # clamp defensively since TPU VMEM reads are not bounds-checked.
    lefts = jnp.clip(lefts, 1, T - 1).astype(jnp.int32).reshape(-1)
    rights = jnp.clip(rights, 0, T - 2).astype(jnp.int32).reshape(-1)
    out_p = w2p.shape[1]

    def full_spec(shape):
        return pl.BlockSpec(tuple(shape),
                            lambda i, l, r, _n=len(shape): (0,) * _n)

    scores = pl.pallas_call(
        make_span_mlp_kernel(N, k),
        out_shape=jax.ShapeDtypeStruct((N, out_p), jnp.float32),
        grid_spec=pltpu.PrefetchScalarGridSpec(
            num_scalar_prefetch=2,
            grid=(1,),
            in_specs=[full_spec(fwd.shape), full_spec(back.shape),
                      full_spec(w1p.shape), full_spec(b1p.shape),
                      full_spec(w2p.shape), full_spec(b2p.shape)],
            out_specs=full_spec((N, out_p)),
        ),
    )(lefts, rights, fwd, back, w1p, b1p, w2p, b2p)
    return scores[:, :n_out]                      # (N, n_out): stack of nn(...)[0]


# ---------------------------------------------------------------------------
# Glue: embedding lookup + direction stacking; weight padding for lane density.
# ---------------------------------------------------------------------------
def encode(params, word_ids, tag_ids):
    we = params["word_emb"][word_ids]                       # (T, word_dims)
    te = params["tag_emb"][tag_ids]                         # (T, tag_dims)
    x = jnp.concatenate([we, te], axis=-1)                  # (T, Din)
    xs = jnp.stack([x, x[::-1]], axis=0)                    # (2, T, Din)
    out = encoder_forward(
        xs, params["lstm1_wih"], params["lstm1_whh"], params["lstm1_b"],
        params["lstm2_wih"], params["lstm2_whh"], params["lstm2_b"])
    fwd = out[0]                                            # (T, 2H)
    back = out[1][::-1]                                     # undo time reversal
    return fwd, back


def pad_mlp(w1, b1, w2, b2, lane=128):
    """Zero-pad hidden/output dims to multiples of 128 (lane-dense matmuls/stores)."""
    def rup(n):
        return ((n + lane - 1) // lane) * lane
    hid, out = w1.shape[1], w2.shape[1]
    hid_p, out_p = rup(hid), rup(out)
    w1p = jnp.pad(w1, ((0, 0), (0, hid_p - hid)))
    b1p = jnp.pad(b1, ((0, 0), (0, hid_p - hid)))
    w2p = jnp.pad(w2, ((0, hid_p - hid), (0, out_p - out)))
    b2p = jnp.pad(b2, ((0, 0), (0, out_p - out)))
    return w1p, b1p, w2p, b2p


# ---------------------------------------------------------------------------
# Deterministic parameter construction (synthetic, matching __init__ shapes).
# ---------------------------------------------------------------------------
def init_params(key, *, n_words, n_tags, word_dims, tag_dims,
                lstm_units, hidden_units, n_labels):
    def nrm(k, shape, scale=0.1):
        return scale * jax.random.normal(k, shape, jnp.float32)

    H = lstm_units
    Din = word_dims + tag_dims
    single_span = 4 * H
    ks = jax.random.split(key, 14)
    return {
        "word_emb": nrm(ks[0], (n_words, word_dims)),
        "tag_emb": nrm(ks[1], (n_tags, tag_dims)),
        # direction-stacked [fwd, back] LSTM weights, pre-transposed [in, 4H];
        # bias = b_ih + b_hh pre-summed.
        "lstm1_wih": nrm(ks[2], (2, Din, 4 * H)),
        "lstm1_whh": nrm(ks[3], (2, H, 4 * H)),
        "lstm1_b":   nrm(ks[4], (2, 1, 4 * H)),
        "lstm2_wih": nrm(ks[5], (2, H, 4 * H)),
        "lstm2_whh": nrm(ks[6], (2, H, 4 * H)),
        "lstm2_b":   nrm(ks[7], (2, 1, 4 * H)),
        # struct_nn: Linear(4*single_span, hidden) -> ReLU -> Linear(hidden, 2)
        "struct_nn": (nrm(ks[8], (4 * single_span, hidden_units)),
                      nrm(ks[9], (1, hidden_units)),
                      nrm(ks[10], (hidden_units, 2)),
                      jnp.zeros((1, 2), jnp.float32)),
        # label_nn: Linear(3*single_span, hidden) -> ReLU -> Linear(hidden, n_labels)
        "label_nn": (nrm(ks[11], (3 * single_span, hidden_units)),
                     nrm(ks[12], (1, hidden_units)),
                     nrm(ks[13], (hidden_units, n_labels)),
                     jnp.zeros((1, n_labels), jnp.float32)),
    }


if __name__ == "__main__":
    # Small shapes consistent with the module.
    T = 8               # sentence length (with padding positions)
    n_words, n_tags = 50, 10
    word_dims, tag_dims = 24, 8
    lstm_units = 32     # H ; single_span = 128
    hidden_units = 64
    n_labels = 6

    key = jax.random.PRNGKey(0)
    (pkey, wkey, tkey, k1, k2, k3, k4, k5, k6) = jax.random.split(key, 9)
    params = init_params(pkey, n_words=n_words, n_tags=n_tags,
                         word_dims=word_dims, tag_dims=tag_dims,
                         lstm_units=lstm_units, hidden_units=hidden_units,
                         n_labels=n_labels)

    word_ids = jax.random.randint(wkey, (T,), 0, n_words, jnp.int32)
    tag_ids = jax.random.randint(tkey, (T,), 0, n_tags, jnp.int32)

    # encode (test mode: no dropout)
    fwd, back = encode(params, word_ids, tag_ids)            # each (T, 2H)

    # Batched pending actions (what forward() scores one at a time):
    # struct features have k=4 spans, label features have k=3 spans;
    # indices kept in [1, T-2] so l-1 / r+1 stay in bounds (padded sentence).
    n_struct, n_label = 8, 8
    struct_lefts = jax.random.randint(k1, (n_struct, 4), 1, 5, jnp.int32)
    struct_rights = struct_lefts + jax.random.randint(k2, (n_struct, 4), 0, 2, jnp.int32)
    label_lefts = jax.random.randint(k3, (n_label, 3), 1, 5, jnp.int32)
    label_rights = label_lefts + jax.random.randint(k4, (n_label, 3), 0, 2, jnp.int32)

    sW1p, sb1p, sW2p, sb2p = pad_mlp(*params["struct_nn"])
    lW1p, lb1p, lW2p, lb2p = pad_mlp(*params["label_nn"])

    struct_scores = evaluate_actions(fwd, back, struct_lefts, struct_rights,
                                     sW1p, sb1p, sW2p, sb2p, 2)          # (Ns, 2)
    label_scores = evaluate_actions(fwd, back, label_lefts, label_rights,
                                    lW1p, lb1p, lW2p, lb2p, n_labels)    # (Nl, n_labels)

    # training-style loss accumulation (softmax NLL), as in forward()
    correct_struct = jax.random.randint(k5, (n_struct,), 0, 2, jnp.int32)
    correct_label = jax.random.randint(k6, (n_label,), 0, n_labels, jnp.int32)

    def nll_sum(scores, correct):
        logp = jax.nn.log_softmax(scores, axis=-1)
        return -jnp.take_along_axis(logp, correct[:, None], axis=-1).sum()

    loss = nll_sum(struct_scores, correct_struct) + nll_sum(label_scores, correct_label)

    jax.block_until_ready((fwd, back, struct_scores, label_scores, loss))
    assert fwd.shape == (T, 2 * lstm_units)
    assert back.shape == (T, 2 * lstm_units)
    assert struct_scores.shape == (n_struct, 2)
    assert label_scores.shape == (n_label, n_labels)
    assert bool(jnp.isfinite(loss))
    print("KERNEL_OK")
</pallas_src>

<mosaic_0001>
module attributes {stable_mosaic.version = 11 : i64} {
  func.func @encoder_kernel(%arg0: i32, %arg1: memref<1x8x32xf32, #tpu.memory_space<vmem>>, %arg2: memref<1x32x128xf32, #tpu.memory_space<vmem>>, %arg3: memref<1x32x128xf32, #tpu.memory_space<vmem>>, %arg4: memref<1x1x128xf32, #tpu.memory_space<vmem>>, %arg5: memref<1x32x128xf32, #tpu.memory_space<vmem>>, %arg6: memref<1x32x128xf32, #tpu.memory_space<vmem>>, %arg7: memref<1x1x128xf32, #tpu.memory_space<vmem>>, %arg8: memref<1x8x64xf32, #tpu.memory_space<vmem>>, %arg9: memref<8x128xf32, #tpu.memory_space<vmem>>, %arg10: memref<8x32xf32, #tpu.memory_space<vmem>>, %arg11: memref<8x32xf32, #tpu.memory_space<vmem>>) attributes {dimension_semantics = [#tpu.dimension_semantics<parallel>], iteration_bounds = array<i64: 2>, scalar_prefetch = 0 : i64, scratch_operands = 3 : i64, tpu.core_type = #tpu.core_type<tc>, window_params = [{transform_indices = @transform_0, window_bounds = array<i64: 1, 8, 32>}, {transform_indices = @transform_1, window_bounds = array<i64: 1, 32, 128>}, {transform_indices = @transform_2, window_bounds = array<i64: 1, 32, 128>}, {transform_indices = @transform_3, window_bounds = array<i64: 1, 1, 128>}, {transform_indices = @transform_4, window_bounds = array<i64: 1, 32, 128>}, {transform_indices = @transform_5, window_bounds = array<i64: 1, 32, 128>}, {transform_indices = @transform_6, window_bounds = array<i64: 1, 1, 128>}, {transform_indices = @transform_7, window_bounds = array<i64: 1, 8, 64>}]} {
    %c0 = arith.constant 0 : index
    %c0_0 = arith.constant 0 : index
    %c0_1 = arith.constant 0 : index
    %0 = vector.load %arg1[%c0, %c0_0, %c0_1] : memref<1x8x32xf32, #tpu.memory_space<vmem>>, vector<1x8x32xf32>
    %1 = vector.shape_cast %0 : vector<1x8x32xf32> to vector<8x32xf32>
    %c0_2 = arith.constant 0 : index
    %c0_3 = arith.constant 0 : index
    %c0_4 = arith.constant 0 : index
    %2 = vector.load %arg2[%c0_2, %c0_3, %c0_4] : memref<1x32x128xf32, #tpu.memory_space<vmem>>, vector<1x32x128xf32>
    %3 = vector.shape_cast %2 : vector<1x32x128xf32> to vector<32x128xf32>
    %cst = arith.constant dense<0.000000e+00> : vector<8x128xf32>
    %4 = tpu.matmul %1, %3, %cst {dimension_numbers = #tpu.dot_dimension_numbers<[1], [0], [0], [1], [0, 0, 1, 1], [], []>} : vector<8x32xf32>, vector<32x128xf32>, vector<8x128xf32> -> vector<8x128xf32>
    %c0_5 = arith.constant 0 : index
    %c0_6 = arith.constant 0 : index
    %c0_7 = arith.constant 0 : index
    %5 = vector.load %arg4[%c0_5, %c0_6, %c0_7] : memref<1x1x128xf32, #tpu.memory_space<vmem>>, vector<1x1x128xf32>
    %6 = vector.shape_cast %5 : vector<1x1x128xf32> to vector<1x128xf32>
    %7 = vector.broadcast %6 : vector<1x128xf32> to vector<8x128xf32>
    %8 = arith.addf %4, %7 : vector<8x128xf32>
    %c0_8 = arith.constant 0 : index
    %c0_9 = arith.constant 0 : index
    %9 = vector.load %arg9[%c0_8, %c0_9] : memref<8x128xf32, #tpu.memory_space<vmem>>, vector<8x128xf32>
    tpu.vector_store %arg9[%c0_8, %c0_9], %8 {strides = array<i32>} : memref<8x128xf32, #tpu.memory_space<vmem>>, vector<8x128xf32>,
    %c0_10 = arith.constant 0 : index
    %c0_11 = arith.constant 0 : index
    %c0_12 = arith.constant 0 : index
    %10 = vector.load %arg3[%c0_10, %c0_11, %c0_12] : memref<1x32x128xf32, #tpu.memory_space<vmem>>, vector<1x32x128xf32>
    %11 = vector.shape_cast %10 : vector<1x32x128xf32> to vector<32x128xf32>
    %cst_13 = arith.constant 0.000000e+00 : f32
    %12 = vector.broadcast %cst_13 : f32 to vector<1x32xf32>
    %cst_14 = arith.constant 0.000000e+00 : f32
    %13 = vector.broadcast %cst_14 : f32 to vector<1x32xf32>
    %c0_15 = arith.constant 0 : index
    %c0_16 = arith.constant 0 : index
    %14 = vector.load %arg9[%c0_15, %c0_16] : memref<8x128xf32, #tpu.memory_space<vmem>>, vector<1x128xf32>
    %cst_17 = arith.constant dense<0.000000e+00> : vector<1x128xf32>
    %15 = tpu.matmul %12, %11, %cst_17 {dimension_numbers = #tpu.dot_dimension_numbers<[1], [0], [0], [1], [0, 0, 1, 1], [], []>} : vector<1x32xf32>, vector<32x128xf32>, vector<1x128xf32> -> vector<1x128xf32>
    %16 = arith.addf %14, %15 : vector<1x128xf32>
    %17 = vector.extract_strided_slice %16 {offsets = [0, 0], sizes = [1, 32], strides = [1, 1]} : vector<1x128xf32> to vector<1x32xf32>
    %18 = arith.negf %17 : vector<1x32xf32>
    %19 = math.exp %18 : vector<1x32xf32>
    %cst_18 = arith.constant 1.000000e+00 : f32
    %20 = vector.broadcast %cst_18 : f32 to vector<1x32xf32>
    %21 = arith.addf %20, %19 : vector<1x32xf32>
    %22 = arith.divf %20, %21 : vector<1x32xf32>
    %23 = vector.extract_strided_slice %16 {offsets = [0, 32], sizes = [1, 32], strides = [1, 1]} : vector<1x128xf32> to vector<1x32xf32>
    %24 = arith.negf %23 : vector<1x32xf32>
    %25 = math.exp %24 : vector<1x32xf32>
    %cst_19 = arith.constant 1.000000e+00 : f32
    %26 = vector.broadcast %cst_19 : f32 to vector<1x32xf32>
    %27 = arith.addf %26, %25 : vector<1x32xf32>
    %28 = arith.divf %26, %27 : vector<1x32xf32>
    %29 = vector.extract_strided_slice %16 {offsets = [0, 64], sizes = [1, 32], strides = [1, 1]} : vector<1x128xf32> to vector<1x32xf32>
    %30 = math.tanh %29 : vector<1x32xf32>
    %31 = vector.extract_strided_slice %16 {offsets = [0, 96], sizes = [1, 32], strides = [1, 1]} : vector<1x128xf32> to vector<1x32xf32>
    %32 = arith.negf %31 : vector<1x32xf32>
    %33 = math.exp %32 : vector<1x32xf32>
    %cst_20 = arith.constant 1.000000e+00 : f32
    %34 = vector.broadcast %cst_20 : f32 to vector<1x32xf32>
    %35 = arith.addf %34, %33 : vector<1x32xf32>
    %36 = arith.divf %34, %35 : vector<1x32xf32>
    %37 = arith.mulf %28, %13 : vector<1x32xf32>
    %38 = arith.mulf %22, %30 : vector<1x32xf32>
    %39 = arith.addf %37, %38 : vector<1x32xf32>
    %40 = math.tanh %39 : vector<1x32xf32>
    %41 = arith.mulf %36, %40 : vector<1x32xf32>
    %c0_21 = arith.constant 0 : index
    %c0_22 = arith.constant 0 : index
    %42 = vector.load %arg10[%c0_21, %c0_22] : memref<8x32xf32, #tpu.memory_space<vmem>>, vector<1x32xf32>
    tpu.vector_store %arg10[%c0_21, %c0_22], %41 {strides = array<i32>} : memref<8x32xf32, #tpu.memory_space<vmem>>, vector<1x32xf32>,
    %c1 = arith.constant 1 : index
    %c0_23 = arith.constant 0 : index
    %43 = vector.load %arg9[%c1, %c0_23] : memref<8x128xf32, #tpu.memory_space<vmem>>, vector<1x128xf32>
    %cst_24 = arith.constant dense<0.000000e+00> : vector<1x128xf32>
    %44 = tpu.matmul %41, %11, %cst_24 {dimension_numbers = #tpu.dot_dimension_numbers<[1], [0], [0], [1], [0, 0, 1, 1], [], []>} : vector<1x32xf32>, vector<32x128xf32>, vector<1x128xf32> -> vector<1x128xf32>
    %45 = arith.addf %43, %44 : vector<1x128xf32>
    %46 = vector.extract_strided_slice %45 {offsets = [0, 0], sizes = [1, 32], strides = [1, 1]} : vector<1x128xf32> to vector<1x32xf32>
    %47 = arith.negf %46 : vector<1x32xf32>
    %48 = math.exp %47 : vector<1x32xf32>
    %cst_25 = arith.constant 1.000000e+00 : f32
    %49 = vector.broadcast %cst_25 : f32 to vector<1x32xf32>
    %50 = arith.addf %49, %48 : vector<1x32xf32>
    %51 = arith.divf %49, %50 : vector<1x32xf32>
    %52 = vector.extract_strided_slice %45 {offsets = [0, 32], sizes = [1, 32], strides = [1, 1]} : vector<1x128xf32> to vector<1x32xf32>
    %53 = arith.negf %52 : vector<1x32xf32>
    %54 = math.exp %53 : vector<1x32xf32>
    %cst_26 = arith.constant 1.000000e+00 : f32
    %55 = vector.broadcast %cst_26 : f32 to vector<1x32xf32>
    %56 = arith.addf %55, %54 : vector<1x32xf32>
    %57 = arith.divf %55, %56 : vector<1x32xf32>
    %58 = vector.extract_strided_slice %45 {offsets = [0, 64], sizes = [1, 32], strides = [1, 1]} : vector<1x128xf32> to vector<1x32xf32>
    %59 = math.tanh %58 : vector<1x32xf32>
    %60 = vector.extract_strided_slice %45 {offsets = [0, 96], sizes = [1, 32], strides = [1, 1]} : vector<1x128xf32> to vector<1x32xf32>
    %61 = arith.negf %60 : vector<1x32xf32>
    %62 = math.exp %61 : vector<1x32xf32>
    %cst_27 = arith.constant 1.000000e+00 : f32
    %63 = vector.broadcast %cst_27 : f32 to vector<1x32xf32>
    %64 = arith.addf %63, %62 : vector<1x32xf32>
    %65 = arith.divf %63, %64 : vector<1x32xf32>
    %66 = arith.mulf %57, %39 : vector<1x32xf32>
    %67 = arith.mulf %51, %59 : vector<1x32xf32>
    %68 = arith.addf %66, %67 : vector<1x32xf32>
    %69 = math.tanh %68 : vector<1x32xf32>
    %70 = arith.mulf %65, %69 : vector<1x32xf32>
    %c1_28 = arith.constant 1 : index
    %c0_29 = arith.constant 0 : index
    %71 = vector.load %arg10[%c1_28, %c0_29] : memref<8x32xf32, #tpu.memory_space<vmem>>, vector<1x32xf32>
    tpu.vector_store %arg10[%c1_28, %c0_29], %70 {strides = array<i32>} : memref<8x32xf32, #tpu.memory_space<vmem>>, vector<1x32xf32>,
    %c2 = arith.constant 2 : index
    %c0_30 = arith.constant 0 : index
    %72 = vector.load %arg9[%c2, %c0_30] : memref<8x128xf32, #tpu.memory_space<vmem>>, vector<1x128xf32>
    %cst_31 = arith.constant dense<0.000000e+00> : vector<1x128xf32>
    %73 = tpu.matmul %70, %11, %cst_31 {dimension_numbers = #tpu.dot_dimension_numbers<[1], [0], [0], [1], [0, 0, 1, 1], [], []>} : vector<1x32xf32>, vector<32x128xf32>, vector<1x128xf32> -> vector<1x128xf32>
    %74 = arith.addf %72, %73 : vector<1x128xf32>
    %75 = vector.extract_strided_slice %74 {offsets = [0, 0], sizes = [1, 32], strides = [1, 1]} : vector<1x128xf32> to vector<1x32xf32>
    %76 = arith.negf %75 : vector<1x32xf32>
    %77 = math.exp %76 : vector<1x32xf32>
    %cst_32 = arith.constant 1.000000e+00 : f32
    %78 = vector.broadcast %cst_32 : f32 to vector<1x32xf32>
    %79 = arith.addf %78, %77 : vector<1x32xf32>
    %80 = arith.divf %78, %79 : vector<1x32xf32>
    %81 = vector.extract_strided_slice %74 {offsets = [0, 32], sizes = [1, 32], strides = [1, 1]} : vector<1x128xf32> to vector<1x32xf32>
    %82 = arith.negf %81 : vector<1x32xf32>
    %83 = math.exp %82 : vector<1x32xf32>
    %cst_33 = arith.constant 1.000000e+00 : f32
    %84 = vector.broadcast %cst_33 : f32 to vector<1x32xf32>
    %85 = arith.addf %84, %83 : vector<1x32xf32>
    %86 = arith.divf %84, %85 : vector<1x32xf32>
    %87 = vector.extract_strided_slice %74 {offsets = [0, 64], sizes = [1, 32], strides = [1, 1]} : vector<1x128xf32> to vector<1x32xf32>
    %88 = math.tanh %87 : vector<1x32xf32>
    %89 = vector.extract_strided_slice %74 {offsets = [0, 96], sizes = [1, 32], strides = [1, 1]} : vector<1x128xf32> to vector<1x32xf32>
    %90 = arith.negf %89 : vector<1x32xf32>
    %91 = math.exp %90 : vector<1x32xf32>
    %cst_34 = arith.constant 1.000000e+00 : f32
    %92 = vector.broadcast %cst_34 : f32 to vector<1x32xf32>
    %93 = arith.addf %92, %91 : vector<1x32xf32>
    %94 = arith.divf %92, %93 : vector<1x32xf32>
    %95 = arith.mulf %86, %68 : vector<1x32xf32>
    %96 = arith.mulf %80, %88 : vector<1x32xf32>
    %97 = arith.addf %95, %96 : vector<1x32xf32>
    %98 = math.tanh %97 : vector<1x32xf32>
    %99 = arith.mulf %94, %98 : vector<1x32xf32>
    %c2_35 = arith.constant 2 : index
    %c0_36 = arith.constant 0 : index
    %100 = vector.load %arg10[%c2_35, %c0_36] : memref<8x32xf32, #tpu.memory_space<vmem>>, vector<1x32xf32>
    tpu.vector_store %arg10[%c2_35, %c0_36], %99 {strides = array<i32>} : memref<8x32xf32, #tpu.memory_space<vmem>>, vector<1x32xf32>,
    %c3 = arith.constant 3 : index
    %c0_37 = arith.constant 0 : index
    %101 = vector.load %arg9[%c3, %c0_37] : memref<8x128xf32, #tpu.memory_space<vmem>>, vector<1x128xf32>
    %cst_38 = arith.constant dense<0.000000e+00> : vector<1x128xf32>
    %102 = tpu.matmul %99, %11, %cst_38 {dimension_numbers = #tpu.dot_dimension_numbers<[1], [0], [0], [1], [0, 0, 1, 1], [], []>} : vector<1x32xf32>, vector<32x128xf32>, vector<1x128xf32> -> vector<1x128xf32>
    %103 = arith.addf %101, %102 : vector<1x128xf32>
    %104 = vector.extract_strided_slice %103 {offsets = [0, 0], sizes = [1, 32], strides = [1, 1]} : vector<1x128xf32> to vector<1x32xf32>
    %105 = arith.negf %104 : vector<1x32xf32>
    %106 = math.exp %105 : vector<1x32xf32>
    %cst_39 = arith.constant 1.000000e+00 : f32
    %107 = vector.broadcast %cst_39 : f32 to vector<1x32xf32>
    %108 = arith.addf %107, %106 : vector<1x32xf32>
    %109 = arith.divf %107, %108 : vector<1x32xf32>
    %110 = vector.extract_strided_slice %103 {offsets = [0, 32], sizes = [1, 32], strides = [1, 1]} : vector<1x128xf32> to vector<1x32xf32>
    %111 = arith.negf %110 : vector<1x32xf32>
    %112 = math.exp %111 : vector<1x32xf32>
    %cst_40 = arith.constant 1.000000e+00 : f32
    %113 = vector.broadcast %cst_40 : f32 to vector<1x32xf32>
    %114 = arith.addf %113, %112 : vector<1x32xf32>
    %115 = arith.divf %113, %114 : vector<1x32xf32>
    %116 = vector.extract_strided_slice %103 {offsets = [0, 64], sizes = [1, 32], strides = [1, 1]} : vector<1x128xf32> to vector<1x32xf32>
    %117 = math.tanh %116 : vector<1x32xf32>
    %118 = vector.extract_strided_slice %103 {offsets = [0, 96], sizes = [1, 32], strides = [1, 1]} : vector<1x128xf32> to vector<1x32xf32>
    %119 = arith.negf %118 : vector<1x32xf32>
    %120 = math.exp %119 : vector<1x32xf32>
    %cst_41 = arith.constant 1.000000e+00 : f32
    %121 = vector.broadcast %cst_41 : f32 to vector<1x32xf32>
    %122 = arith.addf %121, %120 : vector<1x32xf32>
    %123 = arith.divf %121, %122 : vector<1x32xf32>
    %124 = arith.mulf %115, %97 : vector<1x32xf32>
    %125 = arith.mulf %109, %117 : vector<1x32xf32>
    %126 = arith.addf %124, %125 : vector<1x32xf32>
    %127 = math.tanh %126 : vector<1x32xf32>
    %128 = arith.mulf %123, %127 : vector<1x32xf32>
    %c3_42 = arith.constant 3 : index
    %c0_43 = arith.constant 0 : index
    %129 = vector.load %arg10[%c3_42, %c0_43] : memref<8x32xf32, #tpu.memory_space<vmem>>, vector<1x32xf32>
    tpu.vector_store %arg10[%c3_42, %c0_43], %128 {strides = array<i32>} : memref<8x32xf32, #tpu.memory_space<vmem>>, vector<1x32xf32>,
    %c4 = arith.constant 4 : index
    %c0_44 = arith.constant 0 : index
    %130 = vector.load %arg9[%c4, %c0_44] : memref<8x128xf32, #tpu.memory_space<vmem>>, vector<1x128xf32>
    %cst_45 = arith.constant dense<0.000000e+00> : vector<1x128xf32>
    %131 = tpu.matmul %128, %11, %cst_45 {dimension_numbers = #tpu.dot_dimension_numbers<[1], [0], [0], [1], [0, 0, 1, 1], [], []>} : vector<1x32xf32>, vector<32x128xf32>, vector<1x128xf32> -> vector<1x128xf32>
    %132 = arith.addf %130, %131 : vector<1x128xf32>
    %133 = vector.extract_strided_slice %132 {offsets = [0, 0], sizes = [1, 32], strides = [1, 1]} : vector<1x128xf32> to vector<1x32xf32>
    %134 = arith.negf %133 : vector<1x32xf32>
    %135 = math.exp %134 : vector<1x32xf32>
    %cst_46 = arith.constant 1.000000e+00 : f32
    %136 = vector.broadcast %cst_46 : f32 to vector<1x32xf32>
    %137 = arith.addf %136, %135 : vector<1x32xf32>
    %138 = arith.divf %136, %137 : vector<1x32xf32>
    %139 = vector.extract_strided_slice %132 {offsets = [0, 32], sizes = [1, 32], strides = [1, 1]} : vector<1x128xf32> to vector<1x32xf32>
    %140 = arith.negf %139 : vector<1x32xf32>
    %141 = math.exp %140 : vector<1x32xf32>
    %cst_47 = arith.constant 1.000000e+00 : f32
    %142 = vector.broadcast %cst_47 : f32 to vector<1x32xf32>
    %143 = arith.addf %142, %141 : vector<1x32xf32>
    %144 = arith.divf %142, %143 : vector<1x32xf32>
    %145 = vector.extract_strided_slice %132 {offsets = [0, 64], sizes = [1, 32], strides = [1, 1]} : vector<1x128xf32> to vector<1x32xf32>
    %146 = math.tanh %145 : vector<1x32xf32>
    %147 = vector.extract_strided_slice %132 {offsets = [0, 96], sizes = [1, 32], strides = [1, 1]} : vector<1x128xf32> to vector<1x32xf32>
    %148 = arith.negf %147 : vector<1x32xf32>
    %149 = math.exp %148 : vector<1x32xf32>
    %cst_48 = arith.constant 1.000000e+00 : f32
    %150 = vector.broadcast %cst_48 : f32 to vector<1x32xf32>
    %151 = arith.addf %150, %149 : vector<1x32xf32>
    %152 = arith.divf %150, %151 : vector<1x32xf32>
    %153 = arith.mulf %144, %126 : vector<1x32xf32>
    %154 = arith.mulf %138, %146 : vector<1x32xf32>
    %155 = arith.addf %153, %154 : vector<1x32xf32>
    %156 = math.tanh %155 : vector<1x32xf32>
    %157 = arith.mulf %152, %156 : vector<1x32xf32>
    %c4_49 = arith.constant 4 : index
    %c0_50 = arith.constant 0 : index
    %158 = vector.load %arg10[%c4_49, %c0_50] : memref<8x32xf32, #tpu.memory_space<vmem>>, vector<1x32xf32>
    tpu.vector_store %arg10[%c4_49, %c0_50], %157 {strides = array<i32>} : memref<8x32xf32, #tpu.memory_space<vmem>>, vector<1x32xf32>,
    %c5 = arith.constant 5 : index
    %c0_51 = arith.constant 0 : index
    %159 = vector.load %arg9[%c5, %c0_51] : memref<8x128xf32, #tpu.memory_space<vmem>>, vector<1x128xf32>
    %cst_52 = arith.constant dense<0.000000e+00> : vector<1x128xf32>
    %160 = tpu.matmul %157, %11, %cst_52 {dimension_numbers = #tpu.dot_dimension_numbers<[1], [0], [0], [1], [0, 0, 1, 1], [], []>} : vector<1x32xf32>, vector<32x128xf32>, vector<1x128xf32> -> vector<1x128xf32>
    %161 = arith.addf %159, %160 : vector<1x128xf32>
    %162 = vector.extract_strided_slice %161 {offsets = [0, 0], sizes = [1, 32], strides = [1, 1]} : vector<1x128xf32> to vector<1x32xf32>
    %163 = arith.negf %162 : vector<1x32xf32>
    %164 = math.exp %163 : vector<1x32xf32>
    %cst_53 = arith.constant 1.000000e+00 : f32
    %165 = vector.broadcast %cst_53 : f32 to vector<1x32xf32>
    %166 = arith.addf %165, %164 : vector<1x32xf32>
    %167 = arith.divf %165, %166 : vector<1x32xf32>
    %168 = vector.extract_strided_slice %161 {offsets = [0, 32], sizes = [1, 32], strides = [1, 1]} : vector<1x128xf32> to vector<1x32xf32>
    %169 = arith.negf %168 : vector<1x32xf32>
    %170 = math.exp %169 : vector<1x32xf32>
    %cst_54 = arith.constant 1.000000e+00 : f32
    %171 = vector.broadcast %cst_54 : f32 to vector<1x32xf32>
    %172 = arith.addf %171, %170 : vector<1x32xf32>
    %173 = arith.divf %171, %172 : vector<1x32xf32>
    %174 = vector.extract_strided_slice %161 {offsets = [0, 64], sizes = [1, 32], strides = [1, 1]} : vector<1x128xf32> to vector<1x32xf32>
    %175 = math.tanh %174 : vector<1x32xf32>
    %176 = vector.extract_strided_slice %161 {offsets = [0, 96], sizes = [1, 32], strides = [1, 1]} : vector<1x128xf32> to vector<1x32xf32>
    %177 = arith.negf %176 : vector<1x32xf32>
    %178 = math.exp %177 : vector<1x32xf32>
    %cst_55 = arith.constant 1.000000e+00 : f32
    %179 = vector.broadcast %cst_55 : f32 to vector<1x32xf32>
    %180 = arith.addf %179, %178 : vector<1x32xf32>
    %181 = arith.divf %179, %180 : vector<1x32xf32>
    %182 = arith.mulf %173, %155 : vector<1x32xf32>
    %183 = arith.mulf %167, %175 : vector<1x32xf32>
    %184 = arith.addf %182, %183 : vector<1x32xf32>
    %185 = math.tanh %184 : vector<1x32xf32>
    %186 = arith.mulf %181, %185 : vector<1x32xf32>
    %c5_56 = arith.constant 5 : index
    %c0_57 = arith.constant 0 : index
    %187 = vector.load %arg10[%c5_56, %c0_57] : memref<8x32xf32, #tpu.memory_space<vmem>>, vector<1x32xf32>
    tpu.vector_store %arg10[%c5_56, %c0_57], %186 {strides = array<i32>} : memref<8x32xf32, #tpu.memory_space<vmem>>, vector<1x32xf32>,
    %c6 = arith.constant 6 : index
    %c0_58 = arith.constant 0 : index
    %188 = vector.load %arg9[%c6, %c0_58] : memref<8x128xf32, #tpu.memory_space<vmem>>, vector<1x128xf32>
    %cst_59 = arith.constant dense<0.000000e+00> : vector<1x128xf32>
    %189 = tpu.matmul %186, %11, %cst_59 {dimension_numbers = #tpu.dot_dimension_numbers<[1], [0], [0], [1], [0, 0, 1, 1], [], []>} : vector<1x32xf32>, vector<32x128xf32>, vector<1x128xf32> -> vector<1x128xf32>
    %190 = arith.addf %188, %189 : vector<1x128xf32>
    %191 = vector.extract_strided_slice %190 {offsets = [0, 0], sizes = [1, 32], strides = [1, 1]} : vector<1x128xf32> to vector<1x32xf32>
    %192 = arith.negf %191 : vector<1x32xf32>
    %193 = math.exp %192 : vector<1x32xf32>
    %cst_60 = arith.constant 1.000000e+00 : f32
    %194 = vector.broadcast %cst_60 : f32 to vector<1x32xf32>
    %195 = arith.addf %194, %193 : vector<1x32xf32>
    %196 = arith.divf %194, %195 : vector<1x32xf32>
    %197 = vector.extract_strided_slice %190 {offsets = [0, 32], sizes = [1, 32], strides = [1, 1]} : vector<1x128xf32> to vector<1x32xf32>
    %198 = arith.negf %197 : vector<1x32xf32>
    %199 = math.exp %198 : vector<1x32xf32>
    %cst_61 = arith.constant 1.000000e+00 : f32
    %200 = vector.broadcast %cst_61 : f32 to vector<1x32xf32>
    %201 = arith.addf %200, %199 : vector<1x32xf32>
    %202 = arith.divf %200, %201 : vector<1x32xf32>
    %203 = vector.extract_strided_slice %190 {offsets = [0, 64], sizes = [1, 32], strides = [1, 1]} : vector<1x128xf32> to vector<1x32xf32>
    %204 = math.tanh %203 : vector<1x32xf32>
    %205 = vector.extract_strided_slice %190 {offsets = [0, 96], sizes = [1, 32], strides = [1, 1]} : vector<1x128xf32> to vector<1x32xf32>
    %206 = arith.negf %205 : vector<1x32xf32>
    %207 = math.exp %206 : vector<1x32xf32>
    %cst_62 = arith.constant 1.000000e+00 : f32
    %208 = vector.broadcast %cst_62 : f32 to vector<1x32xf32>
    %209 = arith.addf %208, %207 : vector<1x32xf32>
    %210 = arith.divf %208, %209 : vector<1x32xf32>
    %211 = arith.mulf %202, %184 : vector<1x32xf32>
    %212 = arith.mulf %196, %204 : vector<1x32xf32>
    %213 = arith.addf %211, %212 : vector<1x32xf32>
    %214 = math.tanh %213 : vector<1x32xf32>
    %215 = arith.mulf %210, %214 : vector<1x32xf32>
    %c6_63 = arith.constant 6 : index
    %c0_64 = arith.constant 0 : index
    %216 = vector.load %arg10[%c6_63, %c0_64] : memref<8x32xf32, #tpu.memory_space<vmem>>, vector<1x32xf32>
    tpu.vector_store %arg10[%c6_63, %c0_64], %215 {strides = array<i32>} : memref<8x32xf32, #tpu.memory_space<vmem>>, vector<1x32xf32>,
    %c7 = arith.constant 7 : index
    %c0_65 = arith.constant 0 : index
    %217 = vector.load %arg9[%c7, %c0_65] : memref<8x128xf32, #tpu.memory_space<vmem>>, vector<1x128xf32>
    %cst_66 = arith.constant dense<0.000000e+00> : vector<1x128xf32>
    %218 = tpu.matmul %215, %11, %cst_66 {dimension_numbers = #tpu.dot_dimension_numbers<[1], [0], [0], [1], [0, 0, 1, 1], [], []>} : vector<1x32xf32>, vector<32x128xf32>, vector<1x128xf32> -> vector<1x128xf32>
    %219 = arith.addf %217, %218 : vector<1x128xf32>
    %220 = vector.extract_strided_slice %219 {offsets = [0, 0], sizes = [1, 32], strides = [1, 1]} : vector<1x128xf32> to vector<1x32xf32>
    %221 = arith.negf %220 : vector<1x32xf32>
    %222 = math.exp %221 : vector<1x32xf32>
    %cst_67 = arith.constant 1.000000e+00 : f32
    %223 = vector.broadcast %cst_67 : f32 to vector<1x32xf32>
    %224 = arith.addf %223, %222 : vector<1x32xf32>
    %225 = arith.divf %223, %224 : vector<1x32xf32>
    %226 = vector.extract_strided_slice %219 {offsets = [0, 32], sizes = [1, 32], strides = [1, 1]} : vector<1x128xf32> to vector<1x32xf32>
    %227 = arith.negf %226 : vector<1x32xf32>
    %228 = math.exp %227 : vector<1x32xf32>
    %cst_68 = arith.constant 1.000000e+00 : f32
    %229 = vector.broadcast %cst_68 : f32 to vector<1x32xf32>
    %230 = arith.addf %229, %228 : vector<1x32xf32>
    %231 = arith.divf %229, %230 : vector<1x32xf32>
    %232 = vector.extract_strided_slice %219 {offsets = [0, 64], sizes = [1, 32], strides = [1, 1]} : vector<1x128xf32> to vector<1x32xf32>
    %233 = math.tanh %232 : vector<1x32xf32>
    %234 = vector.extract_strided_slice %219 {offsets = [0, 96], sizes = [1, 32], strides = [1, 1]} : vector<1x128xf32> to vector<1x32xf32>
    %235 = arith.negf %234 : vector<1x32xf32>
    %236 = math.exp %235 : vector<1x32xf32>
    %cst_69 = arith.constant 1.000000e+00 : f32
    %237 = vector.broadcast %cst_69 : f32 to vector<1x32xf32>
    %238 = arith.addf %237, %236 : vector<1x32xf32>
    %239 = arith.divf %237, %238 : vector<1x32xf32>
    %240 = arith.mulf %231, %213 : vector<1x32xf32>
    %241 = arith.mulf %225, %233 : vector<1x32xf32>
    %242 = arith.addf %240, %241 : vector<1x32xf32>
    %243 = math.tanh %242 : vector<1x32xf32>
    %244 = arith.mulf %239, %243 : vector<1x32xf32>
    %c7_70 = arith.constant 7 : index
    %c0_71 = arith.constant 0 : index
    %245 = vector.load %arg10[%c7_70, %c0_71] : memref<8x32xf32, #tpu.memory_space<vmem>>, vector<1x32xf32>
    tpu.vector_store %arg10[%c7_70, %c0_71], %244 {strides = array<i32>} : memref<8x32xf32, #tpu.memory_space<vmem>>, vector<1x32xf32>,
    %c0_72 = arith.constant 0 : index
    %c0_73 = arith.constant 0 : index
    %246 = vector.load %arg10[%c0_72, %c0_73] : memref<8x32xf32, #tpu.memory_space<vmem>>, vector<8x32xf32>
    %c0_74 = arith.constant 0 : index
    %c0_75 = arith.constant 0 : index
    %c0_76 = arith.constant 0 : index
    %247 = vector.load %arg5[%c0_74, %c0_75, %c0_76] : memref<1x32x128xf32, #tpu.memory_space<vmem>>, vector<1x32x128xf32>
    %248 = vector.shape_cast %247 : vector<1x32x128xf32> to vector<32x128xf32>
    %cst_77 = arith.constant dense<0.000000e+00> : vector<8x128xf32>
    %249 = tpu.matmul %246, %248, %cst_77 {dimension_numbers = #tpu.dot_dimension_numbers<[1], [0], [0], [1], [0, 0, 1, 1], [], []>} : vector<8x32xf32>, vector<32x128xf32>, vector<8x128xf32> -> vector<8x128xf32>
    %c0_78 = arith.constant 0 : index
    %c0_79 = arith.constant 0 : index
    %c0_80 = arith.constant 0 : index
    %250 = vector.load %arg7[%c0_78, %c0_79, %c0_80] : memref<1x1x128xf32, #tpu.memory_space<vmem>>, vector<1x1x128xf32>
    %251 = vector.shape_cast %250 : vector<1x1x128xf32> to vector<1x128xf32>
    %252 = vector.broadcast %251 : vector<1x128xf32> to vector<8x128xf32>
    %253 = arith.addf %249, %252 : vector<8x128xf32>
    %c0_81 = arith.constant 0 : index
    %c0_82 = arith.constant 0 : index
    %254 = vector.load %arg9[%c0_81, %c0_82] : memref<8x128xf32, #tpu.memory_space<vmem>>, vector<8x128xf32>
    tpu.vector_store %arg9[%c0_81, %c0_82], %253 {strides = array<i32>} : memref<8x128xf32, #tpu.memory_space<vmem>>, vector<8x128xf32>,
    %c0_83 = arith.constant 0 : index
    %c0_84 = arith.constant 0 : index
    %c0_85 = arith.constant 0 : index
    %255 = vector.load %arg6[%c0_83, %c0_84, %c0_85] : memref<1x32x128xf32, #tpu.memory_space<vmem>>, vector<1x32x128xf32>
    %256 = vector.shape_cast %255 : vector<1x32x128xf32> to vector<32x128xf32>
    %cst_86 = arith.constant 0.000000e+00 : f32
    %257 = vector.broadcast %cst_86 : f32 to vector<1x32xf32>
    %cst_87 = arith.constant 0.000000e+00 : f32
    %258 = vector.broadcast %cst_87 : f32 to vector<1x32xf32>
    %c0_88 = arith.constant 0 : index
    %c0_89 = arith.constant 0 : index
    %259 = vector.load %arg9[%c0_88, %c0_89] : memref<8x128xf32, #tpu.memory_space<vmem>>, vector<1x128xf32>
    %cst_90 = arith.constant dense<0.000000e+00> : vector<1x128xf32>
    %260 = tpu.matmul %257, %256, %cst_90 {dimension_numbers = #tpu.dot_dimension_numbers<[1], [0], [0], [1], [0, 0, 1, 1], [], []>} : vector<1x32xf32>, vector<32x128xf32>, vector<1x128xf32> -> vector<1x128xf32>
    %261 = arith.addf %259, %260 : vector<1x128xf32>
    %262 = vector.extract_strided_slice %261 {offsets = [0, 0], sizes = [1, 32], strides = [1, 1]} : vector<1x128xf32> to vector<1x32xf32>
    %263 = arith.negf %262 : vector<1x32xf32>
    %264 = math.exp %263 : vector<1x32xf32>
    %cst_91 = arith.constant 1.000000e+00 : f32
    %265 = vector.broadcast %cst_91 : f32 to vector<1x32xf32>
    %266 = arith.addf %265, %264 : vector<1x32xf32>
    %267 = arith.divf %265, %266 : vector<1x32xf32>
    %268 = vector.extract_strided_slice %261 {offsets = [0, 32], sizes = [1, 32], strides = [1, 1]} : vector<1x128xf32> to vector<1x32xf32>
    %269 = arith.negf %268 : vector<1x32xf32>
    %270 = math.exp %269 : vector<1x32xf32>
    %cst_92 = arith.constant 1.000000e+00 : f32
    %271 = vector.broadcast %cst_92 : f32 to vector<1x32xf32>
    %272 = arith.addf %271, %270 : vector<1x32xf32>
    %273 = arith.divf %271, %272 : vector<1x32xf32>
    %274 = vector.extract_strided_slice %261 {offsets = [0, 64], sizes = [1, 32], strides = [1, 1]} : vector<1x128xf32> to vector<1x32xf32>
    %275 = math.tanh %274 : vector<1x32xf32>
    %276 = vector.extract_strided_slice %261 {offsets = [0, 96], sizes = [1, 32], strides = [1, 1]} : vector<1x128xf32> to vector<1x32xf32>
    %277 = arith.negf %276 : vector<1x32xf32>
    %278 = math.exp %277 : vector<1x32xf32>
    %cst_93 = arith.constant 1.000000e+00 : f32
    %279 = vector.broadcast %cst_93 : f32 to vector<1x32xf32>
    %280 = arith.addf %279, %278 : vector<1x32xf32>
    %281 = arith.divf %279, %280 : vector<1x32xf32>
    %282 = arith.mulf %273, %258 : vector<1x32xf32>
    %283 = arith.mulf %267, %275 : vector<1x32xf32>
    %284 = arith.addf %282, %283 : vector<1x32xf32>
    %285 = math.tanh %284 : vector<1x32xf32>
    %286 = arith.mulf %281, %285 : vector<1x32xf32>
    %c0_94 = arith.constant 0 : index
    %c0_95 = arith.constant 0 : index
    %287 = vector.load %arg11[%c0_94, %c0_95] : memref<8x32xf32, #tpu.memory_space<vmem>>, vector<1x32xf32>
    tpu.vector_store %arg11[%c0_94, %c0_95], %286 {strides = array<i32>} : memref<8x32xf32, #tpu.memory_space<vmem>>, vector<1x32xf32>,
    %c1_96 = arith.constant 1 : index
    %c0_97 = arith.constant 0 : index
    %288 = vector.load %arg9[%c1_96, %c0_97] : memref<8x128xf32, #tpu.memory_space<vmem>>, vector<1x128xf32>
    %cst_98 = arith.constant dense<0.000000e+00> : vector<1x128xf32>
    %289 = tpu.matmul %286, %256, %cst_98 {dimension_numbers = #tpu.dot_dimension_numbers<[1], [0], [0], [1], [0, 0, 1, 1], [], []>} : vector<1x32xf32>, vector<32x128xf32>, vector<1x128xf32> -> vector<1x128xf32>
    %290 = arith.addf %288, %289 : vector<1x128xf32>
    %291 = vector.extract_strided_slice %290 {offsets = [0, 0], sizes = [1, 32], strides = [1, 1]} : vector<1x128xf32> to vector<1x32xf32>
    %292 = arith.negf %291 : vector<1x32xf32>
    %293 = math.exp %292 : vector<1x32xf32>
    %cst_99 = arith.constant 1.000000e+00 : f32
    %294 = vector.broadcast %cst_99 : f32 to vector<1x32xf32>
    %295 = arith.addf %294, %293 : vector<1x32xf32>
    %296 = arith.divf %294, %295 : vector<1x32xf32>
    %297 = vector.extract_strided_slice %290 {offsets = [0, 32], sizes = [1, 32], strides = [1, 1]} : vector<1x128xf32> to vector<1x32xf32>
    %298 = arith.negf %297 : vector<1x32xf32>
    %299 = math.exp %298 : vector<1x32xf32>
    %cst_100 = arith.constant 1.000000e+00 : f32
    %300 = vector.broadcast %cst_100 : f32 to vector<1x32xf32>
    %301 = arith.addf %300, %299 : vector<1x32xf32>
    %302 = arith.divf %300, %301 : vector<1x32xf32>
    %303 = vector.extract_strided_slice %290 {offsets = [0, 64], sizes = [1, 32], strides = [1, 1]} : vector<1x128xf32> to vector<1x32xf32>
    %304 = math.tanh %303 : vector<1x32xf32>
    %305 = vector.extract_strided_slice %290 {offsets = [0, 96], sizes = [1, 32], strides = [1, 1]} : vector<1x128xf32> to vector<1x32xf32>
    %306 = arith.negf %305 : vector<1x32xf32>
    %307 = math.exp %306 : vector<1x32xf32>
    %cst_101 = arith.constant 1.000000e+00 : f32
    %308 = vector.broadcast %cst_101 : f32 to vector<1x32xf32>
    %309 = arith.addf %308, %307 : vector<1x32xf32>
    %310 = arith.divf %308, %309 : vector<1x32xf32>
    %311 = arith.mulf %302, %284 : vector<1x32xf32>
    %312 = arith.mulf %296, %304 : vector<1x32xf32>
    %313 = arith.addf %311, %312 : vector<1x32xf32>
    %314 = math.tanh %313 : vector<1x32xf32>
    %315 = arith.mulf %310, %314 : vector<1x32xf32>
    %c1_102 = arith.constant 1 : index
    %c0_103 = arith.constant 0 : index
    %316 = vector.load %arg11[%c1_102, %c0_103] : memref<8x32xf32, #tpu.memory_space<vmem>>, vector<1x32xf32>
    tpu.vector_store %arg11[%c1_102, %c0_103], %315 {strides = array<i32>} : memref<8x32xf32, #tpu.memory_space<vmem>>, vector<1x32xf32>,
    %c2_104 = arith.constant 2 : index
    %c0_105 = arith.constant 0 : index
    %317 = vector.load %arg9[%c2_104, %c0_105] : memref<8x128xf32, #tpu.memory_space<vmem>>, vector<1x128xf32>
    %cst_106 = arith.constant dense<0.000000e+00> : vector<1x128xf32>
    %318 = tpu.matmul %315, %256, %cst_106 {dimension_numbers = #tpu.dot_dimension_numbers<[1], [0], [0], [1], [0, 0, 1, 1], [], []>} : vector<1x32xf32>, vector<32x128xf32>, vector<1x128xf32> -> vector<1x128xf32>
    %319 = arith.addf %317, %318 : vector<1x128xf32>
    %320 = vector.extract_strided_slice %319 {offsets = [0, 0], sizes = [1, 32], strides = [1, 1]} : vector<1x128xf32> to vector<1x32xf32>
    %321 = arith.negf %320 : vector<1x32xf32>
    %322 = math.exp %321 : vector<1x32xf32>
    %cst_107 = arith.constant 1.000000e+00 : f32
    %323 = vector.broadcast %cst_107 : f32 to vector<1x32xf32>
    %324 = arith.addf %323, %322 : vector<1x32xf32>
    %325 = arith.divf %323, %324 : vector<1x32xf32>
    %326 = vector.extract_strided_slice %319 {offsets = [0, 32], sizes = [1, 32], strides = [1, 1]} : vector<1x128xf32> to vector<1x32xf32>
    %327 = arith.negf %326 : vector<1x32xf32>
    %328 = math.exp %327 : vector<1x32xf32>
    %cst_108 = arith.constant 1.000000e+00 : f32
    %329 = vector.broadcast %cst_108 : f32 to vector<1x32xf32>
    %330 = arith.addf %329, %328 : vector<1x32xf32>
    %331 = arith.divf %329, %330 : vector<1x32xf32>
    %332 = vector.extract_strided_slice %319 {offsets = [0, 64], sizes = [1, 32], strides = [1, 1]} : vector<1x128xf32> to vector<1x32xf32>
    %333 = math.tanh %332 : vector<1x32xf32>
    %334 = vector.extract_strided_slice %319 {offsets = [0, 96], sizes = [1, 32], strides = [1, 1]} : vector<1x128xf32> to vector<1x32xf32>
    %335 = arith.negf %334 : vector<1x32xf32>
    %336 = math.exp %335 : vector<1x32xf32>
    %cst_109 = arith.constant 1.000000e+00 : f32
    %337 = vector.broadcast %cst_109 : f32 to vector<1x32xf32>
    %338 = arith.addf %337, %336 : vector<1x32xf32>
    %339 = arith.divf %337, %338 : vector<1x32xf32>
    %340 = arith.mulf %331, %313 : vector<1x32xf32>
    %341 = arith.mulf %325, %333 : vector<1x32xf32>
    %342 = arith.addf %340, %341 : vector<1x32xf32>
    %343 = math.tanh %342 : vector<1x32xf32>
    %344 = arith.mulf %339, %343 : vector<1x32xf32>
    %c2_110 = arith.constant 2 : index
    %c0_111 = arith.constant 0 : index
    %345 = vector.load %arg11[%c2_110, %c0_111] : memref<8x32xf32, #tpu.memory_space<vmem>>, vector<1x32xf32>
    tpu.vector_store %arg11[%c2_110, %c0_111], %344 {strides = array<i32>} : memref<8x32xf32, #tpu.memory_space<vmem>>, vector<1x32xf32>,
    %c3_112 = arith.constant 3 : index
    %c0_113 = arith.constant 0 : index
    %346 = vector.load %arg9[%c3_112, %c0_113] : memref<8x128xf32, #tpu.memory_space<vmem>>, vector<1x128xf32>
    %cst_114 = arith.constant dense<0.000000e+00> : vector<1x128xf32>
    %347 = tpu.matmul %344, %256, %cst_114 {dimension_numbers = #tpu.dot_dimension_numbers<[1], [0], [0], [1], [0, 0, 1, 1], [], []>} : vector<1x32xf32>, vector<32x128xf32>, vector<1x128xf32> -> vector<1x128xf32>
    %348 = arith.addf %346, %347 : vector<1x128xf32>
    %349 = vector.extract_strided_slice %348 {offsets = [0, 0], sizes = [1, 32], strides = [1, 1]} : vector<1x128xf32> to vector<1x32xf32>
    %350 = arith.negf %349 : vector<1x32xf32>
    %351 = math.exp %350 : vector<1x32xf32>
    %cst_115 = arith.constant 1.000000e+00 : f32
    %352 = vector.broadcast %cst_115 : f32 to vector<1x32xf32>
    %353 = arith.addf %352, %351 : vector<1x32xf32>
    %354 = arith.divf %352, %353 : vector<1x32xf32>
    %355 = vector.extract_strided_slice %348 {offsets = [0, 32], sizes = [1, 32], strides = [1, 1]} : vector<1x128xf32> to vector<1x32xf32>
    %356 = arith.negf %355 : vector<1x32xf32>
    %357 = math.exp %356 : vector<1x32xf32>
    %cst_116 = arith.constant 1.000000e+00 : f32
    %358 = vector.broadcast %cst_116 : f32 to vector<1x32xf32>
    %359 = arith.addf %358, %357 : vector<1x32xf32>
    %360 = arith.divf %358, %359 : vector<1x32xf32>
    %361 = vector.extract_strided_slice %348 {offsets = [0, 64], sizes = [1, 32], strides = [1, 1]} : vector<1x128xf32> to vector<1x32xf32>
    %362 = math.tanh %361 : vector<1x32xf32>
    %363 = vector.extract_strided_slice %348 {offsets = [0, 96], sizes = [1, 32], strides = [1, 1]} : vector<1x128xf32> to vector<1x32xf32>
    %364 = arith.negf %363 : vector<1x32xf32>
    %365 = math.exp %364 : vector<1x32xf32>
    %cst_117 = arith.constant 1.000000e+00 : f32
    %366 = vector.broadcast %cst_117 : f32 to vector<1x32xf32>
    %367 = arith.addf %366, %365 : vector<1x32xf32>
    %368 = arith.divf %366, %367 : vector<1x32xf32>
    %369 = arith.mulf %360, %342 : vector<1x32xf32>
    %370 = arith.mulf %354, %362 : vector<1x32xf32>
    %371 = arith.addf %369, %370 : vector<1x32xf32>
    %372 = math.tanh %371 : vector<1x32xf32>
    %373 = arith.mulf %368, %372 : vector<1x32xf32>
    %c3_118 = arith.constant 3 : index
    %c0_119 = arith.constant 0 : index
    %374 = vector.load %arg11[%c3_118, %c0_119] : memref<8x32xf32, #tpu.memory_space<vmem>>, vector<1x32xf32>
    tpu.vector_store %arg11[%c3_118, %c0_119], %373 {strides = array<i32>} : memref<8x32xf32, #tpu.memory_space<vmem>>, vector<1x32xf32>,
    %c4_120 = arith.constant 4 : index
    %c0_121 = arith.constant 0 : index
    %375 = vector.load %arg9[%c4_120, %c0_121] : memref<8x128xf32, #tpu.memory_space<vmem>>, vector<1x128xf32>
    %cst_122 = arith.constant dense<0.000000e+00> : vector<1x128xf32>
    %376 = tpu.matmul %373, %256, %cst_122 {dimension_numbers = #tpu.dot_dimension_numbers<[1], [0], [0], [1], [0, 0, 1, 1], [], []>} : vector<1x32xf32>, vector<32x128xf32>, vector<1x128xf32> -> vector<1x128xf32>
    %377 = arith.addf %375, %376 : vector<1x128xf32>
    %378 = vector.extract_strided_slice %377 {offsets = [0, 0], sizes = [1, 32], strides = [1, 1]} : vector<1x128xf32> to vector<1x32xf32>
    %379 = arith.negf %378 : vector<1x32xf32>
    %380 = math.exp %379 : vector<1x32xf32>
    %cst_123 = arith.constant 1.000000e+00 : f32
    %381 = vector.broadcast %cst_123 : f32 to vector<1x32xf32>
    %382 = arith.addf %381, %380 : vector<1x32xf32>
    %383 = arith.divf %381, %382 : vector<1x32xf32>
    %384 = vector.extract_strided_slice %377 {offsets = [0, 32], sizes = [1, 32], strides = [1, 1]} : vector<1x128xf32> to vector<1x32xf32>
    %385 = arith.negf %384 : vector<1x32xf32>
    %386 = math.exp %385 : vector<1x32xf32>
    %cst_124 = arith.constant 1.000000e+00 : f32
    %387 = vector.broadcast %cst_124 : f32 to vector<1x32xf32>
    %388 = arith.addf %387, %386 : vector<1x32xf32>
    %389 = arith.divf %387, %388 : vector<1x32xf32>
    %390 = vector.extract_strided_slice %377 {offsets = [0, 64], sizes = [1, 32], strides = [1, 1]} : vector<1x128xf32> to vector<1x32xf32>
    %391 = math.tanh %390 : vector<1x32xf32>
    %392 = vector.extract_strided_slice %377 {offsets = [0, 96], sizes = [1, 32], strides = [1, 1]} : vector<1x128xf32> to vector<1x32xf32>
    %393 = arith.negf %392 : vector<1x32xf32>
    %394 = math.exp %393 : vector<1x32xf32>
    %cst_125 = arith.constant 1.000000e+00 : f32
    %395 = vector.broadcast %cst_125 : f32 to vector<1x32xf32>
    %396 = arith.addf %395, %394 : vector<1x32xf32>
    %397 = arith.divf %395, %396 : vector<1x32xf32>
    %398 = arith.mulf %389, %371 : vector<1x32xf32>
    %399 = arith.mulf %383, %391 : vector<1x32xf32>
    %400 = arith.addf %398, %399 : vector<1x32xf32>
    %401 = math.tanh %400 : vector<1x32xf32>
    %402 = arith.mulf %397, %401 : vector<1x32xf32>
    %c4_126 = arith.constant 4 : index
    %c0_127 = arith.constant 0 : index
    %403 = vector.load %arg11[%c4_126, %c0_127] : memref<8x32xf32, #tpu.memory_space<vmem>>, vector<1x32xf32>
    tpu.vector_store %arg11[%c4_126, %c0_127], %402 {strides = array<i32>} : memref<8x32xf32, #tpu.memory_space<vmem>>, vector<1x32xf32>,
    %c5_128 = arith.constant 5 : index
    %c0_129 = arith.constant 0 : index
    %404 = vector.load %arg9[%c5_128, %c0_129] : memref<8x128xf32, #tpu.memory_space<vmem>>, vector<1x128xf32>
    %cst_130 = arith.constant dense<0.000000e+00> : vector<1x128xf32>
    %405 = tpu.matmul %402, %256, %cst_130 {dimension_numbers = #tpu.dot_dimension_numbers<[1], [0], [0], [1], [0, 0, 1, 1], [], []>} : vector<1x32xf32>, vector<32x128xf32>, vector<1x128xf32> -> vector<1x128xf32>
    %406 = arith.addf %404, %405 : vector<1x128xf32>
    %407 = vector.extract_strided_slice %406 {offsets = [0, 0], sizes = [1, 32], strides = [1, 1]} : vector<1x128xf32> to vector<1x32xf32>
    %408 = arith.negf %407 : vector<1x32xf32>
    %409 = math.exp %408 : vector<1x32xf32>
    %cst_131 = arith.constant 1.000000e+00 : f32
    %410 = vector.broadcast %cst_131 : f32 to vector<1x32xf32>
    %411 = arith.addf %410, %409 : vector<1x32xf32>
    %412 = arith.divf %410, %411 : vector<1x32xf32>
    %413 = vector.extract_strided_slice %406 {offsets = [0, 32], sizes = [1, 32], strides = [1, 1]} : vector<1x128xf32> to vector<1x32xf32>
    %414 = arith.negf %413 : vector<1x32xf32>
    %415 = math.exp %414 : vector<1x32xf32>
    %cst_132 = arith.constant 1.000000e+00 : f32
    %416 = vector.broadcast %cst_132 : f32 to vector<1x32xf32>
    %417 = arith.addf %416, %415 : vector<1x32xf32>
    %418 = arith.divf %416, %417 : vector<1x32xf32>
    %419 = vector.extract_strided_slice %406 {offsets = [0, 64], sizes = [1, 32], strides = [1, 1]} : vector<1x128xf32> to vector<1x32xf32>
    %420 = math.tanh %419 : vector<1x32xf32>
    %421 = vector.extract_strided_slice %406 {offsets = [0, 96], sizes = [1, 32], strides = [1, 1]} : vector<1x128xf32> to vector<1x32xf32>
    %422 = arith.negf %421 : vector<1x32xf32>
    %423 = math.exp %422 : vector<1x32xf32>
    %cst_133 = arith.constant 1.000000e+00 : f32
    %424 = vector.broadcast %cst_133 : f32 to vector<1x32xf32>
    %425 = arith.addf %424, %423 : vector<1x32xf32>
    %426 = arith.divf %424, %425 : vector<1x32xf32>
    %427 = arith.mulf %418, %400 : vector<1x32xf32>
    %428 = arith.mulf %412, %420 : vector<1x32xf32>
    %429 = arith.addf %427, %428 : vector<1x32xf32>
    %430 = math.tanh %429 : vector<1x32xf32>
    %431 = arith.mulf %426, %430 : vector<1x32xf32>
    %c5_134 = arith.constant 5 : index
    %c0_135 = arith.constant 0 : index
    %432 = vector.load %arg11[%c5_134, %c0_135] : memref<8x32xf32, #tpu.memory_space<vmem>>, vector<1x32xf32>
    tpu.vector_store %arg11[%c5_134, %c0_135], %431 {strides = array<i32>} : memref<8x32xf32, #tpu.memory_space<vmem>>, vector<1x32xf32>,
    %c6_136 = arith.constant 6 : index
    %c0_137 = arith.constant 0 : index
    %433 = vector.load %arg9[%c6_136, %c0_137] : memref<8x128xf32, #tpu.memory_space<vmem>>, vector<1x128xf32>
    %cst_138 = arith.constant dense<0.000000e+00> : vector<1x128xf32>
    %434 = tpu.matmul %431, %256, %cst_138 {dimension_numbers = #tpu.dot_dimension_numbers<[1], [0], [0], [1], [0, 0, 1, 1], [], []>} : vector<1x32xf32>, vector<32x128xf32>, vector<1x128xf32> -> vector<1x128xf32>
    %435 = arith.addf %433, %434 : vector<1x128xf32>
    %436 = vector.extract_strided_slice %435 {offsets = [0, 0], sizes = [1, 32], strides = [1, 1]} : vector<1x128xf32> to vector<1x32xf32>
    %437 = arith.negf %436 : vector<1x32xf32>
    %438 = math.exp %437 : vector<1x32xf32>
    %cst_139 = arith.constant 1.000000e+00 : f32
    %439 = vector.broadcast %cst_139 : f32 to vector<1x32xf32>
    %440 = arith.addf %439, %438 : vector<1x32xf32>
    %441 = arith.divf %439, %440 : vector<1x32xf32>
    %442 = vector.extract_strided_slice %435 {offsets = [0, 32], sizes = [1, 32], strides = [1, 1]} : vector<1x128xf32> to vector<1x32xf32>
    %443 = arith.negf %442 : vector<1x32xf32>
    %444 = math.exp %443 : vector<1x32xf32>
    %cst_140 = arith.constant 1.000000e+00 : f32
    %445 = vector.broadcast %cst_140 : f32 to vector<1x32xf32>
    %446 = arith.addf %445, %444 : vector<1x32xf32>
    %447 = arith.divf %445, %446 : vector<1x32xf32>
    %448 = vector.extract_strided_slice %435 {offsets = [0, 64], sizes = [1, 32], strides = [1, 1]} : vector<1x128xf32> to vector<1x32xf32>
    %449 = math.tanh %448 : vector<1x32xf32>
    %450 = vector.extract_strided_slice %435 {offsets = [0, 96], sizes = [1, 32], strides = [1, 1]} : vector<1x128xf32> to vector<1x32xf32>
    %451 = arith.negf %450 : vector<1x32xf32>
    %452 = math.exp %451 : vector<1x32xf32>
    %cst_141 = arith.constant 1.000000e+00 : f32
    %453 = vector.broadcast %cst_141 : f32 to vector<1x32xf32>
    %454 = arith.addf %453, %452 : vector<1x32xf32>
    %455 = arith.divf %453, %454 : vector<1x32xf32>
    %456 = arith.mulf %447, %429 : vector<1x32xf32>
    %457 = arith.mulf %441, %449 : vector<1x32xf32>
    %458 = arith.addf %456, %457 : vector<1x32xf32>
    %459 = math.tanh %458 : vector<1x32xf32>
    %460 = arith.mulf %455, %459 : vector<1x32xf32>
    %c6_142 = arith.constant 6 : index
    %c0_143 = arith.constant 0 : index
    %461 = vector.load %arg11[%c6_142, %c0_143] : memref<8x32xf32, #tpu.memory_space<vmem>>, vector<1x32xf32>
    tpu.vector_store %arg11[%c6_142, %c0_143], %460 {strides = array<i32>} : memref<8x32xf32, #tpu.memory_space<vmem>>, vector<1x32xf32>,
    %c7_144 = arith.constant 7 : index
    %c0_145 = arith.constant 0 : index
    %462 = vector.load %arg9[%c7_144, %c0_145] : memref<8x128xf32, #tpu.memory_space<vmem>>, vector<1x128xf32>
    %cst_146 = arith.constant dense<0.000000e+00> : vector<1x128xf32>
    %463 = tpu.matmul %460, %256, %cst_146 {dimension_numbers = #tpu.dot_dimension_numbers<[1], [0], [0], [1], [0, 0, 1, 1], [], []>} : vector<1x32xf32>, vector<32x128xf32>, vector<1x128xf32> -> vector<1x128xf32>
    %464 = arith.addf %462, %463 : vector<1x128xf32>
    %465 = vector.extract_strided_slice %464 {offsets = [0, 0], sizes = [1, 32], strides = [1, 1]} : vector<1x128xf32> to vector<1x32xf32>
    %466 = arith.negf %465 : vector<1x32xf32>
    %467 = math.exp %466 : vector<1x32xf32>
    %cst_147 = arith.constant 1.000000e+00 : f32
    %468 = vector.broadcast %cst_147 : f32 to vector<1x32xf32>
    %469 = arith.addf %468, %467 : vector<1x32xf32>
    %470 = arith.divf %468, %469 : vector<1x32xf32>
    %471 = vector.extract_strided_slice %464 {offsets = [0, 32], sizes = [1, 32], strides = [1, 1]} : vector<1x128xf32> to vector<1x32xf32>
    %472 = arith.negf %471 : vector<1x32xf32>
    %473 = math.exp %472 : vector<1x32xf32>
    %cst_148 = arith.constant 1.000000e+00 : f32
    %474 = vector.broadcast %cst_148 : f32 to vector<1x32xf32>
    %475 = arith.addf %474, %473 : vector<1x32xf32>
    %476 = arith.divf %474, %475 : vector<1x32xf32>
    %477 = vector.extract_strided_slice %464 {offsets = [0, 64], sizes = [1, 32], strides = [1, 1]} : vector<1x128xf32> to vector<1x32xf32>
    %478 = math.tanh %477 : vector<1x32xf32>
    %479 = vector.extract_strided_slice %464 {offsets = [0, 96], sizes = [1, 32], strides = [1, 1]} : vector<1x128xf32> to vector<1x32xf32>
    %480 = arith.negf %479 : vector<1x32xf32>
    %481 = math.exp %480 : vector<1x32xf32>
    %cst_149 = arith.constant 1.000000e+00 : f32
    %482 = vector.broadcast %cst_149 : f32 to vector<1x32xf32>
    %483 = arith.addf %482, %481 : vector<1x32xf32>
    %484 = arith.divf %482, %483 : vector<1x32xf32>
    %485 = arith.mulf %476, %458 : vector<1x32xf32>
    %486 = arith.mulf %470, %478 : vector<1x32xf32>
    %487 = arith.addf %485, %486 : vector<1x32xf32>
    %488 = math.tanh %487 : vector<1x32xf32>
    %489 = arith.mulf %484, %488 : vector<1x32xf32>
    %c7_150 = arith.constant 7 : index
    %c0_151 = arith.constant 0 : index
    %490 = vector.load %arg11[%c7_150, %c0_151] : memref<8x32xf32, #tpu.memory_space<vmem>>, vector<1x32xf32>
    tpu.vector_store %arg11[%c7_150, %c0_151], %489 {strides = array<i32>} : memref<8x32xf32, #tpu.memory_space<vmem>>, vector<1x32xf32>,
    %c0_152 = arith.constant 0 : index
    %c0_153 = arith.constant 0 : index
    %491 = vector.load %arg10[%c0_152, %c0_153] : memref<8x32xf32, #tpu.memory_space<vmem>>, vector<8x32xf32>
    %c0_154 = arith.constant 0 : index
    %c0_155 = arith.constant 0 : index
    %492 = vector.load %arg11[%c0_154, %c0_155] : memref<8x32xf32, #tpu.memory_space<vmem>>, vector<8x32xf32>
    %493 = tpu.concatenate %491, %492 in 1 : vector<8x32xf32>, vector<8x32xf32> -> vector<8x64xf32>
    %c0_156 = arith.constant 0 : index
    %c0_157 = arith.constant 0 : index
    %c0_158 = arith.constant 0 : index
    %494 = vector.load %arg8[%c0_156, %c0_157, %c0_158] : memref<1x8x64xf32, #tpu.memory_space<vmem>>, vector<1x8x64xf32>
    %495 = vector.shape_cast %494 : vector<1x8x64xf32> to vector<8x64xf32>
    %496 = vector.shape_cast %493 : vector<8x64xf32> to vector<1x8x64xf32>
    tpu.vector_store %arg8[%c0_156, %c0_157, %c0_158], %496 {strides = array<i32>} : memref<1x8x64xf32, #tpu.memory_space<vmem>>, vector<1x8x64xf32>,
    return
  }
  func.func @transform_0(%arg0: i32) -> (i32, i32, i32) {
    %c0_i32 = arith.constant 0 : i32
    %c0_i32_0 = arith.constant 0 : i32
    %c0_i32_1 = arith.constant 0 : i32
    return %arg0, %c0_i32, %c0_i32_0 : i32, i32, i32
  }
  func.func @transform_1(%arg0: i32) -> (i32, i32, i32) {
    %c0_i32 = arith.constant 0 : i32
    %c0_i32_0 = arith.constant 0 : i32
    %c0_i32_1 = arith.constant 0 : i32
    return %arg0, %c0_i32, %c0_i32_0 : i32, i32, i32
  }
  func.func @transform_2(%arg0: i32) -> (i32, i32, i32) {
    %c0_i32 = arith.constant 0 : i32
    %c0_i32_0 = arith.constant 0 : i32
    %c0_i32_1 = arith.constant 0 : i32
    return %arg0, %c0_i32, %c0_i32_0 : i32, i32, i32
  }
  func.func @transform_3(%arg0: i32) -> (i32, i32, i32) {
    %c0_i32 = arith.constant 0 : i32
    %c0_i32_0 = arith.constant 0 : i32
    %c0_i32_1 = arith.constant 0 : i32
    return %arg0, %c0_i32, %c0_i32_0 : i32, i32, i32
  }
  func.func @transform_4(%arg0: i32) -> (i32, i32, i32) {
    %c0_i32 = arith.constant 0 : i32
    %c0_i32_0 = arith.constant 0 : i32
    %c0_i32_1 = arith.constant 0 : i32
    return %arg0, %c0_i32, %c0_i32_0 : i32, i32, i32
  }
  func.func @transform_5(%arg0: i32) -> (i32, i32, i32) {
    %c0_i32 = arith.constant 0 : i32
    %c0_i32_0 = arith.constant 0 : i32
    %c0_i32_1 = arith.constant 0 : i32
    return %arg0, %c0_i32, %c0_i32_0 : i32, i32, i32
  }
  func.func @transform_6(%arg0: i32) -> (i32, i32, i32) {
    %c0_i32 = arith.constant 0 : i32
    %c0_i32_0 = arith.constant 0 : i32
    %c0_i32_1 = arith.constant 0 : i32
    return %arg0, %c0_i32, %c0_i32_0 : i32, i32, i32
  }
  func.func @transform_7(%arg0: i32) -> (i32, i32, i32) {
    %c0_i32 = arith.constant 0 : i32
    %c0_i32_0 = arith.constant 0 : i32
    %c0_i32_1 = arith.constant 0 : i32
    return %arg0, %c0_i32, %c0_i32_0 : i32, i32, i32
  }
}

</mosaic_0001>

<llo_original>
// kernel: tpu_custom_call.1
$region0: #{tpu_custom_call.1}
  #allocation0 [shape = 'u32[]', space=smem, size = 0x4, offset = 0x4, fixed_abs, tag = 'smem constant byte address 0x4 - core index']
  #allocation1 [shape = 'u32[144,128]{1,0:T(1,128)}', space=vmem, size = 0x12000, scoped, tag = 'internal scratch']
  #allocation2 [shape = 'f32[8,128]{1,0:T(8,128)}', space=vmem, size = 0x1000, scoped, tag = 'scratch operand']
  #allocation3 [shape = 'f32[8,32]{1,0:T(8,128)}', space=vmem, size = 0x1000, scoped, tag = 'scratch operand']
  #allocation4 [shape = 'f32[8,32]{1,0:T(8,128)}', space=vmem, size = 0x1000, scoped, tag = 'scratch operand']
  %s0 = inlined_call_operand.hbm [shape: f32[2,8,32], index: 0, kind: input, shape index: {}]
  %s1 = inlined_call_operand.hbm [shape: f32[2,32,128], index: 1, kind: input, shape index: {}]
  %s2 = inlined_call_operand.hbm [shape: f32[2,32,128], index: 2, kind: input, shape index: {}]
  %s3 = inlined_call_operand.vmem [shape: f32[2,1,128], index: 3, kind: input, shape index: {}]
  %s4 = inlined_call_operand.hbm [shape: f32[2,32,128], index: 4, kind: input, shape index: {}]
  %s5 = inlined_call_operand.hbm [shape: f32[2,32,128], index: 5, kind: input, shape index: {}]
  %s6 = inlined_call_operand.vmem [shape: f32[2,1,128], index: 6, kind: input, shape index: {}]
  %s7 = inlined_call_operand.hbm [shape: f32[2,8,64], index: 7, kind: output, shape index: {}]
  %s8 = sld [smem:[#allocation0]]
  $region81: #{tpu_custom_call.1} parent=0
    _
  %s10 = ssub.s32 1, %s8
  %s11 = scalar_select 0, %s10, %s8
  $region1: #{tpu_custom_call.1} parent=0
    #allocation5 [shape = 'u8[8192]{0}', space=vmem, size = 0x2000, scoped, tag = 'input window, operand 0']
    #allocation6 [shape = 's32[2]{0}', space=sflag, size = 0x8, scoped, tag = 'scoped memory for tpu_custom_call.1']
    #allocation7 [shape = 's32[2]{0}', space=sflag, size = 0x8, scoped, tag = 'scoped memory for tpu_custom_call.1']
    #allocation8 [shape = 'u8[32768]{0}', space=vmem, size = 0x8000, scoped, tag = 'input window, operand 1']
    #allocation9 [shape = 's32[2]{0}', space=sflag, size = 0x8, scoped, tag = 'scoped memory for tpu_custom_call.1']
    #allocation10 [shape = 'u8[32768]{0}', space=vmem, size = 0x8000, scoped, tag = 'input window, operand 2']
    #allocation11 [shape = 'u8[32768]{0}', space=vmem, size = 0x8000, scoped, tag = 'input window, operand 4']
    #allocation12 [shape = 's32[2]{0}', space=sflag, size = 0x8, scoped, tag = 'scoped memory for tpu_custom_call.1']
    #allocation13 [shape = 'u8[32768]{0}', space=vmem, size = 0x8000, scoped, tag = 'input window, operand 5']
    #allocation14 [shape = 'u8[8192]{0}', space=vmem, size = 0x2000, scoped, tag = 'output window, operand 0']
    %12 = vsyncpa [#allocation6], 0
    %s13 = scalar_lea.sflag [#allocation6], 1
    %14 = vsyncpa %s13, 0
    %15 = vsyncpa [#allocation9], 0
    %s16 = scalar_lea.sflag [#allocation9], 1
    %17 = vsyncpa %s16, 0
    %18 = vsyncpa [#allocation12], 0
    %s19 = scalar_lea.sflag [#allocation12], 1
    %20 = vsyncpa %s19, 0
    %21 = vsyncpa [#allocation7], 0
    %s22 = scalar_lea.sflag [#allocation7], 1
    %23 = vsyncpa %s22, 0
    loop: start=0, step=1, limit=4
    $region2: #{tpu_custom_call.1} parent=1 // loop_pre_header
      _
    $region3: #{tpu_custom_call.1} parent=1 // loop_header
      %s25 = sphi 0, %s29
      %p26 = scmp.ge.s32.totalorder %s25, 4
      %s35 = sphi 0, %s37
      %s38 = sphi 0, %s35
      %s39 = sphi 0, %s38
      %s55 = sphi 0, %s39
      %s61 = sphi 0, %s63
      %s64 = sphi 0, %s61
      %s65 = sphi 0, %s64
      %s81 = sphi 0, %s65
      %s87 = sphi 0, %s89
      %s90 = sphi 0, %s87
      %s91 = sphi 0, %s90
      %s107 = sphi 0, %s91
      %s113 = sphi 0, %s115
      %s116 = sphi 0, %s113
      %s117 = sphi 0, %s116
      %s133 = sphi 0, %s117
      %s139 = sphi 0, %s141
      %s142 = sphi 0, %s139
      %s143 = sphi 0, %s142
      %s159 = sphi 0, %s143
      %s165 = sphi 0, %s167
      %s168 = sphi 0, %s165
      %s169 = sphi 0, %s168
      %s185 = sphi 0, %s169
      %s191 = sphi 0, %s193
      %s194 = sphi 0, %s191
      %s195 = sphi 0, %s194
      %s211 = sphi 0, %s195
      %s217 = sphi 0, %s219
      %s220 = sphi 0, %s217
      %s221 = sphi 0, %s220
      %s237 = sphi 0, %s221
    $region4: #{tpu_custom_call.1} parent=1 // loop_header_branch
      %28 = sbr.rel (%p26) target = $region8
    $region5: #{tpu_custom_call.1} parent=1 // loop_body
      %s30 = ssub.s32 %s25, 1
      %s31 = ssub.s32 %s25, 2
      %s32 = sadd.s32 %s25, 1
      %s33 = ssub.s32 %s25, %s32
      %p34 = scmp.eq.s32.totalorder %s33, 0
      %s36 = sadd.s32 %s35, 1
      %s37 = scalar_select %p34, %s35, %s36
      %p40 = pneg %p34
      %p41 = scmp.eq.s32.totalorder %s25, 1
      %p42 = por %p40, %p41
      %p43 = scmp.ne.s32.totalorder %s35, %s38
      %p44 = scmp.eq.s32.totalorder %s25, 0
      %p45 = por %p43, %p44
      %p46 = scmp.ne.s32.totalorder %s35, %s38
      %p47 = scmp.eq.s32.totalorder %s30, 1
      %p48 = por %p46, %p47
      %p49 = scmp.ne.s32.totalorder %s38, %s39
      %p50 = scmp.eq.s32.totalorder %s30, 0
      %p51 = por %p49, %p50
      %p52 = scmp.ne.s32.totalorder %s38, %s39
      %p53 = scmp.eq.s32.totalorder %s31, 1
      %p54 = por %p52, %p53
      %p56 = scmp.ne.s32.totalorder %s39, %s55
      %p57 = scmp.eq.s32.totalorder %s31, 0
      %p58 = por %p56, %p57
      %s59 = ssub.s32 %s25, %s32
      %p60 = scmp.eq.s32.totalorder %s59, 0
      %s62 = sadd.s32 %s61, 1
      %s63 = scalar_select %p60, %s61, %s62
      %p66 = pneg %p60
      %p67 = scmp.eq.s32.totalorder %s25, 1
      %p68 = por %p66, %p67
      %p69 = scmp.ne.s32.totalorder %s61, %s64
      %p70 = scmp.eq.s32.totalorder %s25, 0
      %p71 = por %p69, %p70
      %p72 = scmp.ne.s32.totalorder %s61, %s64
      %p73 = scmp.eq.s32.totalorder %s30, 1
      %p74 = por %p72, %p73
      %p75 = scmp.ne.s32.totalorder %s64, %s65
      %p76 = scmp.eq.s32.totalorder %s30, 0
      %p77 = por %p75, %p76
      %p78 = scmp.ne.s32.totalorder %s64, %s65
      %p79 = scmp.eq.s32.totalorder %s31, 1
      %p80 = por %p78, %p79
      %p82 = scmp.ne.s32.totalorder %s65, %s81
      %p83 = scmp.eq.s32.totalorder %s31, 0
      %p84 = por %p82, %p83
      %s85 = ssub.s32 %s25, %s32
      %p86 = scmp.eq.s32.totalorder %s85, 0
      %s88 = sadd.s32 %s87, 1
      %s89 = scalar_select %p86, %s87, %s88
      %p92 = pneg %p86
      %p93 = scmp.eq.s32.totalorder %s25, 1
      %p94 = por %p92, %p93
      %p95 = scmp.ne.s32.totalorder %s87, %s90
      %p96 = scmp.eq.s32.totalorder %s25, 0
      %p97 = por %p95, %p96
      %p98 = scmp.ne.s32.totalorder %s87, %s90
      %p99 = scmp.eq.s32.totalorder %s30, 1
      %p100 = por %p98, %p99
      %p101 = scmp.ne.s32.totalorder %s90, %s91
      %p102 = scmp.eq.s32.totalorder %s30, 0
      %p103 = por %p101, %p102
      %p104 = scmp.ne.s32.totalorder %s90, %s91
      %p105 = scmp.eq.s32.totalorder %s31, 1
      %p106 = por %p104, %p105
      %p108 = scmp.ne.s32.totalorder %s91, %s107
      %p109 = scmp.eq.s32.totalorder %s31, 0
      %p110 = por %p108, %p109
      %s111 = ssub.s32 %s25, %s32
      %p112 = scmp.eq.s32.totalorder %s111, 0
      %s114 = sadd.s32 %s113, 1
      %s115 = scalar_select %p112, %s113, %s114
      %p118 = pneg %p112
      %p119 = scmp.eq.s32.totalorder %s25, 1
      %p120 = por %p118, %p119
      %p121 = scmp.ne.s32.totalorder %s113, %s116
      %p122 = scmp.eq.s32.totalorder %s25, 0
      %p123 = por %p121, %p122
      %p124 = scmp.ne.s32.totalorder %s113, %s116
      %p125 = scmp.eq.s32.totalorder %s30, 1
      %p126 = por %p124, %p125
      %p127 = scmp.ne.s32.totalorder %s116, %s117
      %p128 = scmp.eq.s32.totalorder %s30, 0
      %p129 = por %p127, %p128
      %p130 = scmp.ne.s32.totalorder %s116, %s117
      %p131 = scmp.eq.s32.totalorder %s31, 1
      %p132 = por %p130, %p131
      %p134 = scmp.ne.s32.totalorder %s117, %s133
      %p135 = scmp.eq.s32.totalorder %s31, 0
      %p136 = por %p134, %p135
      %s137 = ssub.s32 %s25, %s32
      %p138 = scmp.eq.s32.totalorder %s137, 0
      %s140 = sadd.s32 %s139, 1
      %s141 = scalar_select %p138, %s139, %s140
      %p144 = pneg %p138
      %p145 = scmp.eq.s32.totalorder %s25, 1
      %p146 = por %p144, %p145
      %p147 = scmp.ne.s32.totalorder %s139, %s142
      %p148 = scmp.eq.s32.totalorder %s25, 0
      %p149 = por %p147, %p148
      %p150 = scmp.ne.s32.totalorder %s139, %s142
      %p151 = scmp.eq.s32.totalorder %s30, 1
      %p152 = por %p150, %p151
      %p153 = scmp.ne.s32.totalorder %s142, %s143
      %p154 = scmp.eq.s32.totalorder %s30, 0
      %p155 = por %p153, %p154
      %p156 = scmp.ne.s32.totalorder %s142, %s143
      %p157 = scmp.eq.s32.totalorder %s31, 1
      %p158 = por %p156, %p157
      %p160 = scmp.ne.s32.totalorder %s143, %s159
      %p161 = scmp.eq.s32.totalorder %s31, 0
      %p162 = por %p160, %p161
      %s163 = ssub.s32 %s25, %s32
      %p164 = scmp.eq.s32.totalorder %s163, 0
      %s166 = sadd.s32 %s165, 1
      %s167 = scalar_select %p164, %s165, %s166
      %p170 = pneg %p164
      %p171 = scmp.eq.s32.totalorder %s25, 1
      %p172 = por %p170, %p171
      %p173 = scmp.ne.s32.totalorder %s165, %s168
      %p174 = scmp.eq.s32.totalorder %s25, 0
      %p175 = por %p173, %p174
      %p176 = scmp.ne.s32.totalorder %s165, %s168
      %p177 = scmp.eq.s32.totalorder %s30, 1
      %p178 = por %p176, %p177
      %p179 = scmp.ne.s32.totalorder %s168, %s169
      %p180 = scmp.eq.s32.totalorder %s30, 0
      %p181 = por %p179, %p180
      %p182 = scmp.ne.s32.totalorder %s168, %s169
      %p183 = scmp.eq.s32.totalorder %s31, 1
      %p184 = por %p182, %p183
      %p186 = scmp.ne.s32.totalorder %s169, %s185
      %p187 = scmp.eq.s32.totalorder %s31, 0
      %p188 = por %p186, %p187
      %s189 = ssub.s32 %s25, %s32
      %p190 = scmp.eq.s32.totalorder %s189, 0
      %s192 = sadd.s32 %s191, 1
      %s193 = scalar_select %p190, %s191, %s192
      %p196 = pneg %p190
      %p197 = scmp.eq.s32.totalorder %s25, 1
      %p198 = por %p196, %p197
      %p199 = scmp.ne.s32.totalorder %s191, %s194
      %p200 = scmp.eq.s32.totalorder %s25, 0
      %p201 = por %p199, %p200
      %p202 = scmp.ne.s32.totalorder %s191, %s194
      %p203 = scmp.eq.s32.totalorder %s30, 1
      %p204 = por %p202, %p203
      %p205 = scmp.ne.s32.totalorder %s194, %s195
      %p206 = scmp.eq.s32.totalorder %s30, 0
      %p207 = por %p205, %p206
      %p208 = scmp.ne.s32.totalorder %s194, %s195
      %p209 = scmp.eq.s32.totalorder %s31, 1
      %p210 = por %p208, %p209
      %p212 = scmp.ne.s32.totalorder %s195, %s211
      %p213 = scmp.eq.s32.totalorder %s31, 0
      %p214 = por %p212, %p213
      %s215 = ssub.s32 %s25, %s32
      %p216 = scmp.eq.s32.totalorder %s215, 0
      %s218 = sadd.s32 %s217, 1
      %s219 = scalar_select %p216, %s217, %s218
      %p222 = pneg %p216
      %p223 = scmp.eq.s32.totalorder %s25, 1
      %p224 = por %p222, %p223
      %p225 = scmp.ne.s32.totalorder %s217, %s220
      %p226 = scmp.eq.s32.totalorder %s25, 0
      %p227 = por %p225, %p226
      %p228 = scmp.ne.s32.totalorder %s217, %s220
      %p229 = scmp.eq.s32.totalorder %s30, 1
      %p230 = por %p228, %p229
      %p231 = scmp.ne.s32.totalorder %s220, %s221
      %p232 = scmp.eq.s32.totalorder %s30, 0
      %p233 = por %p231, %p232
      %p234 = scmp.ne.s32.totalorder %s220, %s221
      %p235 = scmp.eq.s32.totalorder %s31, 1
      %p236 = por %p234, %p235
      %p238 = scmp.ne.s32.totalorder %s221, %s237
      %p239 = scmp.eq.s32.totalorder %s31, 0
      %p240 = por %p238, %p239
      %p241 = scmp.le.s32.totalorder 1, %s25
      %p242 = scmp.lt.s32.totalorder %s25, 3
      %p243 = pnand %p241, %p242
      %p244 = pneg %p243
      // Predicated region
      $region9: #{tpu_custom_call.1} parent=5 // pred_check
        _
      $region10: #{tpu_custom_call.1} parent=5 // pred_check_branch
        %246 = sbr.rel (%p243) target = $region12
      $region11: #{tpu_custom_call.1} parent=5 // pred_region
        %s247 = ssub.s32 %s25, 1
      $region12: #{tpu_custom_call.1} parent=5 // pred_fallthru
        _
      %p248 = scmp.lt.s32.totalorder %s25, 2
      // Predicated region
      $region13: #{tpu_custom_call.1} parent=5 // pred_check
        %p249 = pneg %p248
      $region14: #{tpu_custom_call.1} parent=5 // pred_check_branch
        %251 = sbr.rel (%p249) target = $region16
      $region15: #{tpu_custom_call.1} parent=5 // pred_region
        // Predicated region
        $region17: #{tpu_custom_call.1} parent=15 // pred_check
          %p252 = pneg %p45
        $region18: #{tpu_custom_call.1} parent=15 // pred_check_branch
          %254 = sbr.rel (%p252) target = $region20
        $region19: #{tpu_custom_call.1} parent=15 // pred_region
          %s255 = sand.u32 %s35, 1
          %s256 = scalar_lea.sflag [#allocation6], %s255
          %s257 = sand.u32 %s35, 1
          %s258 = smul.addr %s257, 8
          %s259 = scalar_lea.vmem [#allocation5], %s258
          %s261 = ssub.s32 128, 128
          %262 = vsyncadd %s256, %s261
          %s263 = smul.addr %s25, 128
          %s264 = scalar_lea.hbm %s0, %s263
          %s266 = sshll.u32 %s259, 4
          %s267 = int_to_ptr.vmem [resolvable:$true] %s266
          %269 = dma.hbm_to_vmem [thread:$0]  %s264, 128, %s267, %s256
        $region20: #{tpu_custom_call.1} parent=15 // pred_fallthru
          _
        // Predicated region
        $region21: #{tpu_custom_call.1} parent=15 // pred_check
          %p270 = pneg %p71
        $region22: #{tpu_custom_call.1} parent=15 // pred_check_branch
          %272 = sbr.rel (%p270) target = $region24
        $region23: #{tpu_custom_call.1} parent=15 // pred_region
          %s273 = sand.u32 %s25, 1
          %s274 = scalar_lea.sflag [#allocation9], %s273
          %s275 = sand.u32 %s61, 1
          %s276 = smul.addr %s275, 32
          %s277 = scalar_lea.vmem [#allocation8], %s276
          %s279 = ssub.s32 512, 512
          %280 = vsyncadd %s274, %s279
          %s281 = smul.addr %s25, 4
          %s282 = smul.addr %s281, 128
          %s283 = scalar_lea.hbm %s1, %s282
          %s284 = sshll.u32 %s277, 4
          %s285 = int_to_ptr.vmem [resolvable:$true] %s284
          %290 = dma.hbm_to_vmem [thread:$0]  %s283, 512, %s285, %s274, 128, 128, 8
        $region24: #{tpu_custom_call.1} parent=15 // pred_fallthru
          _
        // Predicated region
        $region25: #{tpu_custom_call.1} parent=15 // pred_check
          %p291 = pneg %p97
        $region26: #{tpu_custom_call.1} parent=15 // pred_check_branch
          %293 = sbr.rel (%p291) target = $region28
        $region27: #{tpu_custom_call.1} parent=15 // pred_region
          %s294 = sand.u32 %s25, 1
          %s295 = scalar_lea.sflag [#allocation9], %s294
          %s296 = sand.u32 %s87, 1
          %s297 = smul.addr %s296, 32
          %s298 = scalar_lea.vmem [#allocation10], %s297
          %s300 = ssub.s32 512, 512
          %301 = vsyncadd %s295, %s300
          %s302 = smul.addr %s25, 4
          %s303 = smul.addr %s302, 128
          %s304 = scalar_lea.hbm %s2, %s303
          %s305 = sshll.u32 %s298, 4
          %s306 = int_to_ptr.vmem [resolvable:$true] %s305
          %311 = dma.hbm_to_vmem [thread:$0]  %s304, 512, %s306, %s295, 128, 128, 8
        $region28: #{tpu_custom_call.1} parent=15 // pred_fallthru
          _
        // Predicated region
        $region29: #{tpu_custom_call.1} parent=15 // pred_check
          %p312 = pneg %p123
        $region30: #{tpu_custom_call.1} parent=15 // pred_check_branch
          %314 = sbr.rel (%p312) target = $region32
        $region31: #{tpu_custom_call.1} parent=15 // pred_region
          %p315 = scmp.lt.s32.totalorder %s25, 1
          %s316 = scalar_select %p315, %s25, 1
          %s317 = scalar_lea.vmem %s3, %s316
        $region32: #{tpu_custom_call.1} parent=15 // pred_fallthru
          _
        // Predicated region
        $region33: #{tpu_custom_call.1} parent=15 // pred_check
          %p318 = pneg %p149
        $region34: #{tpu_custom_call.1} parent=15 // pred_check_branch
          %320 = sbr.rel (%p318) target = $region36
        $region35: #{tpu_custom_call.1} parent=15 // pred_region
          %s321 = sand.u32 %s25, 1
          %s322 = scalar_lea.sflag [#allocation12], %s321
          %s323 = sand.u32 %s139, 1
          %s324 = smul.addr %s323, 32
          %s325 = scalar_lea.vmem [#allocation11], %s324
          %s327 = ssub.s32 512, 512
          %328 = vsyncadd %s322, %s327
          %s329 = smul.addr %s25, 4
          %s330 = smul.addr %s329, 128
          %s331 = scalar_lea.hbm %s4, %s330
          %s332 = sshll.u32 %s325, 4
          %s333 = int_to_ptr.vmem [resolvable:$true] %s332
          %338 = dma.hbm_to_vmem [thread:$0]  %s331, 512, %s333, %s322, 128, 128, 8
        $region36: #{tpu_custom_call.1} parent=15 // pred_fallthru
          _
        // Predicated region
        $region37: #{tpu_custom_call.1} parent=15 // pred_check
          %p339 = pneg %p175
        $region38: #{tpu_custom_call.1} parent=15 // pred_check_branch
          %341 = sbr.rel (%p339) target = $region40
        $region39: #{tpu_custom_call.1} parent=15 // pred_region
          %s342 = sand.u32 %s25, 1
          %s343 = scalar_lea.sflag [#allocation12], %s342
          %s344 = sand.u32 %s165, 1
          %s345 = smul.addr %s344, 32
          %s346 = scalar_lea.vmem [#allocation13], %s345
          %s348 = ssub.s32 512, 512
          %349 = vsyncadd %s343, %s348
          %s350 = smul.addr %s25, 4
          %s351 = smul.addr %s350, 128
          %s352 = scalar_lea.hbm %s5, %s351
          %s353 = sshll.u32 %s346, 4
          %s354 = int_to_ptr.vmem [resolvable:$true] %s353
          %359 = dma.hbm_to_vmem [thread:$0]  %s352, 512, %s354, %s343, 128, 128, 8
        $region40: #{tpu_custom_call.1} parent=15 // pred_fallthru
          _
        // Predicated region
        $region41: #{tpu_custom_call.1} parent=15 // pred_check
          %p360 = pneg %p201
        $region42: #{tpu_custom_call.1} parent=15 // pred_check_branch
          %362 = sbr.rel (%p360) target = $region44
        $region43: #{tpu_custom_call.1} parent=15 // pred_region
          %p363 = scmp.lt.s32.totalorder %s25, 1
          %s364 = scalar_select %p363, %s25, 1
          %s365 = scalar_lea.vmem %s6, %s364
        $region44: #{tpu_custom_call.1} parent=15 // pred_fallthru
          _
      $region16: #{tpu_custom_call.1} parent=5 // pred_fallthru
        _
      %p366 = scmp.le.s32.totalorder 1, %s25
      %p367 = scmp.lt.s32.totalorder %s25, 3
      %p368 = pnand %p366, %p367
      %p369 = pneg %p368
      // Predicated region
      $region45: #{tpu_custom_call.1} parent=5 // pred_check
        _
      $region46: #{tpu_custom_call.1} parent=5 // pred_check_branch
        %371 = sbr.rel (%p368) target = $region48
      $region47: #{tpu_custom_call.1} parent=5 // pred_region
        %s372 = ssub.s32 %s25, 1
        %s373 = sand.u32 %s38, 1
        %s374 = scalar_lea.sflag [#allocation6], %s373
        %s375 = sand.u32 %s38, 1
        %s376 = smul.addr %s375, 8
        %s377 = scalar_lea.vmem [#allocation5], %s376
        // Predicated region
        $region49: #{tpu_custom_call.1} parent=47 // pred_check
          %p378 = pneg %p51
        $region50: #{tpu_custom_call.1} parent=47 // pred_check_branch
          %380 = sbr.rel (%p378) target = $region52
        $region51: #{tpu_custom_call.1} parent=47 // pred_region
          %381 = dma.done %s374, 128
        $region52: #{tpu_custom_call.1} parent=47 // pred_fallthru
          _
        %s382 = sand.u32 %s30, 1
        %s383 = scalar_lea.sflag [#allocation9], %s382
        %s384 = sand.u32 %s64, 1
        %s385 = smul.addr %s384, 32
        %s386 = scalar_lea.vmem [#allocation8], %s385
        // Predicated region
        $region53: #{tpu_custom_call.1} parent=47 // pred_check
          %p387 = pneg %p77
        $region54: #{tpu_custom_call.1} parent=47 // pred_check_branch
          %389 = sbr.rel (%p387) target = $region56
        $region55: #{tpu_custom_call.1} parent=47 // pred_region
          %390 = dma.done %s383, 512
        $region56: #{tpu_custom_call.1} parent=47 // pred_fallthru
          _
        %s391 = sand.u32 %s30, 1
        %s392 = scalar_lea.sflag [#allocation9], %s391
        %s393 = sand.u32 %s90, 1
        %s394 = smul.addr %s393, 32
        %s395 = scalar_lea.vmem [#allocation10], %s394
        // Predicated region
        $region57: #{tpu_custom_call.1} parent=47 // pred_check
          %p396 = pneg %p103
        $region58: #{tpu_custom_call.1} parent=47 // pred_check_branch
          %398 = sbr.rel (%p396) target = $region60
        $region59: #{tpu_custom_call.1} parent=47 // pred_region
          %399 = dma.done %s392, 512
        $region60: #{tpu_custom_call.1} parent=47 // pred_fallthru
          _
        %s400 = sand.u32 %s30, 1
        %s401 = scalar_lea.sflag [#allocation12], %s400
        %s402 = sand.u32 %s142, 1
        %s403 = smul.addr %s402, 32
        %s404 = scalar_lea.vmem [#allocation11], %s403
        // Predicated region
        $region61: #{tpu_custom_call.1} parent=47 // pred_check
          %p405 = pneg %p155
        $region62: #{tpu_custom_call.1} parent=47 // pred_check_branch
          %407 = sbr.rel (%p405) target = $region64
        $region63: #{tpu_custom_call.1} parent=47 // pred_region
          %408 = dma.done %s401, 512
        $region64: #{tpu_custom_call.1} parent=47 // pred_fallthru
          _
        %s409 = sand.u32 %s30, 1
        %s410 = scalar_lea.sflag [#allocation12], %s409
        %s411 = sand.u32 %s168, 1
        %s412 = smul.addr %s411, 32
        %s413 = scalar_lea.vmem [#allocation13], %s412
        // Predicated region
        $region65: #{tpu_custom_call.1} parent=47 // pred_check
          %p414 = pneg %p181
        $region66: #{tpu_custom_call.1} parent=47 // pred_check_branch
          %416 = sbr.rel (%p414) target = $region68
        $region67: #{tpu_custom_call.1} parent=47 // pred_region
          %417 = dma.done %s410, 512
        $region68: #{tpu_custom_call.1} parent=47 // pred_fallthru
          _
        %s418 = sand.u32 %s38, 1
        %s419 = scalar_lea.sflag [#allocation6], %s418
        %s420 = sand.u32 %s38, 1
        %s421 = smul.addr %s420, 8
        %s422 = scalar_lea.vmem [#allocation5], %s421
        %p423 = pneg %p51
        %p424 = pneg %p48
        %s425 = sand.u32 %s30, 1
        %s426 = scalar_lea.sflag [#allocation9], %s425
        %s427 = sand.u32 %s64, 1
        %s428 = smul.addr %s427, 32
        %s429 = scalar_lea.vmem [#allocation8], %s428
        %p430 = pneg %p77
        %p431 = pneg %p74
        %s432 = sand.u32 %s30, 1
        %s433 = scalar_lea.sflag [#allocation9], %s432
        %s434 = sand.u32 %s90, 1
        %s435 = smul.addr %s434, 32
        %s436 = scalar_lea.vmem [#allocation10], %s435
        %p437 = pneg %p103
        %p438 = pneg %p100
        %p439 = scmp.lt.s32.totalorder %s30, 1
        %s440 = scalar_select %p439, %s30, 1
        %s441 = scalar_lea.vmem %s3, %s440
        %p442 = pneg %p129
        %p443 = pneg %p126
        %s444 = sand.u32 %s30, 1
        %s445 = scalar_lea.sflag [#allocation12], %s444
        %s446 = sand.u32 %s142, 1
        %s447 = smul.addr %s446, 32
        %s448 = scalar_lea.vmem [#allocation11], %s447
        %p449 = pneg %p155
        %p450 = pneg %p152
        %s451 = sand.u32 %s30, 1
        %s452 = scalar_lea.sflag [#allocation12], %s451
        %s453 = sand.u32 %s168, 1
        %s454 = smul.addr %s453, 32
        %s455 = scalar_lea.vmem [#allocation13], %s454
        %p456 = pneg %p181
        %p457 = pneg %p178
        %p458 = scmp.lt.s32.totalorder %s30, 1
        %s459 = scalar_select %p458, %s30, 1
        %s460 = scalar_lea.vmem %s6, %s459
        %p461 = pneg %p207
        %p462 = pneg %p204
        %p463 = pneg %p233
        %p464 = pneg %p230
        %s465 = sand.u32 %s220, 1
        %s466 = scalar_lea.sflag [#allocation7], %s465
        %s467 = sand.u32 %s220, 1
        %s468 = smul.addr %s467, 8
        %s469 = scalar_lea.vmem [#allocation14], %s468
        %p470 = scmp.lt.s32.totalorder %s30, 1
        %s471 = scalar_select %p470, %s30, 1
        %s472 = scalar_lea.vmem %s3, %s471
        %p473 = scmp.lt.s32.totalorder %s30, 1
        %s474 = scalar_select %p473, %s30, 1
        %s475 = scalar_lea.vmem %s6, %s474
        %v476 = vld [vmem:[%s377] sm:$0xff]
        %v477 = vld [vmem:[%s386] sm:$0xff]
        %v478 = vld [vmem:[%s386 + $0x8] sm:$0xff]
        %v479 = vld [vmem:[%s386 + $0x10] sm:$0xff]
        %v480 = vld [vmem:[%s386 + $0x18] sm:$0xff]
        %v481 = vld [vmem:[%s472] sm:$0x1]
        %v483 = vlaneseq
        %v484 = vshrl.u32 %v483, 7
        %v485 = vsub.s32 0, %v484
        %v486 = vrot.slane %v481, %v485
        %vm488 = vcmask 261120
        %v490 = vsel %vm488, %v476, 0
        %492 = vmatprep.subr.mxu0 0.0
        %493 = vmatpush1.msra.mxu0 %v477
        %494 = vmatprep.subr.mxu0 0.0
        %495 = vmatpush1.msra.mxu0 %v478
        %496 = vmatprep.subr.mxu0 0.0
        %497 = vmatpush1.msra.mxu0 %v479
        %498 = vmatprep.subr.mxu0 0.0
        %499 = vmatpush1.msra.mxu0 %v480
        %500 = vmatprep.subr.mxu0 0.0
        %501 = vmatpush1.msra.mxu0 0.0
        %502 = vmatprep.subr.mxu0 0.0
        %503 = vmatpush1.msra.mxu0 0.0
        %504 = vmatprep.subr.mxu0 0.0
        %505 = vmatpush1.msra.mxu0 0.0
        %506 = vmatprep.subr.mxu0 0.0
        %507 = vmatpush1.msra.mxu0 0.0
        %508 = vmatprep.subr.mxu0 0.0
        %509 = vmatpush1.msra.mxu0 0.0
        %510 = vmatprep.subr.mxu0 0.0
        %511 = vmatpush1.msra.mxu0 0.0
        %512 = vmatprep.subr.mxu0 0.0
        %513 = vmatpush1.msra.mxu0 0.0
        %514 = vmatprep.subr.mxu0 0.0
        %515 = vmatpush1.msra.mxu0 0.0
        %516 = vmatprep.subr.mxu0 0.0
        %517 = vmatpush1.msra.mxu0 0.0
        %518 = vmatprep.subr.mxu0 0.0
        %519 = vmatpush1.msra.mxu0 0.0
        %520 = vmatprep.subr.mxu0 0.0
        %521 = vmatpush1.msra.mxu0 0.0
        %522 = vmatprep.subr.mxu0 0.0
        %523 = vmatpush1.msra.mxu0 0.0
        %524 = vmatprep.subr.mxu0 0.0
        %525 = vmatpush1.msra.mxu0 0.0
        %526 = vmatprep.subr.mxu0 0.0
        %527 = vmatpush1.msra.mxu0 0.0
        %528 = vmatprep.subr.mxu0 0.0
        %529 = vmatpush1.msra.mxu0 0.0
        %530 = vmatprep.subr.mxu0 0.0
        %531 = vmatpush1.msra.mxu0 0.0
        %532 = vmatprep.subr.mxu0 0.0
        %533 = vmatpush1.msra.mxu0 0.0
        %534 = vmatprep.subr.mxu0 0.0
        %535 = vmatpush1.msra.mxu0 0.0
        %536 = vmatprep.subr.mxu0 0.0
        %537 = vmatpush1.msra.mxu0 0.0
        %538 = vmatprep.subr.mxu0 0.0
        %539 = vmatpush1.msra.mxu0 0.0
        %540 = vmatprep.subr.mxu0 0.0
        %541 = vmatpush1.msra.mxu0 0.0
        %542 = vmatprep.subr.mxu0 0.0
        %543 = vmatpush1.msra.mxu0 0.0
        %544 = vmatprep.subr.mxu0 0.0
        %545 = vmatpush1.msra.mxu0 0.0
        %546 = vmatprep.subr.mxu0 0.0
        %547 = vmatpush1.msra.mxu0 0.0
        %548 = vmatprep.subr.mxu0 0.0
        %549 = vmatpush1.msra.mxu0 0.0
        %550 = vmatprep.subr.mxu0 0.0
        %551 = vmatpush1.msra.mxu0 0.0
        %552 = vmatprep.subr.mxu0 0.0
        %553 = vmatpush1.msra.mxu0 0.0
        %554 = vmatprep.subr.mxu0 0.0
        %555 = vmatpush1.msra.mxu0 0.0
        %556 = vmatprep.mubr.f32.mxu0 0.0
        %557 = vmatmul.mubr.f32.gmra.mrb[0].mxu0 %v490
        %v558 = vpop.f32.mrb[0].mxu0
        %v559 = vadd.f32 %v486, %v558
        %v560 = vpop.f32.mrb[0].mxu0
        %561 = vdwg.mxu0
        %562 = vst [vmem:[#allocation2] sm:$0xff] %v559
        %v563 = vld [vmem:[%s395] sm:$0xff]
        %v564 = vld [vmem:[%s395 + $0x8] sm:$0xff]
        %v565 = vld [vmem:[%s395 + $0x10] sm:$0xff]
        %v566 = vld [vmem:[%s395 + $0x18] sm:$0xff]
        %v567 = vld [vmem:[#allocation2] sm:$0x1]
        %v569 = vsel %vm488, 0.0, 0
        %571 = vmatprep.subr.mxu0 0.0
        %572 = vmatpush1.msra.mxu0 %v563
        %573 = vmatprep.subr.mxu0 0.0
        %574 = vmatpush1.msra.mxu0 %v564
        %575 = vmatprep.subr.mxu0 0.0
        %576 = vmatpush1.msra.mxu0 %v565
        %577 = vmatprep.subr.mxu0 0.0
        %578 = vmatpush1.msra.mxu0 %v566
        %579 = vmatprep.subr.mxu0 0.0
        %580 = vmatpush1.msra.mxu0 0.0
        %581 = vmatprep.subr.mxu0 0.0
        %582 = vmatpush1.msra.mxu0 0.0
        %583 = vmatprep.subr.mxu0 0.0
        %584 = vmatpush1.msra.mxu0 0.0
        %585 = vmatprep.subr.mxu0 0.0
        %586 = vmatpush1.msra.mxu0 0.0
        %587 = vmatprep.subr.mxu0 0.0
        %588 = vmatpush1.msra.mxu0 0.0
        %589 = vmatprep.subr.mxu0 0.0
        %590 = vmatpush1.msra.mxu0 0.0
        %591 = vmatprep.subr.mxu0 0.0
        %592 = vmatpush1.msra.mxu0 0.0
        %593 = vmatprep.subr.mxu0 0.0
        %594 = vmatpush1.msra.mxu0 0.0
        %595 = vmatprep.subr.mxu0 0.0
        %596 = vmatpush1.msra.mxu0 0.0
        %597 = vmatprep.subr.mxu0 0.0
        %598 = vmatpush1.msra.mxu0 0.0
        %599 = vmatprep.subr.mxu0 0.0
        %600 = vmatpush1.msra.mxu0 0.0
        %601 = vmatprep.subr.mxu0 0.0
        %602 = vmatpush1.msra.mxu0 0.0
        %603 = vmatprep.subr.mxu0 0.0
        %604 = vmatpush1.msra.mxu0 0.0
        %605 = vmatprep.subr.mxu0 0.0
        %606 = vmatpush1.msra.mxu0 0.0
        %607 = vmatprep.subr.mxu0 0.0
        %608 = vmatpush1.msra.mxu0 0.0
        %609 = vmatprep.subr.mxu0 0.0
        %610 = vmatpush1.msra.mxu0 0.0
        %611 = vmatprep.subr.mxu0 0.0
        %612 = vmatpush1.msra.mxu0 0.0
        %613 = vmatprep.subr.mxu0 0.0
        %614 = vmatpush1.msra.mxu0 0.0
        %615 = vmatprep.subr.mxu0 0.0
        %616 = vmatpush1.msra.mxu0 0.0
        %617 = vmatprep.subr.mxu0 0.0
        %618 = vmatpush1.msra.mxu0 0.0
        %619 = vmatprep.subr.mxu0 0.0
        %620 = vmatpush1.msra.mxu0 0.0
        %621 = vmatprep.subr.mxu0 0.0
        %622 = vmatpush1.msra.mxu0 0.0
        %623 = vmatprep.subr.mxu0 0.0
        %624 = vmatpush1.msra.mxu0 0.0
        %625 = vmatprep.subr.mxu0 0.0
        %626 = vmatpush1.msra.mxu0 0.0
        %627 = vmatprep.subr.mxu0 0.0
        %628 = vmatpush1.msra.mxu0 0.0
        %629 = vmatprep.subr.mxu0 0.0
        %630 = vmatpush1.msra.mxu0 0.0
        %631 = vmatprep.subr.mxu0 0.0
        %632 = vmatpush1.msra.mxu0 0.0
        %633 = vmatprep.subr.mxu0 0.0
        %634 = vmatpush1.msra.mxu0 0.0
        %635 = vmatprep.mubr.f32.mxu0 0.0
        %636 = vmatmul.mubr.f32.gmra.mrb[0].mxu0 %v569
        %v637 = vpop.f32.mrb[0].mxu0
        %v638 = vadd.f32 0.0, %v637
        %v639 = vpop.f32.mrb[0].mxu0
        %640 = vdwg.mxu0
        %v641 = vadd.f32 %v567, %v638
        %v642 = vxor.u32 %v641, 2147483648
        %v643 = vmul.f32 %v642, 1.442695
        %v644 = vpow.pop %v643
        %v645 = vadd.f32 %v644, 1.0
        %v646 = vrcp.pop %v645
        %v647 = vmul.f32 1.0, %v646
        %v648 = vtanh.pop %v641
        %v649 = vmul.f32 %v647, 0.0
        %651 = vrot.lane.b32.xlu0 %v648, 64
        %v652 = vpop.permute.xlu0 %651
        %v654 = vmul.f32 %v647, %v652
        %656 = vrot.lane.b32.xlu0 %v654, 32
        %v657 = vpop.permute.xlu0 %656
        %v659 = vadd.f32 %v649, %v657
        %v660 = vtanh.pop %v659
        %662 = vrot.lane.b32.xlu0 %v660, 64
        %v663 = vpop.permute.xlu0 %662
        %v665 = vmul.f32 %v647, %v663
        %667 = vrot.lane.b32.xlu0 %v665, 32
        %v668 = vpop.permute.xlu0 %667
        %vm670 = vcmask 253952
        %671 = vst.msk [vmem:[#allocation3] sm:$0x1] %vm670, %v668
        %v672 = vld [vmem:[#allocation2 + $0x1] sm:$0x1]
        %v673 = vsel %vm488, %v668, 0
        %675 = vmatprep.subr.mxu0 0.0
        %676 = vmatpush1.msra.mxu0 %v563
        %677 = vmatprep.subr.mxu0 0.0
        %678 = vmatpush1.msra.mxu0 %v564
        %679 = vmatprep.subr.mxu0 0.0
        %680 = vmatpush1.msra.mxu0 %v565
        %681 = vmatprep.subr.mxu0 0.0
        %682 = vmatpush1.msra.mxu0 %v566
        %683 = vmatprep.subr.mxu0 0.0
        %684 = vmatpush1.msra.mxu0 0.0
        %685 = vmatprep.subr.mxu0 0.0
        %686 = vmatpush1.msra.mxu0 0.0
        %687 = vmatprep.subr.mxu0 0.0
        %688 = vmatpush1.msra.mxu0 0.0
        %689 = vmatprep.subr.mxu0 0.0
        %690 = vmatpush1.msra.mxu0 0.0
        %691 = vmatprep.subr.mxu0 0.0
        %692 = vmatpush1.msra.mxu0 0.0
        %693 = vmatprep.subr.mxu0 0.0
        %694 = vmatpush1.msra.mxu0 0.0
        %695 = vmatprep.subr.mxu0 0.0
        %696 = vmatpush1.msra.mxu0 0.0
        %697 = vmatprep.subr.mxu0 0.0
        %698 = vmatpush1.msra.mxu0 0.0
        %699 = vmatprep.subr.mxu0 0.0
        %700 = vmatpush1.msra.mxu0 0.0
        %701 = vmatprep.subr.mxu0 0.0
        %702 = vmatpush1.msra.mxu0 0.0
        %703 = vmatprep.subr.mxu0 0.0
        %704 = vmatpush1.msra.mxu0 0.0
        %705 = vmatprep.subr.mxu0 0.0
        %706 = vmatpush1.msra.mxu0 0.0
        %707 = vmatprep.subr.mxu0 0.0
        %708 = vmatpush1.msra.mxu0 0.0
        %709 = vmatprep.subr.mxu0 0.0
        %710 = vmatpush1.msra.mxu0 0.0
        %711 = vmatprep.subr.mxu0 0.0
        %712 = vmatpush1.msra.mxu0 0.0
        %713 = vmatprep.subr.mxu0 0.0
        %714 = vmatpush1.msra.mxu0 0.0
        %715 = vmatprep.subr.mxu0 0.0
        %716 = vmatpush1.msra.mxu0 0.0
        %717 = vmatprep.subr.mxu0 0.0
        %718 = vmatpush1.msra.mxu0 0.0
        %719 = vmatprep.subr.mxu0 0.0
        %720 = vmatpush1.msra.mxu0 0.0
        %721 = vmatprep.subr.mxu0 0.0
        %722 = vmatpush1.msra.mxu0 0.0
        %723 = vmatprep.subr.mxu0 0.0
        %724 = vmatpush1.msra.mxu0 0.0
        %725 = vmatprep.subr.mxu0 0.0
        %726 = vmatpush1.msra.mxu0 0.0
        %727 = vmatprep.subr.mxu0 0.0
        %728 = vmatpush1.msra.mxu0 0.0
        %729 = vmatprep.subr.mxu0 0.0
        %730 = vmatpush1.msra.mxu0 0.0
        %731 = vmatprep.subr.mxu0 0.0
        %732 = vmatpush1.msra.mxu0 0.0
        %733 = vmatprep.subr.mxu0 0.0
        %734 = vmatpush1.msra.mxu0 0.0
        %735 = vmatprep.subr.mxu0 0.0
        %736 = vmatpush1.msra.mxu0 0.0
        %737 = vmatprep.subr.mxu0 0.0
        %738 = vmatpush1.msra.mxu0 0.0
        %739 = vmatprep.mubr.f32.mxu0 0.0
        %740 = vmatmul.mubr.f32.gmra.mrb[0].mxu0 %v673
        %v741 = vpop.f32.mrb[0].mxu0
        %v742 = vadd.f32 0.0, %v741
        %v743 = vpop.f32.mrb[0].mxu0
        %744 = vdwg.mxu0
        %v745 = vadd.f32 %v672, %v742
        %v746 = vxor.u32 %v745, 2147483648
        %v747 = vmul.f32 %v746, 1.442695
        %v748 = vpow.pop %v747
        %v749 = vadd.f32 %v748, 1.0
        %v750 = vrcp.pop %v749
        %v751 = vmul.f32 1.0, %v750
        %v752 = vtanh.pop %v745
        %v753 = vmul.f32 %v751, %v659
        %755 = vrot.lane.b32.xlu0 %v752, 64
        %v756 = vpop.permute.xlu0 %755
        %v758 = vmul.f32 %v751, %v756
        %760 = vrot.lane.b32.xlu0 %v758, 32
        %v761 = vpop.permute.xlu0 %760
        %v763 = vadd.f32 %v753, %v761
        %v764 = vtanh.pop %v763
        %766 = vrot.lane.b32.xlu0 %v764, 64
        %v767 = vpop.permute.xlu0 %766
        %v769 = vmul.f32 %v751, %v767
        %771 = vrot.lane.b32.xlu0 %v769, 32
        %v772 = vpop.permute.xlu0 %771
        %774 = vst.msk [vmem:[#allocation3 + $0x1] sm:$0x1] %vm670, %v772
        %v775 = vld [vmem:[#allocation2 + $0x2] sm:$0x1]
        %v776 = vsel %vm488, %v772, 0
        %778 = vmatprep.subr.mxu0 0.0
        %779 = vmatpush1.msra.mxu0 %v563
        %780 = vmatprep.subr.mxu0 0.0
        %781 = vmatpush1.msra.mxu0 %v564
        %782 = vmatprep.subr.mxu0 0.0
        %783 = vmatpush1.msra.mxu0 %v565
        %784 = vmatprep.subr.mxu0 0.0
        %785 = vmatpush1.msra.mxu0 %v566
        %786 = vmatprep.subr.mxu0 0.0
        %787 = vmatpush1.msra.mxu0 0.0
        %788 = vmatprep.subr.mxu0 0.0
        %789 = vmatpush1.msra.mxu0 0.0
        %790 = vmatprep.subr.mxu0 0.0
        %791 = vmatpush1.msra.mxu0 0.0
        %792 = vmatprep.subr.mxu0 0.0
        %793 = vmatpush1.msra.mxu0 0.0
        %794 = vmatprep.subr.mxu0 0.0
        %795 = vmatpush1.msra.mxu0 0.0
        %796 = vmatprep.subr.mxu0 0.0
        %797 = vmatpush1.msra.mxu0 0.0
        %798 = vmatprep.subr.mxu0 0.0
        %799 = vmatpush1.msra.mxu0 0.0
        %800 = vmatprep.subr.mxu0 0.0
        %801 = vmatpush1.msra.mxu0 0.0
        %802 = vmatprep.subr.mxu0 0.0
        %803 = vmatpush1.msra.mxu0 0.0
        %804 = vmatprep.subr.mxu0 0.0
        %805 = vmatpush1.msra.mxu0 0.0
        %806 = vmatprep.subr.mxu0 0.0
        %807 = vmatpush1.msra.mxu0 0.0
        %808 = vmatprep.subr.mxu0 0.0
        %809 = vmatpush1.msra.mxu0 0.0
        %810 = vmatprep.subr.mxu0 0.0
        %811 = vmatpush1.msra.mxu0 0.0
        %812 = vmatprep.subr.mxu0 0.0
        %813 = vmatpush1.msra.mxu0 0.0
        %814 = vmatprep.subr.mxu0 0.0
        %815 = vmatpush1.msra.mxu0 0.0
        %816 = vmatprep.subr.mxu0 0.0
        %817 = vmatpush1.msra.mxu0 0.0
        %818 = vmatprep.subr.mxu0 0.0
        %819 = vmatpush1.msra.mxu0 0.0
        %820 = vmatprep.subr.mxu0 0.0
        %821 = vmatpush1.msra.mxu0 0.0
        %822 = vmatprep.subr.mxu0 0.0
        %823 = vmatpush1.msra.mxu0 0.0
        %824 = vmatprep.subr.mxu0 0.0
        %825 = vmatpush1.msra.mxu0 0.0
        %826 = vmatprep.subr.mxu0 0.0
        %827 = vmatpush1.msra.mxu0 0.0
        %828 = vmatprep.subr.mxu0 0.0
        %829 = vmatpush1.msra.mxu0 0.0
        %830 = vmatprep.subr.mxu0 0.0
        %831 = vmatpush1.msra.mxu0 0.0
        %832 = vmatprep.subr.mxu0 0.0
        %833 = vmatpush1.msra.mxu0 0.0
        %834 = vmatprep.subr.mxu0 0.0
        %835 = vmatpush1.msra.mxu0 0.0
        %836 = vmatprep.subr.mxu0 0.0
        %837 = vmatpush1.msra.mxu0 0.0
        %838 = vmatprep.subr.mxu0 0.0
        %839 = vmatpush1.msra.mxu0 0.0
        %840 = vmatprep.subr.mxu0 0.0
        %841 = vmatpush1.msra.mxu0 0.0
        %842 = vmatprep.mubr.f32.mxu0 0.0
        %843 = vmatmul.mubr.f32.gmra.mrb[0].mxu0 %v776
        %v844 = vpop.f32.mrb[0].mxu0
        %v845 = vadd.f32 0.0, %v844
        %v846 = vpop.f32.mrb[0].mxu0
        %847 = vdwg.mxu0
        %v848 = vadd.f32 %v775, %v845
        %v849 = vxor.u32 %v848, 2147483648
        %v850 = vmul.f32 %v849, 1.442695
        %v851 = vpow.pop %v850
        %v852 = vadd.f32 %v851, 1.0
        %v853 = vrcp.pop %v852
        %v854 = vmul.f32 1.0, %v853
        %v855 = vtanh.pop %v848
        %v856 = vmul.f32 %v854, %v763
        %858 = vrot.lane.b32.xlu0 %v855, 64
        %v859 = vpop.permute.xlu0 %858
        %v861 = vmul.f32 %v854, %v859
        %863 = vrot.lane.b32.xlu0 %v861, 32
        %v864 = vpop.permute.xlu0 %863
        %v866 = vadd.f32 %v856, %v864
        %v867 = vtanh.pop %v866
        %869 = vrot.lane.b32.xlu0 %v867, 64
        %v870 = vpop.permute.xlu0 %869
        %v872 = vmul.f32 %v854, %v870
        %874 = vrot.lane.b32.xlu0 %v872, 32
        %v875 = vpop.permute.xlu0 %874
        %877 = vst.msk [vmem:[#allocation3 + $0x2] sm:$0x1] %vm670, %v875
        %v878 = vld [vmem:[#allocation2 + $0x3] sm:$0x1]
        %v879 = vsel %vm488, %v875, 0
        %881 = vmatprep.subr.mxu0 0.0
        %882 = vmatpush1.msra.mxu0 %v563
        %883 = vmatprep.subr.mxu0 0.0
        %884 = vmatpush1.msra.mxu0 %v564
        %885 = vmatprep.subr.mxu0 0.0
        %886 = vmatpush1.msra.mxu0 %v565
        %887 = vmatprep.subr.mxu0 0.0
        %888 = vmatpush1.msra.mxu0 %v566
        %889 = vmatprep.subr.mxu0 0.0
        %890 = vmatpush1.msra.mxu0 0.0
        %891 = vmatprep.subr.mxu0 0.0
        %892 = vmatpush1.msra.mxu0 0.0
        %893 = vmatprep.subr.mxu0 0.0
        %894 = vmatpush1.msra.mxu0 0.0
        %895 = vmatprep.subr.mxu0 0.0
        %896 = vmatpush1.msra.mxu0 0.0
        %897 = vmatprep.subr.mxu0 0.0
        %898 = vmatpush1.msra.mxu0 0.0
        %899 = vmatprep.subr.mxu0 0.0
        %900 = vmatpush1.msra.mxu0 0.0
        %901 = vmatprep.subr.mxu0 0.0
        %902 = vmatpush1.msra.mxu0 0.0
        %903 = vmatprep.subr.mxu0 0.0
        %904 = vmatpush1.msra.mxu0 0.0
        %905 = vmatprep.subr.mxu0 0.0
        %906 = vmatpush1.msra.mxu0 0.0
        %907 = vmatprep.subr.mxu0 0.0
        %908 = vmatpush1.msra.mxu0 0.0
        %909 = vmatprep.subr.mxu0 0.0
        %910 = vmatpush1.msra.mxu0 0.0
        %911 = vmatprep.subr.mxu0 0.0
        %912 = vmatpush1.msra.mxu0 0.0
        %913 = vmatprep.subr.mxu0 0.0
        %914 = vmatpush1.msra.mxu0 0.0
        %915 = vmatprep.subr.mxu0 0.0
        %916 = vmatpush1.msra.mxu0 0.0
        %917 = vmatprep.subr.mxu0 0.0
        %918 = vmatpush1.msra.mxu0 0.0
        %919 = vmatprep.subr.mxu0 0.0
        %920 = vmatpush1.msra.mxu0 0.0
        %921 = vmatprep.subr.mxu0 0.0
        %922 = vmatpush1.msra.mxu0 0.0
        %923 = vmatprep.subr.mxu0 0.0
        %924 = vmatpush1.msra.mxu0 0.0
        %925 = vmatprep.subr.mxu0 0.0
        %926 = vmatpush1.msra.mxu0 0.0
        %927 = vmatprep.subr.mxu0 0.0
        %928 = vmatpush1.msra.mxu0 0.0
        %929 = vmatprep.subr.mxu0 0.0
        %930 = vmatpush1.msra.mxu0 0.0
        %931 = vmatprep.subr.mxu0 0.0
        %932 = vmatpush1.msra.mxu0 0.0
        %933 = vmatprep.subr.mxu0 0.0
        %934 = vmatpush1.msra.mxu0 0.0
        %935 = vmatprep.subr.mxu0 0.0
        %936 = vmatpush1.msra.mxu0 0.0
        %937 = vmatprep.subr.mxu0 0.0
        %938 = vmatpush1.msra.mxu0 0.0
        %939 = vmatprep.subr.mxu0 0.0
        %940 = vmatpush1.msra.mxu0 0.0
        %941 = vmatprep.subr.mxu0 0.0
        %942 = vmatpush1.msra.mxu0 0.0
        %943 = vmatprep.subr.mxu0 0.0
        %944 = vmatpush1.msra.mxu0 0.0
        %945 = vmatprep.mubr.f32.mxu0 0.0
        %946 = vmatmul.mubr.f32.gmra.mrb[0].mxu0 %v879
        %v947 = vpop.f32.mrb[0].mxu0
        %v948 = vadd.f32 0.0, %v947
        %v949 = vpop.f32.mrb[0].mxu0
        %950 = vdwg.mxu0
        %v951 = vadd.f32 %v878, %v948
        %v952 = vxor.u32 %v951, 2147483648
        %v953 = vmul.f32 %v952, 1.442695
        %v954 = vpow.pop %v953
        %v955 = vadd.f32 %v954, 1.0
        %v956 = vrcp.pop %v955
        %v957 = vmul.f32 1.0, %v956
        %v958 = vtanh.pop %v951
        %v959 = vmul.f32 %v957, %v866
        %961 = vrot.lane.b32.xlu0 %v958, 64
        %v962 = vpop.permute.xlu0 %961
        %v964 = vmul.f32 %v957, %v962
        %966 = vrot.lane.b32.xlu0 %v964, 32
        %v967 = vpop.permute.xlu0 %966
        %v969 = vadd.f32 %v959, %v967
        %v970 = vtanh.pop %v969
        %972 = vrot.lane.b32.xlu0 %v970, 64
        %v973 = vpop.permute.xlu0 %972
        %v975 = vmul.f32 %v957, %v973
        %977 = vrot.lane.b32.xlu0 %v975, 32
        %v978 = vpop.permute.xlu0 %977
        %980 = vst.msk [vmem:[#allocation3 + $0x3] sm:$0x1] %vm670, %v978
        %v981 = vld [vmem:[#allocation2 + $0x4] sm:$0x1]
        %v982 = vsel %vm488, %v978, 0
        %984 = vmatprep.subr.mxu0 0.0
        %985 = vmatpush1.msra.mxu0 %v563
        %986 = vmatprep.subr.mxu0 0.0
        %987 = vmatpush1.msra.mxu0 %v564
        %988 = vmatprep.subr.mxu0 0.0
        %989 = vmatpush1.msra.mxu0 %v565
        %990 = vmatprep.subr.mxu0 0.0
        %991 = vmatpush1.msra.mxu0 %v566
        %992 = vmatprep.subr.mxu0 0.0
        %993 = vmatpush1.msra.mxu0 0.0
        %994 = vmatprep.subr.mxu0 0.0
        %995 = vmatpush1.msra.mxu0 0.0
        %996 = vmatprep.subr.mxu0 0.0
        %997 = vmatpush1.msra.mxu0 0.0
        %998 = vmatprep.subr.mxu0 0.0
        %999 = vmatpush1.msra.mxu0 0.0
        %1000 = vmatprep.subr.mxu0 0.0
        %1001 = vmatpush1.msra.mxu0 0.0
        %1002 = vmatprep.subr.mxu0 0.0
        %1003 = vmatpush1.msra.mxu0 0.0
        %1004 = vmatprep.subr.mxu0 0.0
        %1005 = vmatpush1.msra.mxu0 0.0
        %1006 = vmatprep.subr.mxu0 0.0
        %1007 = vmatpush1.msra.mxu0 0.0
        %1008 = vmatprep.subr.mxu0 0.0
        %1009 = vmatpush1.msra.mxu0 0.0
        %1010 = vmatprep.subr.mxu0 0.0
        %1011 = vmatpush1.msra.mxu0 0.0
        %1012 = vmatprep.subr.mxu0 0.0
        %1013 = vmatpush1.msra.mxu0 0.0
        %1014 = vmatprep.subr.mxu0 0.0
        %1015 = vmatpush1.msra.mxu0 0.0
        %1016 = vmatprep.subr.mxu0 0.0
        %1017 = vmatpush1.msra.mxu0 0.0
        %1018 = vmatprep.subr.mxu0 0.0
        %1019 = vmatpush1.msra.mxu0 0.0
        %1020 = vmatprep.subr.mxu0 0.0
        %1021 = vmatpush1.msra.mxu0 0.0
        %1022 = vmatprep.subr.mxu0 0.0
        %1023 = vmatpush1.msra.mxu0 0.0
        %1024 = vmatprep.subr.mxu0 0.0
        %1025 = vmatpush1.msra.mxu0 0.0
        %1026 = vmatprep.subr.mxu0 0.0
        %1027 = vmatpush1.msra.mxu0 0.0
        %1028 = vmatprep.subr.mxu0 0.0
        %1029 = vmatpush1.msra.mxu0 0.0
        %1030 = vmatprep.subr.mxu0 0.0
        %1031 = vmatpush1.msra.mxu0 0.0
        %1032 = vmatprep.subr.mxu0 0.0
        %1033 = vmatpush1.msra.mxu0 0.0
        %1034 = vmatprep.subr.mxu0 0.0
        %1035 = vmatpush1.msra.mxu0 0.0
        %1036 = vmatprep.subr.mxu0 0.0
        %1037 = vmatpush1.msra.mxu0 0.0
        %1038 = vmatprep.subr.mxu0 0.0
        %1039 = vmatpush1.msra.mxu0 0.0
        %1040 = vmatprep.subr.mxu0 0.0
        %1041 = vmatpush1.msra.mxu0 0.0
        %1042 = vmatprep.subr.mxu0 0.0
        %1043 = vmatpush1.msra.mxu0 0.0
        %1044 = vmatprep.subr.mxu0 0.0
        %1045 = vmatpush1.msra.mxu0 0.0
        %1046 = vmatprep.subr.mxu0 0.0
        %1047 = vmatpush1.msra.mxu0 0.0
        %1048 = vmatprep.mubr.f32.mxu0 0.0
        %1049 = vmatmul.mubr.f32.gmra.mrb[0].mxu0 %v982
        %v1050 = vpop.f32.mrb[0].mxu0
        %v1051 = vadd.f32 0.0, %v1050
        %v1052 = vpop.f32.mrb[0].mxu0
        %1053 = vdwg.mxu0
        %v1054 = vadd.f32 %v981, %v1051
        %v1055 = vxor.u32 %v1054, 2147483648
        %v1056 = vmul.f32 %v1055, 1.442695
        %v1057 = vpow.pop %v1056
        %v1058 = vadd.f32 %v1057, 1.0
        %v1059 = vrcp.pop %v1058
        %v1060 = vmul.f32 1.0, %v1059
        %v1061 = vtanh.pop %v1054
        %v1062 = vmul.f32 %v1060, %v969
        %1064 = vrot.lane.b32.xlu0 %v1061, 64
        %v1065 = vpop.permute.xlu0 %1064
        %v1067 = vmul.f32 %v1060, %v1065
        %1069 = vrot.lane.b32.xlu0 %v1067, 32
        %v1070 = vpop.permute.xlu0 %1069
        %v1072 = vadd.f32 %v1062, %v1070
        %v1073 = vtanh.pop %v1072
        %1075 = vrot.lane.b32.xlu0 %v1073, 64
        %v1076 = vpop.permute.xlu0 %1075
        %v1078 = vmul.f32 %v1060, %v1076
        %1080 = vrot.lane.b32.xlu0 %v1078, 32
        %v1081 = vpop.permute.xlu0 %1080
        %1083 = vst.msk [vmem:[#allocation3 + $0x4] sm:$0x1] %vm670, %v1081
        %v1084 = vld [vmem:[#allocation2 + $0x5] sm:$0x1]
        %v1085 = vsel %vm488, %v1081, 0
        %1087 = vmatprep.subr.mxu0 0.0
        %1088 = vmatpush1.msra.mxu0 %v563
        %1089 = vmatprep.subr.mxu0 0.0
        %1090 = vmatpush1.msra.mxu0 %v564
        %1091 = vmatprep.subr.mxu0 0.0
        %1092 = vmatpush1.msra.mxu0 %v565
        %1093 = vmatprep.subr.mxu0 0.0
        %1094 = vmatpush1.msra.mxu0 %v566
        %1095 = vmatprep.subr.mxu0 0.0
        %1096 = vmatpush1.msra.mxu0 0.0
        %1097 = vmatprep.subr.mxu0 0.0
        %1098 = vmatpush1.msra.mxu0 0.0
        %1099 = vmatprep.subr.mxu0 0.0
        %1100 = vmatpush1.msra.mxu0 0.0
        %1101 = vmatprep.subr.mxu0 0.0
        %1102 = vmatpush1.msra.mxu0 0.0
        %1103 = vmatprep.subr.mxu0 0.0
        %1104 = vmatpush1.msra.mxu0 0.0
        %1105 = vmatprep.subr.mxu0 0.0
        %1106 = vmatpush1.msra.mxu0 0.0
        %1107 = vmatprep.subr.mxu0 0.0
        %1108 = vmatpush1.msra.mxu0 0.0
        %1109 = vmatprep.subr.mxu0 0.0
        %1110 = vmatpush1.msra.mxu0 0.0
        %1111 = vmatprep.subr.mxu0 0.0
        %1112 = vmatpush1.msra.mxu0 0.0
        %1113 = vmatprep.subr.mxu0 0.0
        %1114 = vmatpush1.msra.mxu0 0.0
        %1115 = vmatprep.subr.mxu0 0.0
        %1116 = vmatpush1.msra.mxu0 0.0
        %1117 = vmatprep.subr.mxu0 0.0
        %1118 = vmatpush1.msra.mxu0 0.0
        %1119 = vmatprep.subr.mxu0 0.0
        %1120 = vmatpush1.msra.mxu0 0.0
        %1121 = vmatprep.subr.mxu0 0.0
        %1122 = vmatpush1.msra.mxu0 0.0
        %1123 = vmatprep.subr.mxu0 0.0
        %1124 = vmatpush1.msra.mxu0 0.0
        %1125 = vmatprep.subr.mxu0 0.0
        %1126 = vmatpush1.msra.mxu0 0.0
        %1127 = vmatprep.subr.mxu0 0.0
        %1128 = vmatpush1.msra.mxu0 0.0
        %1129 = vmatprep.subr.mxu0 0.0
        %1130 = vmatpush1.msra.mxu0 0.0
        %1131 = vmatprep.subr.mxu0 0.0
        %1132 = vmatpush1.msra.mxu0 0.0
        %1133 = vmatprep.subr.mxu0 0.0
        %1134 = vmatpush1.msra.mxu0 0.0
        %1135 = vmatprep.subr.mxu0 0.0
        %1136 = vmatpush1.msra.mxu0 0.0
        %1137 = vmatprep.subr.mxu0 0.0
        %1138 = vmatpush1.msra.mxu0 0.0
        %1139 = vmatprep.subr.mxu0 0.0
        %1140 = vmatpush1.msra.mxu0 0.0
        %1141 = vmatprep.subr.mxu0 0.0
        %1142 = vmatpush1.msra.mxu0 0.0
        %1143 = vmatprep.subr.mxu0 0.0
        %1144 = vmatpush1.msra.mxu0 0.0
        %1145 = vmatprep.subr.mxu0 0.0
        %1146 = vmatpush1.msra.mxu0 0.0
        %1147 = vmatprep.subr.mxu0 0.0
        %1148 = vmatpush1.msra.mxu0 0.0
        %1149 = vmatprep.subr.mxu0 0.0
        %1150 = vmatpush1.msra.mxu0 0.0
        %1151 = vmatprep.mubr.f32.mxu0 0.0
        %1152 = vmatmul.mubr.f32.gmra.mrb[0].mxu0 %v1085
        %v1153 = vpop.f32.mrb[0].mxu0
        %v1154 = vadd.f32 0.0, %v1153
        %v1155 = vpop.f32.mrb[0].mxu0
        %1156 = vdwg.mxu0
        %v1157 = vadd.f32 %v1084, %v1154
        %v1158 = vxor.u32 %v1157, 2147483648
        %v1159 = vmul.f32 %v1158, 1.442695
        %v1160 = vpow.pop %v1159
        %v1161 = vadd.f32 %v1160, 1.0
        %v1162 = vrcp.pop %v1161
        %v1163 = vmul.f32 1.0, %v1162
        %v1164 = vtanh.pop %v1157
        %v1165 = vmul.f32 %v1163, %v1072
        %1167 = vrot.lane.b32.xlu0 %v1164, 64
        %v1168 = vpop.permute.xlu0 %1167
        %v1170 = vmul.f32 %v1163, %v1168
        %1172 = vrot.lane.b32.xlu0 %v1170, 32
        %v1173 = vpop.permute.xlu0 %1172
        %v1175 = vadd.f32 %v1165, %v1173
        %v1176 = vtanh.pop %v1175
        %1178 = vrot.lane.b32.xlu0 %v1176, 64
        %v1179 = vpop.permute.xlu0 %1178
        %v1181 = vmul.f32 %v1163, %v1179
        %1183 = vrot.lane.b32.xlu0 %v1181, 32
        %v1184 = vpop.permute.xlu0 %1183
        %1186 = vst.msk [vmem:[#allocation3 + $0x5] sm:$0x1] %vm670, %v1184
        %v1187 = vld [vmem:[#allocation2 + $0x6] sm:$0x1]
        %v1188 = vsel %vm488, %v1184, 0
        %1190 = vmatprep.subr.mxu0 0.0
        %1191 = vmatpush1.msra.mxu0 %v563
        %1192 = vmatprep.subr.mxu0 0.0
        %1193 = vmatpush1.msra.mxu0 %v564
        %1194 = vmatprep.subr.mxu0 0.0
        %1195 = vmatpush1.msra.mxu0 %v565
        %1196 = vmatprep.subr.mxu0 0.0
        %1197 = vmatpush1.msra.mxu0 %v566
        %1198 = vmatprep.subr.mxu0 0.0
        %1199 = vmatpush1.msra.mxu0 0.0
        %1200 = vmatprep.subr.mxu0 0.0
        %1201 = vmatpush1.msra.mxu0 0.0
        %1202 = vmatprep.subr.mxu0 0.0
        %1203 = vmatpush1.msra.mxu0 0.0
        %1204 = vmatprep.subr.mxu0 0.0
        %1205 = vmatpush1.msra.mxu0 0.0
        %1206 = vmatprep.subr.mxu0 0.0
        %1207 = vmatpush1.msra.mxu0 0.0
        %1208 = vmatprep.subr.mxu0 0.0
        %1209 = vmatpush1.msra.mxu0 0.0
        %1210 = vmatprep.subr.mxu0 0.0
        %1211 = vmatpush1.msra.mxu0 0.0
        %1212 = vmatprep.subr.mxu0 0.0
        %1213 = vmatpush1.msra.mxu0 0.0
        %1214 = vmatprep.subr.mxu0 0.0
        %1215 = vmatpush1.msra.mxu0 0.0
        %1216 = vmatprep.subr.mxu0 0.0
        %1217 = vmatpush1.msra.mxu0 0.0
        %1218 = vmatprep.subr.mxu0 0.0
        %1219 = vmatpush1.msra.mxu0 0.0
        %1220 = vmatprep.subr.mxu0 0.0
        %1221 = vmatpush1.msra.mxu0 0.0
        %1222 = vmatprep.subr.mxu0 0.0
        %1223 = vmatpush1.msra.mxu0 0.0
        %1224 = vmatprep.subr.mxu0 0.0
        %1225 = vmatpush1.msra.mxu0 0.0
        %1226 = vmatprep.subr.mxu0 0.0
        %1227 = vmatpush1.msra.mxu0 0.0
        %1228 = vmatprep.subr.mxu0 0.0
        %1229 = vmatpush1.msra.mxu0 0.0
        %1230 = vmatprep.subr.mxu0 0.0
        %1231 = vmatpush1.msra.mxu0 0.0
        %1232 = vmatprep.subr.mxu0 0.0
        %1233 = vmatpush1.msra.mxu0 0.0
        %1234 = vmatprep.subr.mxu0 0.0
        %1235 = vmatpush1.msra.mxu0 0.0
        %1236 = vmatprep.subr.mxu0 0.0
        %1237 = vmatpush1.msra.mxu0 0.0
        %1238 = vmatprep.subr.mxu0 0.0
        %1239 = vmatpush1.msra.mxu0 0.0
        %1240 = vmatprep.subr.mxu0 0.0
        %1241 = vmatpush1.msra.mxu0 0.0
        %1242 = vmatprep.subr.mxu0 0.0
        %1243 = vmatpush1.msra.mxu0 0.0
        %1244 = vmatprep.subr.mxu0 0.0
        %1245 = vmatpush1.msra.mxu0 0.0
        %1246 = vmatprep.subr.mxu0 0.0
        %1247 = vmatpush1.msra.mxu0 0.0
        %1248 = vmatprep.subr.mxu0 0.0
        %1249 = vmatpush1.msra.mxu0 0.0
        %1250 = vmatprep.subr.mxu0 0.0
        %1251 = vmatpush1.msra.mxu0 0.0
        %1252 = vmatprep.subr.mxu0 0.0
        %1253 = vmatpush1.msra.mxu0 0.0
        %1254 = vmatprep.mubr.f32.mxu0 0.0
        %1255 = vmatmul.mubr.f32.gmra.mrb[0].mxu0 %v1188
        %v1256 = vpop.f32.mrb[0].mxu0
        %v1257 = vadd.f32 0.0, %v1256
        %v1258 = vpop.f32.mrb[0].mxu0
        %1259 = vdwg.mxu0
        %v1260 = vadd.f32 %v1187, %v1257
        %v1261 = vxor.u32 %v1260, 2147483648
        %v1262 = vmul.f32 %v1261, 1.442695
        %v1263 = vpow.pop %v1262
        %v1264 = vadd.f32 %v1263, 1.0
        %v1265 = vrcp.pop %v1264
        %v1266 = vmul.f32 1.0, %v1265
        %v1267 = vtanh.pop %v1260
        %v1268 = vmul.f32 %v1266, %v1175
        %1270 = vrot.lane.b32.xlu0 %v1267, 64
        %v1271 = vpop.permute.xlu0 %1270
        %v1273 = vmul.f32 %v1266, %v1271
        %1275 = vrot.lane.b32.xlu0 %v1273, 32
        %v1276 = vpop.permute.xlu0 %1275
        %v1278 = vadd.f32 %v1268, %v1276
        %v1279 = vtanh.pop %v1278
        %1281 = vrot.lane.b32.xlu0 %v1279, 64
        %v1282 = vpop.permute.xlu0 %1281
        %v1284 = vmul.f32 %v1266, %v1282
        %1286 = vrot.lane.b32.xlu0 %v1284, 32
        %v1287 = vpop.permute.xlu0 %1286
        %1289 = vst.msk [vmem:[#allocation3 + $0x6] sm:$0x1] %vm670, %v1287
        %v1290 = vld [vmem:[#allocation2 + $0x7] sm:$0x1]
        %v1291 = vsel %vm488, %v1287, 0
        %1293 = vmatprep.subr.mxu0 0.0
        %1294 = vmatpush1.msra.mxu0 %v563
        %1295 = vmatprep.subr.mxu0 0.0
        %1296 = vmatpush1.msra.mxu0 %v564
        %1297 = vmatprep.subr.mxu0 0.0
        %1298 = vmatpush1.msra.mxu0 %v565
        %1299 = vmatprep.subr.mxu0 0.0
        %1300 = vmatpush1.msra.mxu0 %v566
        %1301 = vmatprep.subr.mxu0 0.0
        %1302 = vmatpush1.msra.mxu0 0.0
        %1303 = vmatprep.subr.mxu0 0.0
        %1304 = vmatpush1.msra.mxu0 0.0
        %1305 = vmatprep.subr.mxu0 0.0
        %1306 = vmatpush1.msra.mxu0 0.0
        %1307 = vmatprep.subr.mxu0 0.0
        %1308 = vmatpush1.msra.mxu0 0.0
        %1309 = vmatprep.subr.mxu0 0.0
        %1310 = vmatpush1.msra.mxu0 0.0
        %1311 = vmatprep.subr.mxu0 0.0
        %1312 = vmatpush1.msra.mxu0 0.0
        %1313 = vmatprep.subr.mxu0 0.0
        %1314 = vmatpush1.msra.mxu0 0.0
        %1315 = vmatprep.subr.mxu0 0.0
        %1316 = vmatpush1.msra.mxu0 0.0
        %1317 = vmatprep.subr.mxu0 0.0
        %1318 = vmatpush1.msra.mxu0 0.0
        %1319 = vmatprep.subr.mxu0 0.0
        %1320 = vmatpush1.msra.mxu0 0.0
        %1321 = vmatprep.subr.mxu0 0.0
        %1322 = vmatpush1.msra.mxu0 0.0
        %1323 = vmatprep.subr.mxu0 0.0
        %1324 = vmatpush1.msra.mxu0 0.0
        %1325 = vmatprep.subr.mxu0 0.0
        %1326 = vmatpush1.msra.mxu0 0.0
        %1327 = vmatprep.subr.mxu0 0.0
        %1328 = vmatpush1.msra.mxu0 0.0
        %1329 = vmatprep.subr.mxu0 0.0
        %1330 = vmatpush1.msra.mxu0 0.0
        %1331 = vmatprep.subr.mxu0 0.0
        %1332 = vmatpush1.msra.mxu0 0.0
        %1333 = vmatprep.subr.mxu0 0.0
        %1334 = vmatpush1.msra.mxu0 0.0
        %1335 = vmatprep.subr.mxu0 0.0
        %1336 = vmatpush1.msra.mxu0 0.0
        %1337 = vmatprep.subr.mxu0 0.0
        %1338 = vmatpush1.msra.mxu0 0.0
        %1339 = vmatprep.subr.mxu0 0.0
        %1340 = vmatpush1.msra.mxu0 0.0
        %1341 = vmatprep.subr.mxu0 0.0
        %1342 = vmatpush1.msra.mxu0 0.0
        %1343 = vmatprep.subr.mxu0 0.0
        %1344 = vmatpush1.msra.mxu0 0.0
        %1345 = vmatprep.subr.mxu0 0.0
        %1346 = vmatpush1.msra.mxu0 0.0
        %1347 = vmatprep.subr.mxu0 0.0
        %1348 = vmatpush1.msra.mxu0 0.0
        %1349 = vmatprep.subr.mxu0 0.0
        %1350 = vmatpush1.msra.mxu0 0.0
        %1351 = vmatprep.subr.mxu0 0.0
        %1352 = vmatpush1.msra.mxu0 0.0
        %1353 = vmatprep.subr.mxu0 0.0
        %1354 = vmatpush1.msra.mxu0 0.0
        %1355 = vmatprep.subr.mxu0 0.0
        %1356 = vmatpush1.msra.mxu0 0.0
        %1357 = vmatprep.mubr.f32.mxu0 0.0
        %1358 = vmatmul.mubr.f32.gmra.mrb[0].mxu0 %v1291
        %v1359 = vpop.f32.mrb[0].mxu0
        %v1360 = vadd.f32 0.0, %v1359
        %v1361 = vpop.f32.mrb[0].mxu0
        %1362 = vdwg.mxu0
        %v1363 = vadd.f32 %v1290, %v1360
        %v1364 = vxor.u32 %v1363, 2147483648
        %v1365 = vmul.f32 %v1364, 1.442695
        %v1366 = vpow.pop %v1365
        %v1367 = vadd.f32 %v1366, 1.0
        %v1368 = vrcp.pop %v1367
        %v1369 = vmul.f32 1.0, %v1368
        %v1370 = vtanh.pop %v1363
        %v1371 = vmul.f32 %v1369, %v1278
        %1373 = vrot.lane.b32.xlu0 %v1370, 64
        %v1374 = vpop.permute.xlu0 %1373
        %v1376 = vmul.f32 %v1369, %v1374
        %1378 = vrot.lane.b32.xlu0 %v1376, 32
        %v1379 = vpop.permute.xlu0 %1378
        %v1381 = vadd.f32 %v1371, %v1379
        %v1382 = vtanh.pop %v1381
        %1384 = vrot.lane.b32.xlu0 %v1382, 64
        %v1385 = vpop.permute.xlu0 %1384
        %v1387 = vmul.f32 %v1369, %v1385
        %1389 = vrot.lane.b32.xlu0 %v1387, 32
        %v1390 = vpop.permute.xlu0 %1389
        %1392 = vst.msk [vmem:[#allocation3 + $0x7] sm:$0x1] %vm670, %v1390
        %v1393 = vld [vmem:[#allocation3] sm:$0xff]
        %v1394 = vld [vmem:[%s404] sm:$0xff]
        %v1395 = vld [vmem:[%s404 + $0x8] sm:$0xff]
        %v1396 = vld [vmem:[%s404 + $0x10] sm:$0xff]
        %v1397 = vld [vmem:[%s404 + $0x18] sm:$0xff]
        %v1398 = vld [vmem:[%s475] sm:$0x1]
        %v1400 = vlaneseq
        %v1401 = vshrl.u32 %v1400, 7
        %v1402 = vsub.s32 0, %v1401
        %v1403 = vrot.slane %v1398, %v1402
        %v1406 = vsel %vm488, %v1393, 0
        %1408 = vmatprep.subr.mxu0 0.0
        %1409 = vmatpush1.msra.mxu0 %v1394
        %1410 = vmatprep.subr.mxu0 0.0
        %1411 = vmatpush1.msra.mxu0 %v1395
        %1412 = vmatprep.subr.mxu0 0.0
        %1413 = vmatpush1.msra.mxu0 %v1396
        %1414 = vmatprep.subr.mxu0 0.0
        %1415 = vmatpush1.msra.mxu0 %v1397
        %1416 = vmatprep.subr.mxu0 0.0
        %1417 = vmatpush1.msra.mxu0 0.0
        %1418 = vmatprep.subr.mxu0 0.0
        %1419 = vmatpush1.msra.mxu0 0.0
        %1420 = vmatprep.subr.mxu0 0.0
        %1421 = vmatpush1.msra.mxu0 0.0
        %1422 = vmatprep.subr.mxu0 0.0
        %1423 = vmatpush1.msra.mxu0 0.0
        %1424 = vmatprep.subr.mxu0 0.0
        %1425 = vmatpush1.msra.mxu0 0.0
        %1426 = vmatprep.subr.mxu0 0.0
        %1427 = vmatpush1.msra.mxu0 0.0
        %1428 = vmatprep.subr.mxu0 0.0
        %1429 = vmatpush1.msra.mxu0 0.0
        %1430 = vmatprep.subr.mxu0 0.0
        %1431 = vmatpush1.msra.mxu0 0.0
        %1432 = vmatprep.subr.mxu0 0.0
        %1433 = vmatpush1.msra.mxu0 0.0
        %1434 = vmatprep.subr.mxu0 0.0
        %1435 = vmatpush1.msra.mxu0 0.0
        %1436 = vmatprep.subr.mxu0 0.0
        %1437 = vmatpush1.msra.mxu0 0.0
        %1438 = vmatprep.subr.mxu0 0.0
        %1439 = vmatpush1.msra.mxu0 0.0
        %1440 = vmatprep.subr.mxu0 0.0
        %1441 = vmatpush1.msra.mxu0 0.0
        %1442 = vmatprep.subr.mxu0 0.0
        %1443 = vmatpush1.msra.mxu0 0.0
        %1444 = vmatprep.subr.mxu0 0.0
        %1445 = vmatpush1.msra.mxu0 0.0
        %1446 = vmatprep.subr.mxu0 0.0
        %1447 = vmatpush1.msra.mxu0 0.0
        %1448 = vmatprep.subr.mxu0 0.0
        %1449 = vmatpush1.msra.mxu0 0.0
        %1450 = vmatprep.subr.mxu0 0.0
        %1451 = vmatpush1.msra.mxu0 0.0
        %1452 = vmatprep.subr.mxu0 0.0
        %1453 = vmatpush1.msra.mxu0 0.0
        %1454 = vmatprep.subr.mxu0 0.0
        %1455 = vmatpush1.msra.mxu0 0.0
        %1456 = vmatprep.subr.mxu0 0.0
        %1457 = vmatpush1.msra.mxu0 0.0
        %1458 = vmatprep.subr.mxu0 0.0
        %1459 = vmatpush1.msra.mxu0 0.0
        %1460 = vmatprep.subr.mxu0 0.0
        %1461 = vmatpush1.msra.mxu0 0.0
        %1462 = vmatprep.subr.mxu0 0.0
        %1463 = vmatpush1.msra.mxu0 0.0
        %1464 = vmatprep.subr.mxu0 0.0
        %1465 = vmatpush1.msra.mxu0 0.0
        %1466 = vmatprep.subr.mxu0 0.0
        %1467 = vmatpush1.msra.mxu0 0.0
        %1468 = vmatprep.subr.mxu0 0.0
        %1469 = vmatpush1.msra.mxu0 0.0
        %1470 = vmatprep.subr.mxu0 0.0
        %1471 = vmatpush1.msra.mxu0 0.0
        %1472 = vmatprep.mubr.f32.mxu0 0.0
        %1473 = vmatmul.mubr.f32.gmra.mrb[0].mxu0 %v1406
        %v1474 = vpop.f32.mrb[0].mxu0
        %v1475 = vadd.f32 %v1403, %v1474
        %v1476 = vpop.f32.mrb[0].mxu0
        %1477 = vdwg.mxu0
        %1478 = vst [vmem:[#allocation2] sm:$0xff] %v1475
        %v1479 = vld [vmem:[%s413] sm:$0xff]
        %v1480 = vld [vmem:[%s413 + $0x8] sm:$0xff]
        %v1481 = vld [vmem:[%s413 + $0x10] sm:$0xff]
        %v1482 = vld [vmem:[%s413 + $0x18] sm:$0xff]
        %v1483 = vld [vmem:[#allocation2] sm:$0x1]
        %1484 = vmatprep.subr.mxu0 0.0
        %1485 = vmatpush1.msra.mxu0 %v1479
        %1486 = vmatprep.subr.mxu0 0.0
        %1487 = vmatpush1.msra.mxu0 %v1480
        %1488 = vmatprep.subr.mxu0 0.0
        %1489 = vmatpush1.msra.mxu0 %v1481
        %1490 = vmatprep.subr.mxu0 0.0
        %1491 = vmatpush1.msra.mxu0 %v1482
        %1492 = vmatprep.subr.mxu0 0.0
        %1493 = vmatpush1.msra.mxu0 0.0
        %1494 = vmatprep.subr.mxu0 0.0
        %1495 = vmatpush1.msra.mxu0 0.0
        %1496 = vmatprep.subr.mxu0 0.0
        %1497 = vmatpush1.msra.mxu0 0.0
        %1498 = vmatprep.subr.mxu0 0.0
        %1499 = vmatpush1.msra.mxu0 0.0
        %1500 = vmatprep.subr.mxu0 0.0
        %1501 = vmatpush1.msra.mxu0 0.0
        %1502 = vmatprep.subr.mxu0 0.0
        %1503 = vmatpush1.msra.mxu0 0.0
        %1504 = vmatprep.subr.mxu0 0.0
        %1505 = vmatpush1.msra.mxu0 0.0
        %1506 = vmatprep.subr.mxu0 0.0
        %1507 = vmatpush1.msra.mxu0 0.0
        %1508 = vmatprep.subr.mxu0 0.0
        %1509 = vmatpush1.msra.mxu0 0.0
        %1510 = vmatprep.subr.mxu0 0.0
        %1511 = vmatpush1.msra.mxu0 0.0
        %1512 = vmatprep.subr.mxu0 0.0
        %1513 = vmatpush1.msra.mxu0 0.0
        %1514 = vmatprep.subr.mxu0 0.0
        %1515 = vmatpush1.msra.mxu0 0.0
        %1516 = vmatprep.subr.mxu0 0.0
        %1517 = vmatpush1.msra.mxu0 0.0
        %1518 = vmatprep.subr.mxu0 0.0
        %1519 = vmatpush1.msra.mxu0 0.0
        %1520 = vmatprep.subr.mxu0 0.0
        %1521 = vmatpush1.msra.mxu0 0.0
        %1522 = vmatprep.subr.mxu0 0.0
        %1523 = vmatpush1.msra.mxu0 0.0
        %1524 = vmatprep.subr.mxu0 0.0
        %1525 = vmatpush1.msra.mxu0 0.0
        %1526 = vmatprep.subr.mxu0 0.0
        %1527 = vmatpush1.msra.mxu0 0.0
        %1528 = vmatprep.subr.mxu0 0.0
        %1529 = vmatpush1.msra.mxu0 0.0
        %1530 = vmatprep.subr.mxu0 0.0
        %1531 = vmatpush1.msra.mxu0 0.0
        %1532 = vmatprep.subr.mxu0 0.0
        %1533 = vmatpush1.msra.mxu0 0.0
        %1534 = vmatprep.subr.mxu0 0.0
        %1535 = vmatpush1.msra.mxu0 0.0
        %1536 = vmatprep.subr.mxu0 0.0
        %1537 = vmatpush1.msra.mxu0 0.0
        %1538 = vmatprep.subr.mxu0 0.0
        %1539 = vmatpush1.msra.mxu0 0.0
        %1540 = vmatprep.subr.mxu0 0.0
        %1541 = vmatpush1.msra.mxu0 0.0
        %1542 = vmatprep.subr.mxu0 0.0
        %1543 = vmatpush1.msra.mxu0 0.0
        %1544 = vmatprep.subr.mxu0 0.0
        %1545 = vmatpush1.msra.mxu0 0.0
        %1546 = vmatprep.subr.mxu0 0.0
        %1547 = vmatpush1.msra.mxu0 0.0
        %1548 = vmatprep.mubr.f32.mxu0 0.0
        %1549 = vmatmul.mubr.f32.gmra.mrb[0].mxu0 %v569
        %v1550 = vpop.f32.mrb[0].mxu0
        %v1551 = vadd.f32 0.0, %v1550
        %v1552 = vpop.f32.mrb[0].mxu0
        %1553 = vdwg.mxu0
        %v1554 = vadd.f32 %v1483, %v1551
        %v1555 = vxor.u32 %v1554, 2147483648
        %v1556 = vmul.f32 %v1555, 1.442695
        %v1557 = vpow.pop %v1556
        %v1558 = vadd.f32 %v1557, 1.0
        %v1559 = vrcp.pop %v1558
        %v1560 = vmul.f32 1.0, %v1559
        %v1561 = vtanh.pop %v1554
        %v1562 = vmul.f32 %v1560, 0.0
        %1564 = vrot.lane.b32.xlu0 %v1561, 64
        %v1565 = vpop.permute.xlu0 %1564
        %v1567 = vmul.f32 %v1560, %v1565
        %1569 = vrot.lane.b32.xlu0 %v1567, 32
        %v1570 = vpop.permute.xlu0 %1569
        %v1572 = vadd.f32 %v1562, %v1570
        %v1573 = vtanh.pop %v1572
        %1575 = vrot.lane.b32.xlu0 %v1573, 64
        %v1576 = vpop.permute.xlu0 %1575
        %v1578 = vmul.f32 %v1560, %v1576
        %1580 = vrot.lane.b32.xlu0 %v1578, 32
        %v1581 = vpop.permute.xlu0 %1580
        %1583 = vst.msk [vmem:[#allocation4] sm:$0x1] %vm670, %v1581
        %v1584 = vld [vmem:[#allocation2 + $0x1] sm:$0x1]
        %v1585 = vsel %vm488, %v1581, 0
        %1587 = vmatprep.subr.mxu0 0.0
        %1588 = vmatpush1.msra.mxu0 %v1479
        %1589 = vmatprep.subr.mxu0 0.0
        %1590 = vmatpush1.msra.mxu0 %v1480
        %1591 = vmatprep.subr.mxu0 0.0
        %1592 = vmatpush1.msra.mxu0 %v1481
        %1593 = vmatprep.subr.mxu0 0.0
        %1594 = vmatpush1.msra.mxu0 %v1482
        %1595 = vmatprep.subr.mxu0 0.0
        %1596 = vmatpush1.msra.mxu0 0.0
        %1597 = vmatprep.subr.mxu0 0.0
        %1598 = vmatpush1.msra.mxu0 0.0
        %1599 = vmatprep.subr.mxu0 0.0
        %1600 = vmatpush1.msra.mxu0 0.0
        %1601 = vmatprep.subr.mxu0 0.0
        %1602 = vmatpush1.msra.mxu0 0.0
        %1603 = vmatprep.subr.mxu0 0.0
        %1604 = vmatpush1.msra.mxu0 0.0
        %1605 = vmatprep.subr.mxu0 0.0
        %1606 = vmatpush1.msra.mxu0 0.0
        %1607 = vmatprep.subr.mxu0 0.0
        %1608 = vmatpush1.msra.mxu0 0.0
        %1609 = vmatprep.subr.mxu0 0.0
        %1610 = vmatpush1.msra.mxu0 0.0
        %1611 = vmatprep.subr.mxu0 0.0
        %1612 = vmatpush1.msra.mxu0 0.0
        %1613 = vmatprep.subr.mxu0 0.0
        %1614 = vmatpush1.msra.mxu0 0.0
        %1615 = vmatprep.subr.mxu0 0.0
        %1616 = vmatpush1.msra.mxu0 0.0
        %1617 = vmatprep.subr.mxu0 0.0
        %1618 = vmatpush1.msra.mxu0 0.0
        %1619 = vmatprep.subr.mxu0 0.0
        %1620 = vmatpush1.msra.mxu0 0.0
        %1621 = vmatprep.subr.mxu0 0.0
        %1622 = vmatpush1.msra.mxu0 0.0
        %1623 = vmatprep.subr.mxu0 0.0
        %1624 = vmatpush1.msra.mxu0 0.0
        %1625 = vmatprep.subr.mxu0 0.0
        %1626 = vmatpush1.msra.mxu0 0.0
        %1627 = vmatprep.subr.mxu0 0.0
        %1628 = vmatpush1.msra.mxu0 0.0
        %1629 = vmatprep.subr.mxu0 0.0
        %1630 = vmatpush1.msra.mxu0 0.0
        %1631 = vmatprep.subr.mxu0 0.0
        %1632 = vmatpush1.msra.mxu0 0.0
        %1633 = vmatprep.subr.mxu0 0.0
        %1634 = vmatpush1.msra.mxu0 0.0
        %1635 = vmatprep.subr.mxu0 0.0
        %1636 = vmatpush1.msra.mxu0 0.0
        %1637 = vmatprep.subr.mxu0 0.0
        %1638 = vmatpush1.msra.mxu0 0.0
        %1639 = vmatprep.subr.mxu0 0.0
        %1640 = vmatpush1.msra.mxu0 0.0
        %1641 = vmatprep.subr.mxu0 0.0
        %1642 = vmatpush1.msra.mxu0 0.0
        %1643 = vmatprep.subr.mxu0 0.0
        %1644 = vmatpush1.msra.mxu0 0.0
        %1645 = vmatprep.subr.mxu0 0.0
        %1646 = vmatpush1.msra.mxu0 0.0
        %1647 = vmatprep.subr.mxu0 0.0
        %1648 = vmatpush1.msra.mxu0 0.0
        %1649 = vmatprep.subr.mxu0 0.0
        %1650 = vmatpush1.msra.mxu0 0.0
        %1651 = vmatprep.mubr.f32.mxu0 0.0
        %1652 = vmatmul.mubr.f32.gmra.mrb[0].mxu0 %v1585
        %v1653 = vpop.f32.mrb[0].mxu0
        %v1654 = vadd.f32 0.0, %v1653
        %v1655 = vpop.f32.mrb[0].mxu0
        %1656 = vdwg.mxu0
        %v1657 = vadd.f32 %v1584, %v1654
        %v1658 = vxor.u32 %v1657, 2147483648
        %v1659 = vmul.f32 %v1658, 1.442695
        %v1660 = vpow.pop %v1659
        %v1661 = vadd.f32 %v1660, 1.0
        %v1662 = vrcp.pop %v1661
        %v1663 = vmul.f32 1.0, %v1662
        %v1664 = vtanh.pop %v1657
        %v1665 = vmul.f32 %v1663, %v1572
        %1667 = vrot.lane.b32.xlu0 %v1664, 64
        %v1668 = vpop.permute.xlu0 %1667
        %v1670 = vmul.f32 %v1663, %v1668
        %1672 = vrot.lane.b32.xlu0 %v1670, 32
        %v1673 = vpop.permute.xlu0 %1672
        %v1675 = vadd.f32 %v1665, %v1673
        %v1676 = vtanh.pop %v1675
        %1678 = vrot.lane.b32.xlu0 %v1676, 64
        %v1679 = vpop.permute.xlu0 %1678
        %v1681 = vmul.f32 %v1663, %v1679
        %1683 = vrot.lane.b32.xlu0 %v1681, 32
        %v1684 = vpop.permute.xlu0 %1683
        %1686 = vst.msk [vmem:[#allocation4 + $0x1] sm:$0x1] %vm670, %v1684
        %v1687 = vld [vmem:[#allocation2 + $0x2] sm:$0x1]
        %v1688 = vsel %vm488, %v1684, 0
        %1690 = vmatprep.subr.mxu0 0.0
        %1691 = vmatpush1.msra.mxu0 %v1479
        %1692 = vmatprep.subr.mxu0 0.0
        %1693 = vmatpush1.msra.mxu0 %v1480
        %1694 = vmatprep.subr.mxu0 0.0
        %1695 = vmatpush1.msra.mxu0 %v1481
        %1696 = vmatprep.subr.mxu0 0.0
        %1697 = vmatpush1.msra.mxu0 %v1482
        %1698 = vmatprep.subr.mxu0 0.0
        %1699 = vmatpush1.msra.mxu0 0.0
        %1700 = vmatprep.subr.mxu0 0.0
        %1701 = vmatpush1.msra.mxu0 0.0
        %1702 = vmatprep.subr.mxu0 0.0
        %1703 = vmatpush1.msra.mxu0 0.0
        %1704 = vmatprep.subr.mxu0 0.0
        %1705 = vmatpush1.msra.mxu0 0.0
        %1706 = vmatprep.subr.mxu0 0.0
        %1707 = vmatpush1.msra.mxu0 0.0
        %1708 = vmatprep.subr.mxu0 0.0
        %1709 = vmatpush1.msra.mxu0 0.0
        %1710 = vmatprep.subr.mxu0 0.0
        %1711 = vmatpush1.msra.mxu0 0.0
        %1712 = vmatprep.subr.mxu0 0.0
        %1713 = vmatpush1.msra.mxu0 0.0
        %1714 = vmatprep.subr.mxu0 0.0
        %1715 = vmatpush1.msra.mxu0 0.0
        %1716 = vmatprep.subr.mxu0 0.0
        %1717 = vmatpush1.msra.mxu0 0.0
        %1718 = vmatprep.subr.mxu0 0.0
        %1719 = vmatpush1.msra.mxu0 0.0
        %1720 = vmatprep.subr.mxu0 0.0
        %1721 = vmatpush1.msra.mxu0 0.0
        %1722 = vmatprep.subr.mxu0 0.0
        %1723 = vmatpush1.msra.mxu0 0.0
        %1724 = vmatprep.subr.mxu0 0.0
        %1725 = vmatpush1.msra.mxu0 0.0
        %1726 = vmatprep.subr.mxu0 0.0
        %1727 = vmatpush1.msra.mxu0 0.0
        %1728 = vmatprep.subr.mxu0 0.0
        %1729 = vmatpush1.msra.mxu0 0.0
        %1730 = vmatprep.subr.mxu0 0.0
        %1731 = vmatpush1.msra.mxu0 0.0
        %1732 = vmatprep.subr.mxu0 0.0
        %1733 = vmatpush1.msra.mxu0 0.0
        %1734 = vmatprep.subr.mxu0 0.0
        %1735 = vmatpush1.msra.mxu0 0.0
        %1736 = vmatprep.subr.mxu0 0.0
        %1737 = vmatpush1.msra.mxu0 0.0
        %1738 = vmatprep.subr.mxu0 0.0
        %1739 = vmatpush1.msra.mxu0 0.0
        %1740 = vmatprep.subr.mxu0 0.0
        %1741 = vmatpush1.msra.mxu0 0.0
        %1742 = vmatprep.subr.mxu0 0.0
        %1743 = vmatpush1.msra.mxu0 0.0
        %1744 = vmatprep.subr.mxu0 0.0
        %1745 = vmatpush1.msra.mxu0 0.0
        %1746 = vmatprep.subr.mxu0 0.0
        %1747 = vmatpush1.msra.mxu0 0.0
        %1748 = vmatprep.subr.mxu0 0.0
        %1749 = vmatpush1.msra.mxu0 0.0
        %1750 = vmatprep.subr.mxu0 0.0
        %1751 = vmatpush1.msra.mxu0 0.0
        %1752 = vmatprep.subr.mxu0 0.0
        %1753 = vmatpush1.msra.mxu0 0.0
        %1754 = vmatprep.mubr.f32.mxu0 0.0
        %1755 = vmatmul.mubr.f32.gmra.mrb[0].mxu0 %v1688
        %v1756 = vpop.f32.mrb[0].mxu0
        %v1757 = vadd.f32 0.0, %v1756
        %v1758 = vpop.f32.mrb[0].mxu0
        %1759 = vdwg.mxu0
        %v1760 = vadd.f32 %v1687, %v1757
        %v1761 = vxor.u32 %v1760, 2147483648
        %v1762 = vmul.f32 %v1761, 1.442695
        %v1763 = vpow.pop %v1762
        %v1764 = vadd.f32 %v1763, 1.0
        %v1765 = vrcp.pop %v1764
        %v1766 = vmul.f32 1.0, %v1765
        %v1767 = vtanh.pop %v1760
        %v1768 = vmul.f32 %v1766, %v1675
        %1770 = vrot.lane.b32.xlu0 %v1767, 64
        %v1771 = vpop.permute.xlu0 %1770
        %v1773 = vmul.f32 %v1766, %v1771
        %1775 = vrot.lane.b32.xlu0 %v1773, 32
        %v1776 = vpop.permute.xlu0 %1775
        %v1778 = vadd.f32 %v1768, %v1776
        %v1779 = vtanh.pop %v1778
        %1781 = vrot.lane.b32.xlu0 %v1779, 64
        %v1782 = vpop.permute.xlu0 %1781
        %v1784 = vmul.f32 %v1766, %v1782
        %1786 = vrot.lane.b32.xlu0 %v1784, 32
        %v1787 = vpop.permute.xlu0 %1786
        %1789 = vst.msk [vmem:[#allocation4 + $0x2] sm:$0x1] %vm670, %v1787
        %v1790 = vld [vmem:[#allocation2 + $0x3] sm:$0x1]
        %v1791 = vsel %vm488, %v1787, 0
        %1793 = vmatprep.subr.mxu0 0.0
        %1794 = vmatpush1.msra.mxu0 %v1479
        %1795 = vmatprep.subr.mxu0 0.0
        %1796 = vmatpush1.msra.mxu0 %v1480
        %1797 = vmatprep.subr.mxu0 0.0
        %1798 = vmatpush1.msra.mxu0 %v1481
        %1799 = vmatprep.subr.mxu0 0.0
        %1800 = vmatpush1.msra.mxu0 %v1482
        %1801 = vmatprep.subr.mxu0 0.0
        %1802 = vmatpush1.msra.mxu0 0.0
        %1803 = vmatprep.subr.mxu0 0.0
        %1804 = vmatpush1.msra.mxu0 0.0
        %1805 = vmatprep.subr.mxu0 0.0
        %1806 = vmatpush1.msra.mxu0 0.0
        %1807 = vmatprep.subr.mxu0 0.0
        %1808 = vmatpush1.msra.mxu0 0.0
        %1809 = vmatprep.subr.mxu0 0.0
        %1810 = vmatpush1.msra.mxu0 0.0
        %1811 = vmatprep.subr.mxu0 0.0
        %1812 = vmatpush1.msra.mxu0 0.0
        %1813 = vmatprep.subr.mxu0 0.0
        %1814 = vmatpush1.msra.mxu0 0.0
        %1815 = vmatprep.subr.mxu0 0.0
        %1816 = vmatpush1.msra.mxu0 0.0
        %1817 = vmatprep.subr.mxu0 0.0
        %1818 = vmatpush1.msra.mxu0 0.0
        %1819 = vmatprep.subr.mxu0 0.0
        %1820 = vmatpush1.msra.mxu0 0.0
        %1821 = vmatprep.subr.mxu0 0.0
        %1822 = vmatpush1.msra.mxu0 0.0
        %1823 = vmatprep.subr.mxu0 0.0
        %1824 = vmatpush1.msra.mxu0 0.0
        %1825 = vmatprep.subr.mxu0 0.0
        %1826 = vmatpush1.msra.mxu0 0.0
        %1827 = vmatprep.subr.mxu0 0.0
        %1828 = vmatpush1.msra.mxu0 0.0
        %1829 = vmatprep.subr.mxu0 0.0
        %1830 = vmatpush1.msra.mxu0 0.0
        %1831 = vmatprep.subr.mxu0 0.0
        %1832 = vmatpush1.msra.mxu0 0.0
        %1833 = vmatprep.subr.mxu0 0.0
        %1834 = vmatpush1.msra.mxu0 0.0
        %1835 = vmatprep.subr.mxu0 0.0
        %1836 = vmatpush1.msra.mxu0 0.0
        %1837 = vmatprep.subr.mxu0 0.0
        %1838 = vmatpush1.msra.mxu0 0.0
        %1839 = vmatprep.subr.mxu0 0.0
        %1840 = vmatpush1.msra.mxu0 0.0
        %1841 = vmatprep.subr.mxu0 0.0
        %1842 = vmatpush1.msra.mxu0 0.0
        %1843 = vmatprep.subr.mxu0 0.0
        %1844 = vmatpush1.msra.mxu0 0.0
        %1845 = vmatprep.subr.mxu0 0.0
        %1846 = vmatpush1.msra.mxu0 0.0
        %1847 = vmatprep.subr.mxu0 0.0
        %1848 = vmatpush1.msra.mxu0 0.0
        %1849 = vmatprep.subr.mxu0 0.0
        %1850 = vmatpush1.msra.mxu0 0.0
        %1851 = vmatprep.subr.mxu0 0.0
        %1852 = vmatpush1.msra.mxu0 0.0
        %1853 = vmatprep.subr.mxu0 0.0
        %1854 = vmatpush1.msra.mxu0 0.0
        %1855 = vmatprep.subr.mxu0 0.0
        %1856 = vmatpush1.msra.mxu0 0.0
        %1857 = vmatprep.mubr.f32.mxu0 0.0
        %1858 = vmatmul.mubr.f32.gmra.mrb[0].mxu0 %v1791
        %v1859 = vpop.f32.mrb[0].mxu0
        %v1860 = vadd.f32 0.0, %v1859
        %v1861 = vpop.f32.mrb[0].mxu0
        %1862 = vdwg.mxu0
        %v1863 = vadd.f32 %v1790, %v1860
        %v1864 = vxor.u32 %v1863, 2147483648
        %v1865 = vmul.f32 %v1864, 1.442695
        %v1866 = vpow.pop %v1865
        %v1867 = vadd.f32 %v1866, 1.0
        %v1868 = vrcp.pop %v1867
        %v1869 = vmul.f32 1.0, %v1868
        %v1870 = vtanh.pop %v1863
        %v1871 = vmul.f32 %v1869, %v1778
        %1873 = vrot.lane.b32.xlu0 %v1870, 64
        %v1874 = vpop.permute.xlu0 %1873
        %v1876 = vmul.f32 %v1869, %v1874
        %1878 = vrot.lane.b32.xlu0 %v1876, 32
        %v1879 = vpop.permute.xlu0 %1878
        %v1881 = vadd.f32 %v1871, %v1879
        %v1882 = vtanh.pop %v1881
        %1884 = vrot.lane.b32.xlu0 %v1882, 64
        %v1885 = vpop.permute.xlu0 %1884
        %v1887 = vmul.f32 %v1869, %v1885
        %1889 = vrot.lane.b32.xlu0 %v1887, 32
        %v1890 = vpop.permute.xlu0 %1889
        %1892 = vst.msk [vmem:[#allocation4 + $0x3] sm:$0x1] %vm670, %v1890
        %v1893 = vld [vmem:[#allocation2 + $0x4] sm:$0x1]
        %v1894 = vsel %vm488, %v1890, 0
        %1896 = vmatprep.subr.mxu0 0.0
        %1897 = vmatpush1.msra.mxu0 %v1479
        %1898 = vmatprep.subr.mxu0 0.0
        %1899 = vmatpush1.msra.mxu0 %v1480
        %1900 = vmatprep.subr.mxu0 0.0
        %1901 = vmatpush1.msra.mxu0 %v1481
        %1902 = vmatprep.subr.mxu0 0.0
        %1903 = vmatpush1.msra.mxu0 %v1482
        %1904 = vmatprep.subr.mxu0 0.0
        %1905 = vmatpush1.msra.mxu0 0.0
        %1906 = vmatprep.subr.mxu0 0.0
        %1907 = vmatpush1.msra.mxu0 0.0
        %1908 = vmatprep.subr.mxu0 0.0
        %1909 = vmatpush1.msra.mxu0 0.0
        %1910 = vmatprep.subr.mxu0 0.0
        %1911 = vmatpush1.msra.mxu0 0.0
        %1912 = vmatprep.subr.mxu0 0.0
        %1913 = vmatpush1.msra.mxu0 0.0
        %1914 = vmatprep.subr.mxu0 0.0
        %1915 = vmatpush1.msra.mxu0 0.0
        %1916 = vmatprep.subr.mxu0 0.0
        %1917 = vmatpush1.msra.mxu0 0.0
        %1918 = vmatprep.subr.mxu0 0.0
        %1919 = vmatpush1.msra.mxu0 0.0
        %1920 = vmatprep.subr.mxu0 0.0
        %1921 = vmatpush1.msra.mxu0 0.0
        %1922 = vmatprep.subr.mxu0 0.0
        %1923 = vmatpush1.msra.mxu0 0.0
        %1924 = vmatprep.subr.mxu0 0.0
        %1925 = vmatpush1.msra.mxu0 0.0
        %1926 = vmatprep.subr.mxu0 0.0
        %1927 = vmatpush1.msra.mxu0 0.0
        %1928 = vmatprep.subr.mxu0 0.0
        %1929 = vmatpush1.msra.mxu0 0.0
        %1930 = vmatprep.subr.mxu0 0.0
        %1931 = vmatpush1.msra.mxu0 0.0
        %1932 = vmatprep.subr.mxu0 0.0
        %1933 = vmatpush1.msra.mxu0 0.0
        %1934 = vmatprep.subr.mxu0 0.0
        %1935 = vmatpush1.msra.mxu0 0.0
        %1936 = vmatprep.subr.mxu0 0.0
        %1937 = vmatpush1.msra.mxu0 0.0
        %1938 = vmatprep.subr.mxu0 0.0
        %1939 = vmatpush1.msra.mxu0 0.0
        %1940 = vmatprep.subr.mxu0 0.0
        %1941 = vmatpush1.msra.mxu0 0.0
        %1942 = vmatprep.subr.mxu0 0.0
        %1943 = vmatpush1.msra.mxu0 0.0
        %1944 = vmatprep.subr.mxu0 0.0
        %1945 = vmatpush1.msra.mxu0 0.0
        %1946 = vmatprep.subr.mxu0 0.0
        %1947 = vmatpush1.msra.mxu0 0.0
        %1948 = vmatprep.subr.mxu0 0.0
        %1949 = vmatpush1.msra.mxu0 0.0
        %1950 = vmatprep.subr.mxu0 0.0
        %1951 = vmatpush1.msra.mxu0 0.0
        %1952 = vmatprep.subr.mxu0 0.0
        %1953 = vmatpush1.msra.mxu0 0.0
        %1954 = vmatprep.subr.mxu0 0.0
        %1955 = vmatpush1.msra.mxu0 0.0
        %1956 = vmatprep.subr.mxu0 0.0
        %1957 = vmatpush1.msra.mxu0 0.0
        %1958 = vmatprep.subr.mxu0 0.0
        %1959 = vmatpush1.msra.mxu0 0.0
        %1960 = vmatprep.mubr.f32.mxu0 0.0
        %1961 = vmatmul.mubr.f32.gmra.mrb[0].mxu0 %v1894
        %v1962 = vpop.f32.mrb[0].mxu0
        %v1963 = vadd.f32 0.0, %v1962
        %v1964 = vpop.f32.mrb[0].mxu0
        %1965 = vdwg.mxu0
        %v1966 = vadd.f32 %v1893, %v1963
        %v1967 = vxor.u32 %v1966, 2147483648
        %v1968 = vmul.f32 %v1967, 1.442695
        %v1969 = vpow.pop %v1968
        %v1970 = vadd.f32 %v1969, 1.0
        %v1971 = vrcp.pop %v1970
        %v1972 = vmul.f32 1.0, %v1971
        %v1973 = vtanh.pop %v1966
        %v1974 = vmul.f32 %v1972, %v1881
        %1976 = vrot.lane.b32.xlu0 %v1973, 64
        %v1977 = vpop.permute.xlu0 %1976
        %v1979 = vmul.f32 %v1972, %v1977
        %1981 = vrot.lane.b32.xlu0 %v1979, 32
        %v1982 = vpop.permute.xlu0 %1981
        %v1984 = vadd.f32 %v1974, %v1982
        %v1985 = vtanh.pop %v1984
        %1987 = vrot.lane.b32.xlu0 %v1985, 64
        %v1988 = vpop.permute.xlu0 %1987
        %v1990 = vmul.f32 %v1972, %v1988
        %1992 = vrot.lane.b32.xlu0 %v1990, 32
        %v1993 = vpop.permute.xlu0 %1992
        %1995 = vst.msk [vmem:[#allocation4 + $0x4] sm:$0x1] %vm670, %v1993
        %v1996 = vld [vmem:[#allocation2 + $0x5] sm:$0x1]
        %v1997 = vsel %vm488, %v1993, 0
        %1999 = vmatprep.subr.mxu0 0.0
        %2000 = vmatpush1.msra.mxu0 %v1479
        %2001 = vmatprep.subr.mxu0 0.0
        %2002 = vmatpush1.msra.mxu0 %v1480
        %2003 = vmatprep.subr.mxu0 0.0
        %2004 = vmatpush1.msra.mxu0 %v1481
        %2005 = vmatprep.subr.mxu0 0.0
        %2006 = vmatpush1.msra.mxu0 %v1482
        %2007 = vmatprep.subr.mxu0 0.0
        %2008 = vmatpush1.msra.mxu0 0.0
        %2009 = vmatprep.subr.mxu0 0.0
        %2010 = vmatpush1.msra.mxu0 0.0
        %2011 = vmatprep.subr.mxu0 0.0
        %2012 = vmatpush1.msra.mxu0 0.0
        %2013 = vmatprep.subr.mxu0 0.0
        %2014 = vmatpush1.msra.mxu0 0.0
        %2015 = vmatprep.subr.mxu0 0.0
        %2016 = vmatpush1.msra.mxu0 0.0
        %2017 = vmatprep.subr.mxu0 0.0
        %2018 = vmatpush1.msra.mxu0 0.0
        %2019 = vmatprep.subr.mxu0 0.0
        %2020 = vmatpush1.msra.mxu0 0.0
        %2021 = vmatprep.subr.mxu0 0.0
        %2022 = vmatpush1.msra.mxu0 0.0
        %2023 = vmatprep.subr.mxu0 0.0
        %2024 = vmatpush1.msra.mxu0 0.0
        %2025 = vmatprep.subr.mxu0 0.0
        %2026 = vmatpush1.msra.mxu0 0.0
        %2027 = vmatprep.subr.mxu0 0.0
        %2028 = vmatpush1.msra.mxu0 0.0
        %2029 = vmatprep.subr.mxu0 0.0
        %2030 = vmatpush1.msra.mxu0 0.0
        %2031 = vmatprep.subr.mxu0 0.0
        %2032 = vmatpush1.msra.mxu0 0.0
        %2033 = vmatprep.subr.mxu0 0.0
        %2034 = vmatpush1.msra.mxu0 0.0
        %2035 = vmatprep.subr.mxu0 0.0
        %2036 = vmatpush1.msra.mxu0 0.0
        %2037 = vmatprep.subr.mxu0 0.0
        %2038 = vmatpush1.msra.mxu0 0.0
        %2039 = vmatprep.subr.mxu0 0.0
        %2040 = vmatpush1.msra.mxu0 0.0
        %2041 = vmatprep.subr.mxu0 0.0
        %2042 = vmatpush1.msra.mxu0 0.0
        %2043 = vmatprep.subr.mxu0 0.0
        %2044 = vmatpush1.msra.mxu0 0.0
        %2045 = vmatprep.subr.mxu0 0.0
        %2046 = vmatpush1.msra.mxu0 0.0
        %2047 = vmatprep.subr.mxu0 0.0
        %2048 = vmatpush1.msra.mxu0 0.0
        %2049 = vmatprep.subr.mxu0 0.0
        %2050 = vmatpush1.msra.mxu0 0.0
        %2051 = vmatprep.subr.mxu0 0.0
        %2052 = vmatpush1.msra.mxu0 0.0
        %2053 = vmatprep.subr.mxu0 0.0
        %2054 = vmatpush1.msra.mxu0 0.0
        %2055 = vmatprep.subr.mxu0 0.0
        %2056 = vmatpush1.msra.mxu0 0.0
        %2057 = vmatprep.subr.mxu0 0.0
        %2058 = vmatpush1.msra.mxu0 0.0
        %2059 = vmatprep.subr.mxu0 0.0
        %2060 = vmatpush1.msra.mxu0 0.0
        %2061 = vmatprep.subr.mxu0 0.0
        %2062 = vmatpush1.msra.mxu0 0.0
        %2063 = vmatprep.mubr.f32.mxu0 0.0
        %2064 = vmatmul.mubr.f32.gmra.mrb[0].mxu0 %v1997
        %v2065 = vpop.f32.mrb[0].mxu0
        %v2066 = vadd.f32 0.0, %v2065
        %v2067 = vpop.f32.mrb[0].mxu0
        %2068 = vdwg.mxu0
        %v2069 = vadd.f32 %v1996, %v2066
        %v2070 = vxor.u32 %v2069, 2147483648
        %v2071 = vmul.f32 %v2070, 1.442695
        %v2072 = vpow.pop %v2071
        %v2073 = vadd.f32 %v2072, 1.0
        %v2074 = vrcp.pop %v2073
        %v2075 = vmul.f32 1.0, %v2074
        %v2076 = vtanh.pop %v2069
        %v2077 = vmul.f32 %v2075, %v1984
        %2079 = vrot.lane.b32.xlu0 %v2076, 64
        %v2080 = vpop.permute.xlu0 %2079
        %v2082 = vmul.f32 %v2075, %v2080
        %2084 = vrot.lane.b32.xlu0 %v2082, 32
        %v2085 = vpop.permute.xlu0 %2084
        %v2087 = vadd.f32 %v2077, %v2085
        %v2088 = vtanh.pop %v2087
        %2090 = vrot.lane.b32.xlu0 %v2088, 64
        %v2091 = vpop.permute.xlu0 %2090
        %v2093 = vmul.f32 %v2075, %v2091
        %2095 = vrot.lane.b32.xlu0 %v2093, 32
        %v2096 = vpop.permute.xlu0 %2095
        %2098 = vst.msk [vmem:[#allocation4 + $0x5] sm:$0x1] %vm670, %v2096
        %v2099 = vld [vmem:[#allocation2 + $0x6] sm:$0x1]
        %v2100 = vsel %vm488, %v2096, 0
        %2102 = vmatprep.subr.mxu0 0.0
        %2103 = vmatpush1.msra.mxu0 %v1479
        %2104 = vmatprep.subr.mxu0 0.0
        %2105 = vmatpush1.msra.mxu0 %v1480
        %2106 = vmatprep.subr.mxu0 0.0
        %2107 = vmatpush1.msra.mxu0 %v1481
        %2108 = vmatprep.subr.mxu0 0.0
        %2109 = vmatpush1.msra.mxu0 %v1482
        %2110 = vmatprep.subr.mxu0 0.0
        %2111 = vmatpush1.msra.mxu0 0.0
        %2112 = vmatprep.subr.mxu0 0.0
        %2113 = vmatpush1.msra.mxu0 0.0
        %2114 = vmatprep.subr.mxu0 0.0
        %2115 = vmatpush1.msra.mxu0 0.0
        %2116 = vmatprep.subr.mxu0 0.0
        %2117 = vmatpush1.msra.mxu0 0.0
        %2118 = vmatprep.subr.mxu0 0.0
        %2119 = vmatpush1.msra.mxu0 0.0
        %2120 = vmatprep.subr.mxu0 0.0
        %2121 = vmatpush1.msra.mxu0 0.0
        %2122 = vmatprep.subr.mxu0 0.0
        %2123 = vmatpush1.msra.mxu0 0.0
        %2124 = vmatprep.subr.mxu0 0.0
        %2125 = vmatpush1.msra.mxu0 0.0
        %2126 = vmatprep.subr.mxu0 0.0
        %2127 = vmatpush1.msra.mxu0 0.0
        %2128 = vmatprep.subr.mxu0 0.0
        %2129 = vmatpush1.msra.mxu0 0.0
        %2130 = vmatprep.subr.mxu0 0.0
        %2131 = vmatpush1.msra.mxu0 0.0
        %2132 = vmatprep.subr.mxu0 0.0
        %2133 = vmatpush1.msra.mxu0 0.0
        %2134 = vmatprep.subr.mxu0 0.0
        %2135 = vmatpush1.msra.mxu0 0.0
        %2136 = vmatprep.subr.mxu0 0.0
        %2137 = vmatpush1.msra.mxu0 0.0
        %2138 = vmatprep.subr.mxu0 0.0
        %2139 = vmatpush1.msra.mxu0 0.0
        %2140 = vmatprep.subr.mxu0 0.0
        %2141 = vmatpush1.msra.mxu0 0.0
        %2142 = vmatprep.subr.mxu0 0.0
        %2143 = vmatpush1.msra.mxu0 0.0
        %2144 = vmatprep.subr.mxu0 0.0
        %2145 = vmatpush1.msra.mxu0 0.0
        %2146 = vmatprep.subr.mxu0 0.0
        %2147 = vmatpush1.msra.mxu0 0.0
        %2148 = vmatprep.subr.mxu0 0.0
        %2149 = vmatpush1.msra.mxu0 0.0
        %2150 = vmatprep.subr.mxu0 0.0
        %2151 = vmatpush1.msra.mxu0 0.0
        %2152 = vmatprep.subr.mxu0 0.0
        %2153 = vmatpush1.msra.mxu0 0.0
        %2154 = vmatprep.subr.mxu0 0.0
        %2155 = vmatpush1.msra.mxu0 0.0
        %2156 = vmatprep.subr.mxu0 0.0
        %2157 = vmatpush1.msra.mxu0 0.0
        %2158 = vmatprep.subr.mxu0 0.0
        %2159 = vmatpush1.msra.mxu0 0.0
        %2160 = vmatprep.subr.mxu0 0.0
        %2161 = vmatpush1.msra.mxu0 0.0
        %2162 = vmatprep.subr.mxu0 0.0
        %2163 = vmatpush1.msra.mxu0 0.0
        %2164 = vmatprep.subr.mxu0 0.0
        %2165 = vmatpush1.msra.mxu0 0.0
        %2166 = vmatprep.mubr.f32.mxu0 0.0
        %2167 = vmatmul.mubr.f32.gmra.mrb[0].mxu0 %v2100
        %v2168 = vpop.f32.mrb[0].mxu0
        %v2169 = vadd.f32 0.0, %v2168
        %v2170 = vpop.f32.mrb[0].mxu0
        %2171 = vdwg.mxu0
        %v2172 = vadd.f32 %v2099, %v2169
        %v2173 = vxor.u32 %v2172, 2147483648
        %v2174 = vmul.f32 %v2173, 1.442695
        %v2175 = vpow.pop %v2174
        %v2176 = vadd.f32 %v2175, 1.0
        %v2177 = vrcp.pop %v2176
        %v2178 = vmul.f32 1.0, %v2177
        %v2179 = vtanh.pop %v2172
        %v2180 = vmul.f32 %v2178, %v2087
        %2182 = vrot.lane.b32.xlu0 %v2179, 64
        %v2183 = vpop.permute.xlu0 %2182
        %v2185 = vmul.f32 %v2178, %v2183
        %2187 = vrot.lane.b32.xlu0 %v2185, 32
        %v2188 = vpop.permute.xlu0 %2187
        %v2190 = vadd.f32 %v2180, %v2188
        %v2191 = vtanh.pop %v2190
        %2193 = vrot.lane.b32.xlu0 %v2191, 64
        %v2194 = vpop.permute.xlu0 %2193
        %v2196 = vmul.f32 %v2178, %v2194
        %2198 = vrot.lane.b32.xlu0 %v2196, 32
        %v2199 = vpop.permute.xlu0 %2198
        %2201 = vst.msk [vmem:[#allocation4 + $0x6] sm:$0x1] %vm670, %v2199
        %v2202 = vld [vmem:[#allocation2 + $0x7] sm:$0x1]
        %v2203 = vsel %vm488, %v2199, 0
        %2205 = vmatprep.subr.mxu0 0.0
        %2206 = vmatpush1.msra.mxu0 %v1479
        %2207 = vmatprep.subr.mxu0 0.0
        %2208 = vmatpush1.msra.mxu0 %v1480
        %2209 = vmatprep.subr.mxu0 0.0
        %2210 = vmatpush1.msra.mxu0 %v1481
        %2211 = vmatprep.subr.mxu0 0.0
        %2212 = vmatpush1.msra.mxu0 %v1482
        %2213 = vmatprep.subr.mxu0 0.0
        %2214 = vmatpush1.msra.mxu0 0.0
        %2215 = vmatprep.subr.mxu0 0.0
        %2216 = vmatpush1.msra.mxu0 0.0
        %2217 = vmatprep.subr.mxu0 0.0
        %2218 = vmatpush1.msra.mxu0 0.0
        %2219 = vmatprep.subr.mxu0 0.0
        %2220 = vmatpush1.msra.mxu0 0.0
        %2221 = vmatprep.subr.mxu0 0.0
        %2222 = vmatpush1.msra.mxu0 0.0
        %2223 = vmatprep.subr.mxu0 0.0
        %2224 = vmatpush1.msra.mxu0 0.0
        %2225 = vmatprep.subr.mxu0 0.0
        %2226 = vmatpush1.msra.mxu0 0.0
        %2227 = vmatprep.subr.mxu0 0.0
        %2228 = vmatpush1.msra.mxu0 0.0
        %2229 = vmatprep.subr.mxu0 0.0
        %2230 = vmatpush1.msra.mxu0 0.0
        %2231 = vmatprep.subr.mxu0 0.0
        %2232 = vmatpush1.msra.mxu0 0.0
        %2233 = vmatprep.subr.mxu0 0.0
        %2234 = vmatpush1.msra.mxu0 0.0
        %2235 = vmatprep.subr.mxu0 0.0
        %2236 = vmatpush1.msra.mxu0 0.0
        %2237 = vmatprep.subr.mxu0 0.0
        %2238 = vmatpush1.msra.mxu0 0.0
        %2239 = vmatprep.subr.mxu0 0.0
        %2240 = vmatpush1.msra.mxu0 0.0
        %2241 = vmatprep.subr.mxu0 0.0
        %2242 = vmatpush1.msra.mxu0 0.0
        %2243 = vmatprep.subr.mxu0 0.0
        %2244 = vmatpush1.msra.mxu0 0.0
        %2245 = vmatprep.subr.mxu0 0.0
        %2246 = vmatpush1.msra.mxu0 0.0
        %2247 = vmatprep.subr.mxu0 0.0
        %2248 = vmatpush1.msra.mxu0 0.0
        %2249 = vmatprep.subr.mxu0 0.0
        %2250 = vmatpush1.msra.mxu0 0.0
        %2251 = vmatprep.subr.mxu0 0.0
        %2252 = vmatpush1.msra.mxu0 0.0
        %2253 = vmatprep.subr.mxu0 0.0
        %2254 = vmatpush1.msra.mxu0 0.0
        %2255 = vmatprep.subr.mxu0 0.0
        %2256 = vmatpush1.msra.mxu0 0.0
        %2257 = vmatprep.subr.mxu0 0.0
        %2258 = vmatpush1.msra.mxu0 0.0
        %2259 = vmatprep.subr.mxu0 0.0
        %2260 = vmatpush1.msra.mxu0 0.0
        %2261 = vmatprep.subr.mxu0 0.0
        %2262 = vmatpush1.msra.mxu0 0.0
        %2263 = vmatprep.subr.mxu0 0.0
        %2264 = vmatpush1.msra.mxu0 0.0
        %2265 = vmatprep.subr.mxu0 0.0
        %2266 = vmatpush1.msra.mxu0 0.0
        %2267 = vmatprep.subr.mxu0 0.0
        %2268 = vmatpush1.msra.mxu0 0.0
        %2269 = vmatprep.mubr.f32.mxu0 0.0
        %2270 = vmatmul.mubr.f32.gmra.mrb[0].mxu0 %v2203
        %v2271 = vpop.f32.mrb[0].mxu0
        %v2272 = vadd.f32 0.0, %v2271
        %v2273 = vpop.f32.mrb[0].mxu0
        %2274 = vdwg.mxu0
        %v2275 = vadd.f32 %v2202, %v2272
        %v2276 = vxor.u32 %v2275, 2147483648
        %v2277 = vmul.f32 %v2276, 1.442695
        %v2278 = vpow.pop %v2277
        %v2279 = vadd.f32 %v2278, 1.0
        %v2280 = vrcp.pop %v2279
        %v2281 = vmul.f32 1.0, %v2280
        %v2282 = vtanh.pop %v2275
        %v2283 = vmul.f32 %v2281, %v2190
        %2285 = vrot.lane.b32.xlu0 %v2282, 64
        %v2286 = vpop.permute.xlu0 %2285
        %v2288 = vmul.f32 %v2281, %v2286
        %2290 = vrot.lane.b32.xlu0 %v2288, 32
        %v2291 = vpop.permute.xlu0 %2290
        %v2293 = vadd.f32 %v2283, %v2291
        %v2294 = vtanh.pop %v2293
        %2296 = vrot.lane.b32.xlu0 %v2294, 64
        %v2297 = vpop.permute.xlu0 %2296
        %v2299 = vmul.f32 %v2281, %v2297
        %2301 = vrot.lane.b32.xlu0 %v2299, 32
        %v2302 = vpop.permute.xlu0 %2301
        %2304 = vst.msk [vmem:[#allocation4 + $0x7] sm:$0x1] %vm670, %v2302
        %v2305 = vld [vmem:[#allocation3] sm:$0xff]
        %v2306 = vld [vmem:[#allocation4] sm:$0xff]
        %2308 = vrot.lane.b32.xlu0 %v2306, 32
        %v2309 = vpop.permute.xlu0 %2308
        %v2311 = vsel %vm488, %v2305, %v2309
        %vm2312 = vcmask 523264
        %2313 = vst.msk [vmem:[%s469] sm:$0xff] %vm2312, %v2311
        %s2314 = sand.u32 %s220, 1
        %s2315 = scalar_lea.sflag [#allocation7], %s2314
        %s2316 = sand.u32 %s220, 1
        %s2317 = smul.addr %s2316, 8
        %s2318 = scalar_lea.vmem [#allocation14], %s2317
        // Predicated region
        $region69: #{tpu_custom_call.1} parent=47 // pred_check
          %p2319 = pneg %p230
        $region70: #{tpu_custom_call.1} parent=47 // pred_check_branch
          %2321 = sbr.rel (%p2319) target = $region72
        $region71: #{tpu_custom_call.1} parent=47 // pred_region
          %s2323 = ssub.s32 128, 128
          %2324 = vsyncadd %s2315, %s2323
          %s2325 = smul.addr %s30, 128
          %s2326 = scalar_lea.hbm %s7, %s2325
          %s2328 = sshll.u32 %s2318, 4
          %s2329 = int_to_ptr.vmem [resolvable:$true] %s2328
          %2331 = dma.vmem_to_hbm [thread:$0]  %s2329, 128, %s2326, %s2315
        $region72: #{tpu_custom_call.1} parent=47 // pred_fallthru
          _
      $region48: #{tpu_custom_call.1} parent=5 // pred_fallthru
        _
      %p2332 = scmp.le.s32.totalorder 2, %s25
      // Predicated region
      $region73: #{tpu_custom_call.1} parent=5 // pred_check
        %p2333 = pneg %p2332
      $region74: #{tpu_custom_call.1} parent=5 // pred_check_branch
        %2335 = sbr.rel (%p2333) target = $region76
      $region75: #{tpu_custom_call.1} parent=5 // pred_region
        %s2336 = ssub.s32 %s25, 2
        // Predicated region
        $region77: #{tpu_custom_call.1} parent=75 // pred_check
          %p2337 = pneg %p236
        $region78: #{tpu_custom_call.1} parent=75 // pred_check_branch
          %2339 = sbr.rel (%p2337) target = $region80
        $region79: #{tpu_custom_call.1} parent=75 // pred_region
          %s2340 = sand.u32 %s221, 1
          %s2341 = scalar_lea.sflag [#allocation7], %s2340
          %s2342 = sand.u32 %s221, 1
          %s2343 = smul.addr %s2342, 8
          %s2344 = scalar_lea.vmem [#allocation14], %s2343
          %2345 = dma.done %s2341, 128
        $region80: #{tpu_custom_call.1} parent=75 // pred_fallthru
          _
      $region76: #{tpu_custom_call.1} parent=5 // pred_fallthru
        _
    $region6: #{tpu_custom_call.1} parent=1 // loop_footer
      %s29 = sadd.s32 1, %s25
    $region7: #{tpu_custom_call.1} parent=1 // loop_footer_branch
      %24 = sbr.rel target = $region3
    $region8: #{tpu_custom_call.1} parent=1 // loop_exit
      _
    %2346 = vsyncpa [#allocation6], 1
    %s2347 = scalar_lea.sflag [#allocation6], 1
    %2348 = vsyncpa %s2347, 1
    %2349 = vsyncpa [#allocation9], 1
    %s2350 = scalar_lea.sflag [#allocation9], 1
    %2351 = vsyncpa %s2350, 1
    %2352 = vsyncpa [#allocation12], 1
    %s2353 = scalar_lea.sflag [#allocation12], 1
    %2354 = vsyncpa %s2353, 1
    %2355 = vsyncpa [#allocation7], 1
    %s2356 = scalar_lea.sflag [#allocation7], 1
    %2357 = vsyncpa %s2356, 1

</llo_original>
